<compile_context>
chip_gen: v7x
topology: tpu7x:2x2x1
jax: 0.10.0
libtpu: 0.0.40
codegen_flags: <defaults>
</compile_context>

<pallas_src>
import jax
import jax.numpy as jnp
from jax.experimental import pallas as pl
from jax.experimental.pallas import tpu as pltpu


def _mlp_kernel(x_ref,
                w1_ref, b1_ref,
                w2_ref, b2_ref,
                w3_ref, b3_ref,
                w4_ref, b4_ref,
                w5_ref, b5_ref,
                o_ref):
    """Whole forward pass for one (batch_tile, Din) bf16 batch tile in VMEM.

    Hidden layer: z = x_bf16 @ W'_bf16 (f32 accumulate) + b'_f32 ; ReLU (f32);
                  down-cast to bf16 once for the next layer's MXU input.
    Final layer:  z = h @ W5_pad (64x128, MXU) + b5 ; slice column 0;
                  sigmoid with EUP exp + approx reciprocal; (bt, 1) f32 store.
    """
    def layer(h_bf16, w_ref, b_ref):
        z = jnp.dot(h_bf16, w_ref[...], preferred_element_type=jnp.float32)
        z = z + b_ref[...]                       # folded BN already in W'/b'
        # ReLU in f32 (v5e VPU has no bf16 ALU); store activation as bf16.
        return jnp.maximum(z, 0.0).astype(jnp.bfloat16)

    h = x_ref[...]                               # already bf16 from the wrapper
    h = layer(h, w1_ref, b1_ref)
    h = layer(h, w2_ref, b2_ref)
    h = layer(h, w3_ref, b3_ref)
    h = layer(h, w4_ref, b4_ref)

    z = jnp.dot(h, w5_ref[...], preferred_element_type=jnp.float32) + b5_ref[...]
    zc = z[:, 0:1]                               # only column 0 is real
    # sigmoid(z) = 1 / (1 + exp(-z)): exp -> EUP, approx reciprocal -> EUP,
    # so the epilogue stays off the VALU slots.
    sig = pl.reciprocal(1.0 + jnp.exp(-zc), approx=True)
    o_ref[...] = sig.astype(o_ref.dtype)


def _round_up(n, m):
    return ((n + m - 1) // m) * m


def net_forward(x, prepared, *, batch_tile=None):
    """Runs the Pallas kernel over the (padded) batch.

    x: (B, 3*embedding_size) float32 (cast to bf16 here, before the DMA)
    prepared: dict from prepare_params(): w1..w4 folded+bf16, b1..b4 folded f32,
              w5 padded (64,128) bf16, b5 padded (1,128) f32.
    Returns (B, 1) float32.
    """
    B, Din = x.shape
    d1, d2, d3, d4 = 512, 256, 128, 64
    d5_pad = 128  # final-layer weight padded to a full lane width for the MXU

    if batch_tile is None:
        batch_tile = 1024 if B >= 4096 else 512

    # --- choose the batch tile -------------------------------------------
    # Multiple of 128 (MXU-height friendly on every generation).
    bt = max(128, (int(batch_tile) // 128) * 128)
    B128 = _round_up(B, 128)
    bt = min(bt, B128)
    # Ensure >= 2 grid steps whenever the batch can be split, so the
    # "parallel" batch axis actually occupies both v7x TensorCores.
    if B128 >= 2 * 128:
        bt = min(bt, max(128, ((B128 // 2) // 128) * 128))
    # Keep the double-buffered bf16 x tile small enough to stay well inside
    # the 32 MiB scoped-VMEM budget (matters for embedding_size=2048 -> Din=6144).
    max_bt_for_vmem = max(128, ((4 * 1024 * 1024) // (Din * 2) // 128) * 128)
    bt = min(bt, max_bt_for_vmem)

    n_tiles = pl.cdiv(B, bt)
    B_pad = n_tiles * bt

    # Halve the dominant HBM stream: feed bf16 straight into the first matmul.
    x = x.astype(jnp.bfloat16)
    if B_pad != B:
        x = jnp.pad(x, ((0, B_pad - B), (0, 0)))

    def full_spec(shape):
        # Whole-array block, same block index every grid step (DMA'd once).
        return pl.BlockSpec(shape, lambda i: (0,) * len(shape))

    in_specs = [
        pl.BlockSpec((bt, Din), lambda i: (i, 0)),   # x, tiled over the batch
        full_spec((Din, d1)), full_spec((1, d1)),
        full_spec((d1, d2)), full_spec((1, d2)),
        full_spec((d2, d3)), full_spec((1, d3)),
        full_spec((d3, d4)), full_spec((1, d4)),
        full_spec((d4, d5_pad)), full_spec((1, d5_pad)),
    ]
    # Narrow (bt, 1) output block: trailing dim equals the full array dim, so
    # the (8,128) rule is satisfied; writeback is bt*4 bytes per tile instead
    # of a 128-wide padded slab.
    out_spec = pl.BlockSpec((bt, 1), lambda i: (i, 0))

    call = pl.pallas_call(
        _mlp_kernel,
        out_shape=jax.ShapeDtypeStruct((B_pad, 1), jnp.float32),
        grid_spec=pltpu.PrefetchScalarGridSpec(
            num_scalar_prefetch=0,
            grid=(n_tiles,),
            in_specs=in_specs,
            out_specs=out_spec,
        ),
        compiler_params=pltpu.CompilerParams(
            dimension_semantics=("parallel",),   # batch axis -> megacore on v7x
            vmem_limit_bytes=32 << 20,
        ),
    )

    p = prepared
    out = call(
        x,
        p["w1"], p["b1"],
        p["w2"], p["b2"],
        p["w3"], p["b3"],
        p["w4"], p["b4"],
        p["w5"], p["b5"],
    )
    return out[:B, :]


def init_params(key, embedding_size):
    """Deterministic raw parameter init (synthetic; not a checkpoint load)."""
    Din = 3 * embedding_size
    dims = [Din, 512, 256, 128, 64, 1]
    params = {}
    eps = 1e-5
    keys = jax.random.split(key, 5 * 6)
    k_it = iter(keys)
    for li in range(5):
        din, dout = dims[li], dims[li + 1]
        scale = 1.0 / jnp.sqrt(jnp.float32(din))
        w = jax.random.normal(next(k_it), (din, dout), jnp.float32) * scale
        b = jax.random.normal(next(k_it), (1, dout), jnp.float32) * 0.01
        params[f"w{li + 1}"] = w
        params[f"b{li + 1}"] = b
        if li < 4:  # hidden layers have BatchNorm1d (eval / running stats)
            gamma = 1.0 + 0.1 * jax.random.normal(next(k_it), (1, dout), jnp.float32)
            beta = 0.05 * jax.random.normal(next(k_it), (1, dout), jnp.float32)
            run_mean = 0.1 * jax.random.normal(next(k_it), (1, dout), jnp.float32)
            run_var = jnp.abs(1.0 + 0.1 * jax.random.normal(next(k_it), (1, dout),
                                                            jnp.float32))
            s = gamma / jnp.sqrt(run_var + eps)          # folded scale
            t = beta - run_mean * s                      # folded shift
            params[f"s{li + 1}"] = s
            params[f"t{li + 1}"] = t
    return params


def prepare_params(params):
    """Fold eval-mode BN into W/b, cast weights to bf16, pad the final layer.

    Linear+BN: (x@W + b)*s + t == x@(W*s) + (b*s + t) — exact algebraic fold.
    """
    prepared = {}
    for li in range(1, 5):
        w = params[f"w{li}"] * params[f"s{li}"]          # (din,dout) * (1,dout)
        b = params[f"b{li}"] * params[f"s{li}"] + params[f"t{li}"]
        prepared[f"w{li}"] = w.astype(jnp.bfloat16)
        prepared[f"b{li}"] = b.astype(jnp.float32)
    # Final layer: pad N=1 -> N=128 so the MXU sees a full lane group; only
    # column 0 is real and it is sliced in-kernel before the sigmoid/store.
    w5 = params["w5"]                                     # (64, 1)
    b5 = params["b5"]                                     # (1, 1)
    w5_pad = jnp.pad(w5, ((0, 0), (0, 128 - w5.shape[1])))
    b5_pad = jnp.pad(b5, ((0, 0), (0, 128 - b5.shape[1])))
    prepared["w5"] = w5_pad.astype(jnp.bfloat16)
    prepared["b5"] = b5_pad.astype(jnp.float32)
    return prepared


def reference_forward(x, prepared):
    """Pure-JAX reference using the same folded/bf16 parameters as the kernel."""
    h = x.astype(jnp.bfloat16)
    for li in range(1, 5):
        z = jnp.dot(h, prepared[f"w{li}"],
                    preferred_element_type=jnp.float32) + prepared[f"b{li}"]
        h = jnp.maximum(z, 0.0).astype(jnp.bfloat16)
    z = jnp.dot(h, prepared["w5"],
                preferred_element_type=jnp.float32) + prepared["b5"]
    return jax.nn.sigmoid(z)[:, :1]


if __name__ == "__main__":
    # Small but module-consistent shapes: embedding_size=256 -> input dim 768.
    embedding_size = 256
    batch = 8
    key = jax.random.PRNGKey(0)
    k_x, k_p = jax.random.split(key)

    x = jax.random.normal(k_x, (batch, 3 * embedding_size), jnp.float32)
    raw_params = init_params(k_p, embedding_size)
    prepared = prepare_params(raw_params)

    out = net_forward(x, prepared)          # batch padded 8 -> 128, grid = 1
    out = jax.block_until_ready(out)

    ref = reference_forward(x, prepared)
    assert out.shape == (batch, 1), out.shape
    # Tolerance covers the approx EUP reciprocal in the sigmoid (weights are
    # identically bf16 in kernel and reference, output stays f32).
    assert jnp.allclose(out, ref, atol=2e-3, rtol=2e-3), (
        f"max abs err {jnp.max(jnp.abs(out - ref))}")

    print("KERNEL_OK")
</pallas_src>

<mosaic_0001>
module attributes {stable_mosaic.version = 11 : i64} {
  func.func @_mlp_kernel(%arg0: i32, %arg1: memref<128x768xbf16, #tpu.memory_space<vmem>>, %arg2: memref<768x512xbf16, #tpu.memory_space<vmem>>, %arg3: memref<1x512xf32, #tpu.memory_space<vmem>>, %arg4: memref<512x256xbf16, #tpu.memory_space<vmem>>, %arg5: memref<1x256xf32, #tpu.memory_space<vmem>>, %arg6: memref<256x128xbf16, #tpu.memory_space<vmem>>, %arg7: memref<1x128xf32, #tpu.memory_space<vmem>>, %arg8: memref<128x64xbf16, #tpu.memory_space<vmem>>, %arg9: memref<1x64xf32, #tpu.memory_space<vmem>>, %arg10: memref<64x128xbf16, #tpu.memory_space<vmem>>, %arg11: memref<1x128xf32, #tpu.memory_space<vmem>>, %arg12: memref<128x1xf32, #tpu.memory_space<vmem>>) attributes {dimension_semantics = [#tpu.dimension_semantics<parallel>], iteration_bounds = array<i64: 1>, scalar_prefetch = 0 : i64, scratch_operands = 0 : i64, tpu.core_type = #tpu.core_type<tc>, window_params = [{transform_indices = @transform_0, window_bounds = array<i64: 128, 768>}, {pipeline_mode = #tpu.pipeline_mode<synchronous>, transform_indices = @transform_1, window_bounds = array<i64: 768, 512>}, {pipeline_mode = #tpu.pipeline_mode<synchronous>, transform_indices = @transform_2, window_bounds = array<i64: 1, 512>}, {pipeline_mode = #tpu.pipeline_mode<synchronous>, transform_indices = @transform_3, window_bounds = array<i64: 512, 256>}, {pipeline_mode = #tpu.pipeline_mode<synchronous>, transform_indices = @transform_4, window_bounds = array<i64: 1, 256>}, {pipeline_mode = #tpu.pipeline_mode<synchronous>, transform_indices = @transform_5, window_bounds = array<i64: 256, 128>}, {pipeline_mode = #tpu.pipeline_mode<synchronous>, transform_indices = @transform_6, window_bounds = array<i64: 1, 128>}, {pipeline_mode = #tpu.pipeline_mode<synchronous>, transform_indices = @transform_7, window_bounds = array<i64: 128, 64>}, {pipeline_mode = #tpu.pipeline_mode<synchronous>, transform_indices = @transform_8, window_bounds = array<i64: 1, 64>}, {pipeline_mode = #tpu.pipeline_mode<synchronous>, transform_indices = @transform_9, window_bounds = array<i64: 64, 128>}, {pipeline_mode = #tpu.pipeline_mode<synchronous>, transform_indices = @transform_10, window_bounds = array<i64: 1, 128>}, {transform_indices = @transform_11, window_bounds = array<i64: 128, 1>}]} {
    %c0 = arith.constant 0 : index
    %c0_0 = arith.constant 0 : index
    %0 = vector.load %arg1[%c0, %c0_0] : memref<128x768xbf16, #tpu.memory_space<vmem>>, vector<128x768xbf16>
    %c0_1 = arith.constant 0 : index
    %c0_2 = arith.constant 0 : index
    %1 = vector.load %arg2[%c0_1, %c0_2] : memref<768x512xbf16, #tpu.memory_space<vmem>>, vector<768x512xbf16>
    %cst = arith.constant dense<0.000000e+00> : vector<128x512xf32>
    %2 = tpu.matmul %0, %1, %cst {dimension_numbers = #tpu.dot_dimension_numbers<[1], [0], [0], [1], [0, 0, 1, 1], [], []>} : vector<128x768xbf16>, vector<768x512xbf16>, vector<128x512xf32> -> vector<128x512xf32>
    %c0_3 = arith.constant 0 : index
    %c0_4 = arith.constant 0 : index
    %3 = vector.load %arg3[%c0_3, %c0_4] : memref<1x512xf32, #tpu.memory_space<vmem>>, vector<1x512xf32>
    %4 = vector.broadcast %3 : vector<1x512xf32> to vector<128x512xf32>
    %5 = arith.addf %2, %4 : vector<128x512xf32>
    %cst_5 = arith.constant 0.000000e+00 : f32
    %6 = vector.broadcast %cst_5 : f32 to vector<128x512xf32>
    %7 = arith.maximumf %5, %6 : vector<128x512xf32>
    %8 = arith.truncf %7 : vector<128x512xf32> to vector<128x512xbf16>
    %c0_6 = arith.constant 0 : index
    %c0_7 = arith.constant 0 : index
    %9 = vector.load %arg4[%c0_6, %c0_7] : memref<512x256xbf16, #tpu.memory_space<vmem>>, vector<512x256xbf16>
    %cst_8 = arith.constant dense<0.000000e+00> : vector<128x256xf32>
    %10 = tpu.matmul %8, %9, %cst_8 {dimension_numbers = #tpu.dot_dimension_numbers<[1], [0], [0], [1], [0, 0, 1, 1], [], []>} : vector<128x512xbf16>, vector<512x256xbf16>, vector<128x256xf32> -> vector<128x256xf32>
    %c0_9 = arith.constant 0 : index
    %c0_10 = arith.constant 0 : index
    %11 = vector.load %arg5[%c0_9, %c0_10] : memref<1x256xf32, #tpu.memory_space<vmem>>, vector<1x256xf32>
    %12 = vector.broadcast %11 : vector<1x256xf32> to vector<128x256xf32>
    %13 = arith.addf %10, %12 : vector<128x256xf32>
    %cst_11 = arith.constant 0.000000e+00 : f32
    %14 = vector.broadcast %cst_11 : f32 to vector<128x256xf32>
    %15 = arith.maximumf %13, %14 : vector<128x256xf32>
    %16 = arith.truncf %15 : vector<128x256xf32> to vector<128x256xbf16>
    %c0_12 = arith.constant 0 : index
    %c0_13 = arith.constant 0 : index
    %17 = vector.load %arg6[%c0_12, %c0_13] : memref<256x128xbf16, #tpu.memory_space<vmem>>, vector<256x128xbf16>
    %cst_14 = arith.constant dense<0.000000e+00> : vector<128x128xf32>
    %18 = tpu.matmul %16, %17, %cst_14 {dimension_numbers = #tpu.dot_dimension_numbers<[1], [0], [0], [1], [0, 0, 1, 1], [], []>} : vector<128x256xbf16>, vector<256x128xbf16>, vector<128x128xf32> -> vector<128x128xf32>
    %c0_15 = arith.constant 0 : index
    %c0_16 = arith.constant 0 : index
    %19 = vector.load %arg7[%c0_15, %c0_16] : memref<1x128xf32, #tpu.memory_space<vmem>>, vector<1x128xf32>
    %20 = vector.broadcast %19 : vector<1x128xf32> to vector<128x128xf32>
    %21 = arith.addf %18, %20 : vector<128x128xf32>
    %cst_17 = arith.constant 0.000000e+00 : f32
    %22 = vector.broadcast %cst_17 : f32 to vector<128x128xf32>
    %23 = arith.maximumf %21, %22 : vector<128x128xf32>
    %24 = arith.truncf %23 : vector<128x128xf32> to vector<128x128xbf16>
    %c0_18 = arith.constant 0 : index
    %c0_19 = arith.constant 0 : index
    %25 = vector.load %arg8[%c0_18, %c0_19] : memref<128x64xbf16, #tpu.memory_space<vmem>>, vector<128x64xbf16>
    %cst_20 = arith.constant dense<0.000000e+00> : vector<128x64xf32>
    %26 = tpu.matmul %24, %25, %cst_20 {dimension_numbers = #tpu.dot_dimension_numbers<[1], [0], [0], [1], [0, 0, 1, 1], [], []>} : vector<128x128xbf16>, vector<128x64xbf16>, vector<128x64xf32> -> vector<128x64xf32>
    %c0_21 = arith.constant 0 : index
    %c0_22 = arith.constant 0 : index
    %27 = vector.load %arg9[%c0_21, %c0_22] : memref<1x64xf32, #tpu.memory_space<vmem>>, vector<1x64xf32>
    %28 = vector.broadcast %27 : vector<1x64xf32> to vector<128x64xf32>
    %29 = arith.addf %26, %28 : vector<128x64xf32>
    %cst_23 = arith.constant 0.000000e+00 : f32
    %30 = vector.broadcast %cst_23 : f32 to vector<128x64xf32>
    %31 = arith.maximumf %29, %30 : vector<128x64xf32>
    %32 = arith.truncf %31 : vector<128x64xf32> to vector<128x64xbf16>
    %c0_24 = arith.constant 0 : index
    %c0_25 = arith.constant 0 : index
    %33 = vector.load %arg10[%c0_24, %c0_25] : memref<64x128xbf16, #tpu.memory_space<vmem>>, vector<64x128xbf16>
    %cst_26 = arith.constant dense<0.000000e+00> : vector<128x128xf32>
    %34 = tpu.matmul %32, %33, %cst_26 {dimension_numbers = #tpu.dot_dimension_numbers<[1], [0], [0], [1], [0, 0, 1, 1], [], []>} : vector<128x64xbf16>, vector<64x128xbf16>, vector<128x128xf32> -> vector<128x128xf32>
    %c0_27 = arith.constant 0 : index
    %c0_28 = arith.constant 0 : index
    %35 = vector.load %arg11[%c0_27, %c0_28] : memref<1x128xf32, #tpu.memory_space<vmem>>, vector<1x128xf32>
    %36 = vector.broadcast %35 : vector<1x128xf32> to vector<128x128xf32>
    %37 = arith.addf %34, %36 : vector<128x128xf32>
    %38 = vector.extract_strided_slice %37 {offsets = [0, 0], sizes = [128, 1], strides = [1, 1]} : vector<128x128xf32> to vector<128x1xf32>
    %cst_29 = arith.constant 0.000000e+00 : f32
    %39 = vector.broadcast %cst_29 : f32 to vector<128x1xf32>
    %40 = arith.subf %39, %38 : vector<128x1xf32>
    %41 = math.exp %40 : vector<128x1xf32>
    %cst_30 = arith.constant 1.000000e+00 : f32
    %42 = vector.broadcast %cst_30 : f32 to vector<128x1xf32>
    %43 = arith.addf %42, %41 : vector<128x1xf32>
    %44 = tpu.reciprocal %43 {approx = true} : vector<128x1xf32> -> vector<128x1xf32>
    %c0_31 = arith.constant 0 : index
    %c0_32 = arith.constant 0 : index
    %45 = vector.load %arg12[%c0_31, %c0_32] : memref<128x1xf32, #tpu.memory_space<vmem>>, vector<128x1xf32>
    tpu.vector_store %arg12[%c0_31, %c0_32], %44 {strides = array<i32>} : memref<128x1xf32, #tpu.memory_space<vmem>>, vector<128x1xf32>,
    return
  }
  func.func @transform_0(%arg0: i32) -> (i32, i32) {
    %c0_i32 = arith.constant 0 : i32
    %c0_i32_0 = arith.constant 0 : i32
    return %arg0, %c0_i32 : i32, i32
  }
  func.func @transform_1(%arg0: i32) -> (i32, i32) {
    %c0_i32 = arith.constant 0 : i32
    %c0_i32_0 = arith.constant 0 : i32
    %c0_i32_1 = arith.constant 0 : i32
    return %c0_i32, %c0_i32_0 : i32, i32
  }
  func.func @transform_2(%arg0: i32) -> (i32, i32) {
    %c0_i32 = arith.constant 0 : i32
    %c0_i32_0 = arith.constant 0 : i32
    %c0_i32_1 = arith.constant 0 : i32
    return %c0_i32, %c0_i32_0 : i32, i32
  }
  func.func @transform_3(%arg0: i32) -> (i32, i32) {
    %c0_i32 = arith.constant 0 : i32
    %c0_i32_0 = arith.constant 0 : i32
    %c0_i32_1 = arith.constant 0 : i32
    return %c0_i32, %c0_i32_0 : i32, i32
  }
  func.func @transform_4(%arg0: i32) -> (i32, i32) {
    %c0_i32 = arith.constant 0 : i32
    %c0_i32_0 = arith.constant 0 : i32
    %c0_i32_1 = arith.constant 0 : i32
    return %c0_i32, %c0_i32_0 : i32, i32
  }
  func.func @transform_5(%arg0: i32) -> (i32, i32) {
    %c0_i32 = arith.constant 0 : i32
    %c0_i32_0 = arith.constant 0 : i32
    %c0_i32_1 = arith.constant 0 : i32
    return %c0_i32, %c0_i32_0 : i32, i32
  }
  func.func @transform_6(%arg0: i32) -> (i32, i32) {
    %c0_i32 = arith.constant 0 : i32
    %c0_i32_0 = arith.constant 0 : i32
    %c0_i32_1 = arith.constant 0 : i32
    return %c0_i32, %c0_i32_0 : i32, i32
  }
  func.func @transform_7(%arg0: i32) -> (i32, i32) {
    %c0_i32 = arith.constant 0 : i32
    %c0_i32_0 = arith.constant 0 : i32
    %c0_i32_1 = arith.constant 0 : i32
    return %c0_i32, %c0_i32_0 : i32, i32
  }
  func.func @transform_8(%arg0: i32) -> (i32, i32) {
    %c0_i32 = arith.constant 0 : i32
    %c0_i32_0 = arith.constant 0 : i32
    %c0_i32_1 = arith.constant 0 : i32
    return %c0_i32, %c0_i32_0 : i32, i32
  }
  func.func @transform_9(%arg0: i32) -> (i32, i32) {
    %c0_i32 = arith.constant 0 : i32
    %c0_i32_0 = arith.constant 0 : i32
    %c0_i32_1 = arith.constant 0 : i32
    return %c0_i32, %c0_i32_0 : i32, i32
  }
  func.func @transform_10(%arg0: i32) -> (i32, i32) {
    %c0_i32 = arith.constant 0 : i32
    %c0_i32_0 = arith.constant 0 : i32
    %c0_i32_1 = arith.constant 0 : i32
    return %c0_i32, %c0_i32_0 : i32, i32
  }
  func.func @transform_11(%arg0: i32) -> (i32, i32) {
    %c0_i32 = arith.constant 0 : i32
    %c0_i32_0 = arith.constant 0 : i32
    return %arg0, %c0_i32 : i32, i32
  }
}

</mosaic_0001>

<llo_original>
// kernel: tpu_custom_call.1
$region0: #{tpu_custom_call.1}
  #allocation0 [shape = 'u32[]', space=smem, size = 0x4, offset = 0x4, fixed_abs, tag = 'smem constant byte address 0x4 - core index']
  #allocation1 [shape = 'u32[144,128]{1,0:T(1,128)}', space=vmem, size = 0x12000, scoped, tag = 'internal scratch']
  %s0 = inlined_call_operand.hbm [shape: bf16[128,768], index: 0, kind: input, shape index: {}]
  %s1 = inlined_call_operand.hbm [shape: bf16[768,512], index: 1, kind: input, shape index: {}]
  %s2 = inlined_call_operand.vmem [shape: f32[1,512], index: 2, kind: input, shape index: {}]
  %s3 = inlined_call_operand.hbm [shape: bf16[512,256], index: 3, kind: input, shape index: {}]
  %s4 = inlined_call_operand.vmem [shape: f32[1,256], index: 4, kind: input, shape index: {}]
  %s5 = inlined_call_operand.hbm [shape: bf16[256,128], index: 5, kind: input, shape index: {}]
  %s6 = inlined_call_operand.vmem [shape: f32[1,128], index: 6, kind: input, shape index: {}]
  %s7 = inlined_call_operand.vmem [shape: bf16[128,64], index: 7, kind: input, shape index: {}]
  %s8 = inlined_call_operand.vmem [shape: f32[1,64], index: 8, kind: input, shape index: {}]
  %s9 = inlined_call_operand.vmem [shape: bf16[64,128], index: 9, kind: input, shape index: {}]
  %s10 = inlined_call_operand.vmem [shape: f32[1,128], index: 10, kind: input, shape index: {}]
  %s11 = inlined_call_operand.vmem [shape: f32[128,1], index: 11, kind: output, shape index: {}]
  %s12 = sld [smem:[#allocation0]]
  $region70: #{tpu_custom_call.1} parent=0
    _
  %s14 = ssub.s32 1, %s12
  %s15 = scalar_select 0, %s14, %s12
  $region1: #{tpu_custom_call.1} parent=0
    #allocation2 [shape = 'u8[196608]{0}', space=vmem, size = 0x30000, scoped, tag = 'input window, operand 0, single buffered']
    #allocation3 [shape = 's32[1]{0}', space=sflag, size = 0x4, scoped, tag = 'scoped memory for tpu_custom_call.1']
    #allocation4 [shape = 'u8[786432]{0}', space=vmem, size = 0xc0000, scoped, tag = 'input window, operand 1, single buffered']
    #allocation5 [shape = 's32[1]{0}', space=sflag, size = 0x4, scoped, tag = 'scoped memory for tpu_custom_call.1']
    #allocation6 [shape = 'u8[262144]{0}', space=vmem, size = 0x40000, scoped, tag = 'input window, operand 3, single buffered']
    #allocation7 [shape = 'u8[65536]{0}', space=vmem, size = 0x10000, scoped, tag = 'input window, operand 5, single buffered']
    #allocation8 [shape = 's32[1]{0}', space=sflag, size = 0x4, scoped, tag = 'scoped memory for tpu_custom_call.1']
    %16 = vsyncpa [#allocation3], 0
    %17 = vsyncpa [#allocation5], 0
    %18 = vsyncpa [#allocation8], 0
    // Predicated region
    $region2: #{tpu_custom_call.1} parent=1 // pred_check
      _
    $region3: #{tpu_custom_call.1} parent=1 // pred_check_branch
      %20 = sbr.rel (0) target = $region5
    $region4: #{tpu_custom_call.1} parent=1 // pred_region
      %s22 = ssub.s32 6144, 6144
      %23 = vsyncadd [#allocation3], %s22
      %s24 = sshll.u32 [#allocation2], 4
      %s25 = int_to_ptr.vmem [resolvable:$true] %s24
      %30 = dma.hbm_to_vmem [thread:$0]  %s0, 6144, %s25, [#allocation3], 384, 384, 24
    $region5: #{tpu_custom_call.1} parent=1 // pred_fallthru
      _
    // Predicated region
    $region6: #{tpu_custom_call.1} parent=1 // pred_check
      _
    $region7: #{tpu_custom_call.1} parent=1 // pred_check_branch
      %32 = sbr.rel (0) target = $region9
    $region8: #{tpu_custom_call.1} parent=1 // pred_region
      %s34 = ssub.s32 24576, 24576
      %35 = vsyncadd [#allocation5], %s34
      %s36 = sshll.u32 [#allocation4], 4
      %s37 = int_to_ptr.vmem [resolvable:$true] %s36
      %42 = dma.hbm_to_vmem [thread:$0]  %s1, 24576, %s37, [#allocation5], 256, 256, 16
    $region9: #{tpu_custom_call.1} parent=1 // pred_fallthru
      _
    // Predicated region
    $region10: #{tpu_custom_call.1} parent=1 // pred_check
      _
    $region11: #{tpu_custom_call.1} parent=1 // pred_check_branch
      %44 = sbr.rel (0) target = $region13
    $region12: #{tpu_custom_call.1} parent=1 // pred_region
      _
    $region13: #{tpu_custom_call.1} parent=1 // pred_fallthru
      _
    // Predicated region
    $region14: #{tpu_custom_call.1} parent=1 // pred_check
      _
    $region15: #{tpu_custom_call.1} parent=1 // pred_check_branch
      %46 = sbr.rel (0) target = $region17
    $region16: #{tpu_custom_call.1} parent=1 // pred_region
      %s48 = ssub.s32 8192, 8192
      %49 = vsyncadd [#allocation5], %s48
      %s50 = sshll.u32 [#allocation6], 4
      %s51 = int_to_ptr.vmem [resolvable:$true] %s50
      %56 = dma.hbm_to_vmem [thread:$0]  %s3, 8192, %s51, [#allocation5], 128, 128, 8
    $region17: #{tpu_custom_call.1} parent=1 // pred_fallthru
      _
    // Predicated region
    $region18: #{tpu_custom_call.1} parent=1 // pred_check
      _
    $region19: #{tpu_custom_call.1} parent=1 // pred_check_branch
      %58 = sbr.rel (0) target = $region21
    $region20: #{tpu_custom_call.1} parent=1 // pred_region
      _
    $region21: #{tpu_custom_call.1} parent=1 // pred_fallthru
      _
    // Predicated region
    $region22: #{tpu_custom_call.1} parent=1 // pred_check
      _
    $region23: #{tpu_custom_call.1} parent=1 // pred_check_branch
      %60 = sbr.rel (0) target = $region25
    $region24: #{tpu_custom_call.1} parent=1 // pred_region
      %s62 = ssub.s32 2048, 2048
      %63 = vsyncadd [#allocation8], %s62
      %s64 = sshll.u32 [#allocation7], 4
      %s65 = int_to_ptr.vmem [resolvable:$true] %s64
      %70 = dma.hbm_to_vmem [thread:$0]  %s5, 2048, %s65, [#allocation8], 64, 64, 4
    $region25: #{tpu_custom_call.1} parent=1 // pred_fallthru
      _
    // Predicated region
    $region26: #{tpu_custom_call.1} parent=1 // pred_check
      _
    $region27: #{tpu_custom_call.1} parent=1 // pred_check_branch
      %72 = sbr.rel (0) target = $region29
    $region28: #{tpu_custom_call.1} parent=1 // pred_region
      _
    $region29: #{tpu_custom_call.1} parent=1 // pred_fallthru
      _
    // Predicated region
    $region30: #{tpu_custom_call.1} parent=1 // pred_check
      _
    $region31: #{tpu_custom_call.1} parent=1 // pred_check_branch
      %74 = sbr.rel (0) target = $region33
    $region32: #{tpu_custom_call.1} parent=1 // pred_region
      _
    $region33: #{tpu_custom_call.1} parent=1 // pred_fallthru
      _
    // Predicated region
    $region34: #{tpu_custom_call.1} parent=1 // pred_check
      _
    $region35: #{tpu_custom_call.1} parent=1 // pred_check_branch
      %76 = sbr.rel (0) target = $region37
    $region36: #{tpu_custom_call.1} parent=1 // pred_region
      _
    $region37: #{tpu_custom_call.1} parent=1 // pred_fallthru
      _
    // Predicated region
    $region38: #{tpu_custom_call.1} parent=1 // pred_check
      _
    $region39: #{tpu_custom_call.1} parent=1 // pred_check_branch
      %78 = sbr.rel (0) target = $region41
    $region40: #{tpu_custom_call.1} parent=1 // pred_region
      _
    $region41: #{tpu_custom_call.1} parent=1 // pred_fallthru
      _
    // Predicated region
    $region42: #{tpu_custom_call.1} parent=1 // pred_check
      _
    $region43: #{tpu_custom_call.1} parent=1 // pred_check_branch
      %80 = sbr.rel (0) target = $region45
    $region44: #{tpu_custom_call.1} parent=1 // pred_region
      _
    $region45: #{tpu_custom_call.1} parent=1 // pred_fallthru
      _
    // Predicated region
    $region46: #{tpu_custom_call.1} parent=1 // pred_check
      _
    $region47: #{tpu_custom_call.1} parent=1 // pred_check_branch
      %82 = sbr.rel (0) target = $region49
    $region48: #{tpu_custom_call.1} parent=1 // pred_region
      %83 = dma.done [#allocation3], 6144
    $region49: #{tpu_custom_call.1} parent=1 // pred_fallthru
      _
    // Predicated region
    $region50: #{tpu_custom_call.1} parent=1 // pred_check
      _
    $region51: #{tpu_custom_call.1} parent=1 // pred_check_branch
      %85 = sbr.rel (0) target = $region53
    $region52: #{tpu_custom_call.1} parent=1 // pred_region
      %86 = dma.done [#allocation5], 24576
    $region53: #{tpu_custom_call.1} parent=1 // pred_fallthru
      _
    // Predicated region
    $region54: #{tpu_custom_call.1} parent=1 // pred_check
      _
    $region55: #{tpu_custom_call.1} parent=1 // pred_check_branch
      %88 = sbr.rel (0) target = $region57
    $region56: #{tpu_custom_call.1} parent=1 // pred_region
      %89 = dma.done [#allocation5], 8192
    $region57: #{tpu_custom_call.1} parent=1 // pred_fallthru
      _
    // Predicated region
    $region58: #{tpu_custom_call.1} parent=1 // pred_check
      _
    $region59: #{tpu_custom_call.1} parent=1 // pred_check_branch
      %91 = sbr.rel (0) target = $region61
    $region60: #{tpu_custom_call.1} parent=1 // pred_region
      %92 = dma.done [#allocation8], 2048
    $region61: #{tpu_custom_call.1} parent=1 // pred_fallthru
      _
    %v94 = vld [vmem:[#allocation2] sm:$0xff]
    %v95 = vld [vmem:[#allocation2 + $0x8] sm:$0xff]
    %v96 = vld [vmem:[#allocation2 + $0x10] sm:$0xff]
    %v97 = vld [vmem:[#allocation2 + $0x18] sm:$0xff]
    %v98 = vld [vmem:[#allocation2 + $0x20] sm:$0xff]
    %v99 = vld [vmem:[#allocation2 + $0x28] sm:$0xff]
    %v100 = vld [vmem:[#allocation2 + $0x30] sm:$0xff]
    %v101 = vld [vmem:[#allocation2 + $0x38] sm:$0xff]
    %v102 = vld [vmem:[#allocation2 + $0x40] sm:$0xff]
    %v103 = vld [vmem:[#allocation2 + $0x48] sm:$0xff]
    %v104 = vld [vmem:[#allocation2 + $0x50] sm:$0xff]
    %v105 = vld [vmem:[#allocation2 + $0x58] sm:$0xff]
    %v106 = vld [vmem:[#allocation2 + $0x60] sm:$0xff]
    %v107 = vld [vmem:[#allocation2 + $0x68] sm:$0xff]
    %v108 = vld [vmem:[#allocation2 + $0x70] sm:$0xff]
    %v109 = vld [vmem:[#allocation2 + $0x78] sm:$0xff]
    %v110 = vld [vmem:[#allocation2 + $0x80] sm:$0xff]
    %v111 = vld [vmem:[#allocation2 + $0x88] sm:$0xff]
    %v112 = vld [vmem:[#allocation2 + $0x90] sm:$0xff]
    %v113 = vld [vmem:[#allocation2 + $0x98] sm:$0xff]
    %v114 = vld [vmem:[#allocation2 + $0xa0] sm:$0xff]
    %v115 = vld [vmem:[#allocation2 + $0xa8] sm:$0xff]
    %v116 = vld [vmem:[#allocation2 + $0xb0] sm:$0xff]
    %v117 = vld [vmem:[#allocation2 + $0xb8] sm:$0xff]
    %v118 = vld [vmem:[#allocation2 + $0xc0] sm:$0xff]
    %v119 = vld [vmem:[#allocation2 + $0xc8] sm:$0xff]
    %v120 = vld [vmem:[#allocation2 + $0xd0] sm:$0xff]
    %v121 = vld [vmem:[#allocation2 + $0xd8] sm:$0xff]
    %v122 = vld [vmem:[#allocation2 + $0xe0] sm:$0xff]
    %v123 = vld [vmem:[#allocation2 + $0xe8] sm:$0xff]
    %v124 = vld [vmem:[#allocation2 + $0xf0] sm:$0xff]
    %v125 = vld [vmem:[#allocation2 + $0xf8] sm:$0xff]
    %v126 = vld [vmem:[#allocation2 + $0x100] sm:$0xff]
    %v127 = vld [vmem:[#allocation2 + $0x108] sm:$0xff]
    %v128 = vld [vmem:[#allocation2 + $0x110] sm:$0xff]
    %v129 = vld [vmem:[#allocation2 + $0x118] sm:$0xff]
    %v130 = vld [vmem:[#allocation2 + $0x120] sm:$0xff]
    %v131 = vld [vmem:[#allocation2 + $0x128] sm:$0xff]
    %v132 = vld [vmem:[#allocation2 + $0x130] sm:$0xff]
    %v133 = vld [vmem:[#allocation2 + $0x138] sm:$0xff]
    %v134 = vld [vmem:[#allocation2 + $0x140] sm:$0xff]
    %v135 = vld [vmem:[#allocation2 + $0x148] sm:$0xff]
    %v136 = vld [vmem:[#allocation2 + $0x150] sm:$0xff]
    %v137 = vld [vmem:[#allocation2 + $0x158] sm:$0xff]
    %v138 = vld [vmem:[#allocation2 + $0x160] sm:$0xff]
    %v139 = vld [vmem:[#allocation2 + $0x168] sm:$0xff]
    %v140 = vld [vmem:[#allocation2 + $0x170] sm:$0xff]
    %v141 = vld [vmem:[#allocation2 + $0x178] sm:$0xff]
    %v142 = vld [vmem:[#allocation4] sm:$0xff]
    %v143 = vld [vmem:[#allocation4 + $0x8] sm:$0xff]
    %v144 = vld [vmem:[#allocation4 + $0x10] sm:$0xff]
    %v145 = vld [vmem:[#allocation4 + $0x18] sm:$0xff]
    %v146 = vld [vmem:[#allocation4 + $0x20] sm:$0xff]
    %v147 = vld [vmem:[#allocation4 + $0x28] sm:$0xff]
    %v148 = vld [vmem:[#allocation4 + $0x30] sm:$0xff]
    %v149 = vld [vmem:[#allocation4 + $0x38] sm:$0xff]
    %v150 = vld [vmem:[#allocation4 + $0x40] sm:$0xff]
    %v151 = vld [vmem:[#allocation4 + $0x48] sm:$0xff]
    %v152 = vld [vmem:[#allocation4 + $0x50] sm:$0xff]
    %v153 = vld [vmem:[#allocation4 + $0x58] sm:$0xff]
    %v154 = vld [vmem:[#allocation4 + $0x60] sm:$0xff]
    %v155 = vld [vmem:[#allocation4 + $0x68] sm:$0xff]
    %v156 = vld [vmem:[#allocation4 + $0x70] sm:$0xff]
    %v157 = vld [vmem:[#allocation4 + $0x78] sm:$0xff]
    %v158 = vld [vmem:[#allocation4 + $0x80] sm:$0xff]
    %v159 = vld [vmem:[#allocation4 + $0x88] sm:$0xff]
    %v160 = vld [vmem:[#allocation4 + $0x90] sm:$0xff]
    %v161 = vld [vmem:[#allocation4 + $0x98] sm:$0xff]
    %v162 = vld [vmem:[#allocation4 + $0xa0] sm:$0xff]
    %v163 = vld [vmem:[#allocation4 + $0xa8] sm:$0xff]
    %v164 = vld [vmem:[#allocation4 + $0xb0] sm:$0xff]
    %v165 = vld [vmem:[#allocation4 + $0xb8] sm:$0xff]
    %v166 = vld [vmem:[#allocation4 + $0xc0] sm:$0xff]
    %v167 = vld [vmem:[#allocation4 + $0xc8] sm:$0xff]
    %v168 = vld [vmem:[#allocation4 + $0xd0] sm:$0xff]
    %v169 = vld [vmem:[#allocation4 + $0xd8] sm:$0xff]
    %v170 = vld [vmem:[#allocation4 + $0xe0] sm:$0xff]
    %v171 = vld [vmem:[#allocation4 + $0xe8] sm:$0xff]
    %v172 = vld [vmem:[#allocation4 + $0xf0] sm:$0xff]
    %v173 = vld [vmem:[#allocation4 + $0xf8] sm:$0xff]
    %v174 = vld [vmem:[#allocation4 + $0x100] sm:$0xff]
    %v175 = vld [vmem:[#allocation4 + $0x108] sm:$0xff]
    %v176 = vld [vmem:[#allocation4 + $0x110] sm:$0xff]
    %v177 = vld [vmem:[#allocation4 + $0x118] sm:$0xff]
    %v178 = vld [vmem:[#allocation4 + $0x120] sm:$0xff]
    %v179 = vld [vmem:[#allocation4 + $0x128] sm:$0xff]
    %v180 = vld [vmem:[#allocation4 + $0x130] sm:$0xff]
    %v181 = vld [vmem:[#allocation4 + $0x138] sm:$0xff]
    %v182 = vld [vmem:[#allocation4 + $0x140] sm:$0xff]
    %v183 = vld [vmem:[#allocation4 + $0x148] sm:$0xff]
    %v184 = vld [vmem:[#allocation4 + $0x150] sm:$0xff]
    %v185 = vld [vmem:[#allocation4 + $0x158] sm:$0xff]
    %v186 = vld [vmem:[#allocation4 + $0x160] sm:$0xff]
    %v187 = vld [vmem:[#allocation4 + $0x168] sm:$0xff]
    %v188 = vld [vmem:[#allocation4 + $0x170] sm:$0xff]
    %v189 = vld [vmem:[#allocation4 + $0x178] sm:$0xff]
    %v190 = vld [vmem:[#allocation4 + $0x180] sm:$0xff]
    %v191 = vld [vmem:[#allocation4 + $0x188] sm:$0xff]
    %v192 = vld [vmem:[#allocation4 + $0x190] sm:$0xff]
    %v193 = vld [vmem:[#allocation4 + $0x198] sm:$0xff]
    %v194 = vld [vmem:[#allocation4 + $0x1a0] sm:$0xff]
    %v195 = vld [vmem:[#allocation4 + $0x1a8] sm:$0xff]
    %v196 = vld [vmem:[#allocation4 + $0x1b0] sm:$0xff]
    %v197 = vld [vmem:[#allocation4 + $0x1b8] sm:$0xff]
    %v198 = vld [vmem:[#allocation4 + $0x1c0] sm:$0xff]
    %v199 = vld [vmem:[#allocation4 + $0x1c8] sm:$0xff]
    %v200 = vld [vmem:[#allocation4 + $0x1d0] sm:$0xff]
    %v201 = vld [vmem:[#allocation4 + $0x1d8] sm:$0xff]
    %v202 = vld [vmem:[#allocation4 + $0x1e0] sm:$0xff]
    %v203 = vld [vmem:[#allocation4 + $0x1e8] sm:$0xff]
    %v204 = vld [vmem:[#allocation4 + $0x1f0] sm:$0xff]
    %v205 = vld [vmem:[#allocation4 + $0x1f8] sm:$0xff]
    %v206 = vld [vmem:[#allocation4 + $0x200] sm:$0xff]
    %v207 = vld [vmem:[#allocation4 + $0x208] sm:$0xff]
    %v208 = vld [vmem:[#allocation4 + $0x210] sm:$0xff]
    %v209 = vld [vmem:[#allocation4 + $0x218] sm:$0xff]
    %v210 = vld [vmem:[#allocation4 + $0x220] sm:$0xff]
    %v211 = vld [vmem:[#allocation4 + $0x228] sm:$0xff]
    %v212 = vld [vmem:[#allocation4 + $0x230] sm:$0xff]
    %v213 = vld [vmem:[#allocation4 + $0x238] sm:$0xff]
    %v214 = vld [vmem:[#allocation4 + $0x240] sm:$0xff]
    %v215 = vld [vmem:[#allocation4 + $0x248] sm:$0xff]
    %v216 = vld [vmem:[#allocation4 + $0x250] sm:$0xff]
    %v217 = vld [vmem:[#allocation4 + $0x258] sm:$0xff]
    %v218 = vld [vmem:[#allocation4 + $0x260] sm:$0xff]
    %v219 = vld [vmem:[#allocation4 + $0x268] sm:$0xff]
    %v220 = vld [vmem:[#allocation4 + $0x270] sm:$0xff]
    %v221 = vld [vmem:[#allocation4 + $0x278] sm:$0xff]
    %v222 = vld [vmem:[#allocation4 + $0x280] sm:$0xff]
    %v223 = vld [vmem:[#allocation4 + $0x288] sm:$0xff]
    %v224 = vld [vmem:[#allocation4 + $0x290] sm:$0xff]
    %v225 = vld [vmem:[#allocation4 + $0x298] sm:$0xff]
    %v226 = vld [vmem:[#allocation4 + $0x2a0] sm:$0xff]
    %v227 = vld [vmem:[#allocation4 + $0x2a8] sm:$0xff]
    %v228 = vld [vmem:[#allocation4 + $0x2b0] sm:$0xff]
    %v229 = vld [vmem:[#allocation4 + $0x2b8] sm:$0xff]
    %v230 = vld [vmem:[#allocation4 + $0x2c0] sm:$0xff]
    %v231 = vld [vmem:[#allocation4 + $0x2c8] sm:$0xff]
    %v232 = vld [vmem:[#allocation4 + $0x2d0] sm:$0xff]
    %v233 = vld [vmem:[#allocation4 + $0x2d8] sm:$0xff]
    %v234 = vld [vmem:[#allocation4 + $0x2e0] sm:$0xff]
    %v235 = vld [vmem:[#allocation4 + $0x2e8] sm:$0xff]
    %v236 = vld [vmem:[#allocation4 + $0x2f0] sm:$0xff]
    %v237 = vld [vmem:[#allocation4 + $0x2f8] sm:$0xff]
    %v238 = vld [vmem:[#allocation4 + $0x300] sm:$0xff]
    %v239 = vld [vmem:[#allocation4 + $0x308] sm:$0xff]
    %v240 = vld [vmem:[#allocation4 + $0x310] sm:$0xff]
    %v241 = vld [vmem:[#allocation4 + $0x318] sm:$0xff]
    %v242 = vld [vmem:[#allocation4 + $0x320] sm:$0xff]
    %v243 = vld [vmem:[#allocation4 + $0x328] sm:$0xff]
    %v244 = vld [vmem:[#allocation4 + $0x330] sm:$0xff]
    %v245 = vld [vmem:[#allocation4 + $0x338] sm:$0xff]
    %v246 = vld [vmem:[#allocation4 + $0x340] sm:$0xff]
    %v247 = vld [vmem:[#allocation4 + $0x348] sm:$0xff]
    %v248 = vld [vmem:[#allocation4 + $0x350] sm:$0xff]
    %v249 = vld [vmem:[#allocation4 + $0x358] sm:$0xff]
    %v250 = vld [vmem:[#allocation4 + $0x360] sm:$0xff]
    %v251 = vld [vmem:[#allocation4 + $0x368] sm:$0xff]
    %v252 = vld [vmem:[#allocation4 + $0x370] sm:$0xff]
    %v253 = vld [vmem:[#allocation4 + $0x378] sm:$0xff]
    %v254 = vld [vmem:[#allocation4 + $0x380] sm:$0xff]
    %v255 = vld [vmem:[#allocation4 + $0x388] sm:$0xff]
    %v256 = vld [vmem:[#allocation4 + $0x390] sm:$0xff]
    %v257 = vld [vmem:[#allocation4 + $0x398] sm:$0xff]
    %v258 = vld [vmem:[#allocation4 + $0x3a0] sm:$0xff]
    %v259 = vld [vmem:[#allocation4 + $0x3a8] sm:$0xff]
    %v260 = vld [vmem:[#allocation4 + $0x3b0] sm:$0xff]
    %v261 = vld [vmem:[#allocation4 + $0x3b8] sm:$0xff]
    %v262 = vld [vmem:[#allocation4 + $0x3c0] sm:$0xff]
    %v263 = vld [vmem:[#allocation4 + $0x3c8] sm:$0xff]
    %v264 = vld [vmem:[#allocation4 + $0x3d0] sm:$0xff]
    %v265 = vld [vmem:[#allocation4 + $0x3d8] sm:$0xff]
    %v266 = vld [vmem:[#allocation4 + $0x3e0] sm:$0xff]
    %v267 = vld [vmem:[#allocation4 + $0x3e8] sm:$0xff]
    %v268 = vld [vmem:[#allocation4 + $0x3f0] sm:$0xff]
    %v269 = vld [vmem:[#allocation4 + $0x3f8] sm:$0xff]
    %v270 = vld [vmem:[#allocation4 + $0x400] sm:$0xff]
    %v271 = vld [vmem:[#allocation4 + $0x408] sm:$0xff]
    %v272 = vld [vmem:[#allocation4 + $0x410] sm:$0xff]
    %v273 = vld [vmem:[#allocation4 + $0x418] sm:$0xff]
    %v274 = vld [vmem:[#allocation4 + $0x420] sm:$0xff]
    %v275 = vld [vmem:[#allocation4 + $0x428] sm:$0xff]
    %v276 = vld [vmem:[#allocation4 + $0x430] sm:$0xff]
    %v277 = vld [vmem:[#allocation4 + $0x438] sm:$0xff]
    %v278 = vld [vmem:[#allocation4 + $0x440] sm:$0xff]
    %v279 = vld [vmem:[#allocation4 + $0x448] sm:$0xff]
    %v280 = vld [vmem:[#allocation4 + $0x450] sm:$0xff]
    %v281 = vld [vmem:[#allocation4 + $0x458] sm:$0xff]
    %v282 = vld [vmem:[#allocation4 + $0x460] sm:$0xff]
    %v283 = vld [vmem:[#allocation4 + $0x468] sm:$0xff]
    %v284 = vld [vmem:[#allocation4 + $0x470] sm:$0xff]
    %v285 = vld [vmem:[#allocation4 + $0x478] sm:$0xff]
    %v286 = vld [vmem:[#allocation4 + $0x480] sm:$0xff]
    %v287 = vld [vmem:[#allocation4 + $0x488] sm:$0xff]
    %v288 = vld [vmem:[#allocation4 + $0x490] sm:$0xff]
    %v289 = vld [vmem:[#allocation4 + $0x498] sm:$0xff]
    %v290 = vld [vmem:[#allocation4 + $0x4a0] sm:$0xff]
    %v291 = vld [vmem:[#allocation4 + $0x4a8] sm:$0xff]
    %v292 = vld [vmem:[#allocation4 + $0x4b0] sm:$0xff]
    %v293 = vld [vmem:[#allocation4 + $0x4b8] sm:$0xff]
    %v294 = vld [vmem:[#allocation4 + $0x4c0] sm:$0xff]
    %v295 = vld [vmem:[#allocation4 + $0x4c8] sm:$0xff]
    %v296 = vld [vmem:[#allocation4 + $0x4d0] sm:$0xff]
    %v297 = vld [vmem:[#allocation4 + $0x4d8] sm:$0xff]
    %v298 = vld [vmem:[#allocation4 + $0x4e0] sm:$0xff]
    %v299 = vld [vmem:[#allocation4 + $0x4e8] sm:$0xff]
    %v300 = vld [vmem:[#allocation4 + $0x4f0] sm:$0xff]
    %v301 = vld [vmem:[#allocation4 + $0x4f8] sm:$0xff]
    %v302 = vld [vmem:[#allocation4 + $0x500] sm:$0xff]
    %v303 = vld [vmem:[#allocation4 + $0x508] sm:$0xff]
    %v304 = vld [vmem:[#allocation4 + $0x510] sm:$0xff]
    %v305 = vld [vmem:[#allocation4 + $0x518] sm:$0xff]
    %v306 = vld [vmem:[#allocation4 + $0x520] sm:$0xff]
    %v307 = vld [vmem:[#allocation4 + $0x528] sm:$0xff]
    %v308 = vld [vmem:[#allocation4 + $0x530] sm:$0xff]
    %v309 = vld [vmem:[#allocation4 + $0x538] sm:$0xff]
    %v310 = vld [vmem:[#allocation4 + $0x540] sm:$0xff]
    %v311 = vld [vmem:[#allocation4 + $0x548] sm:$0xff]
    %v312 = vld [vmem:[#allocation4 + $0x550] sm:$0xff]
    %v313 = vld [vmem:[#allocation4 + $0x558] sm:$0xff]
    %v314 = vld [vmem:[#allocation4 + $0x560] sm:$0xff]
    %v315 = vld [vmem:[#allocation4 + $0x568] sm:$0xff]
    %v316 = vld [vmem:[#allocation4 + $0x570] sm:$0xff]
    %v317 = vld [vmem:[#allocation4 + $0x578] sm:$0xff]
    %v318 = vld [vmem:[#allocation4 + $0x580] sm:$0xff]
    %v319 = vld [vmem:[#allocation4 + $0x588] sm:$0xff]
    %v320 = vld [vmem:[#allocation4 + $0x590] sm:$0xff]
    %v321 = vld [vmem:[#allocation4 + $0x598] sm:$0xff]
    %v322 = vld [vmem:[#allocation4 + $0x5a0] sm:$0xff]
    %v323 = vld [vmem:[#allocation4 + $0x5a8] sm:$0xff]
    %v324 = vld [vmem:[#allocation4 + $0x5b0] sm:$0xff]
    %v325 = vld [vmem:[#allocation4 + $0x5b8] sm:$0xff]
    %v326 = vld [vmem:[#allocation4 + $0x5c0] sm:$0xff]
    %v327 = vld [vmem:[#allocation4 + $0x5c8] sm:$0xff]
    %v328 = vld [vmem:[#allocation4 + $0x5d0] sm:$0xff]
    %v329 = vld [vmem:[#allocation4 + $0x5d8] sm:$0xff]
    %v330 = vld [vmem:[#allocation4 + $0x5e0] sm:$0xff]
    %v331 = vld [vmem:[#allocation4 + $0x5e8] sm:$0xff]
    %v332 = vld [vmem:[#allocation4 + $0x5f0] sm:$0xff]
    %v333 = vld [vmem:[#allocation4 + $0x5f8] sm:$0xff]
    %v334 = vld [vmem:[%s2] sm:$0xf]
    %v336 = vlaneseq
    %v337 = vshrl.u32 %v336, 7
    %v338 = vsub.s32 0, %v337
    %v339 = vrot.slane %v334, %v338
    %v340 = vlaneseq
    %v341 = vshrl.u32 %v340, 7
    %v342 = vsub.s32 1, %v341
    %v343 = vrot.slane %v334, %v342
    %v344 = vlaneseq
    %v345 = vshrl.u32 %v344, 7
    %v346 = vsub.s32 2, %v345
    %v347 = vrot.slane %v334, %v346
    %v348 = vlaneseq
    %v349 = vshrl.u32 %v348, 7
    %v350 = vsub.s32 3, %v349
    %v351 = vrot.slane %v334, %v350
    %v404 = vunpack.c.l.b16 %v94
    %v405 = vunpack.c.h.b16 %v94
    %v406 = vunpack.c.l.b16 %v95
    %v407 = vunpack.c.h.b16 %v95
    %v408 = vunpack.c.l.b16 %v96
    %v409 = vunpack.c.h.b16 %v96
    %v410 = vunpack.c.l.b16 %v97
    %v411 = vunpack.c.h.b16 %v97
    %v412 = vunpack.c.l.b16 %v98
    %v413 = vunpack.c.h.b16 %v98
    %v414 = vunpack.c.l.b16 %v99
    %v415 = vunpack.c.h.b16 %v99
    %v416 = vunpack.c.l.b16 %v100
    %v417 = vunpack.c.h.b16 %v100
    %v418 = vunpack.c.l.b16 %v101
    %v419 = vunpack.c.h.b16 %v101
    %v420 = vunpack.c.l.b16 %v102
    %v421 = vunpack.c.h.b16 %v102
    %v422 = vunpack.c.l.b16 %v103
    %v423 = vunpack.c.h.b16 %v103
    %v424 = vunpack.c.l.b16 %v104
    %v425 = vunpack.c.h.b16 %v104
    %v426 = vunpack.c.l.b16 %v105
    %v427 = vunpack.c.h.b16 %v105
    %v428 = vunpack.c.l.b16 %v106
    %v429 = vunpack.c.h.b16 %v106
    %v430 = vunpack.c.l.b16 %v107
    %v431 = vunpack.c.h.b16 %v107
    %v432 = vunpack.c.l.b16 %v108
    %v433 = vunpack.c.h.b16 %v108
    %v434 = vunpack.c.l.b16 %v109
    %v435 = vunpack.c.h.b16 %v109
    %v436 = vunpack.c.l.b16 %v110
    %v437 = vunpack.c.h.b16 %v110
    %v438 = vunpack.c.l.b16 %v111
    %v439 = vunpack.c.h.b16 %v111
    %v440 = vunpack.c.l.b16 %v112
    %v441 = vunpack.c.h.b16 %v112
    %v442 = vunpack.c.l.b16 %v113
    %v443 = vunpack.c.h.b16 %v113
    %v444 = vunpack.c.l.b16 %v114
    %v445 = vunpack.c.h.b16 %v114
    %v446 = vunpack.c.l.b16 %v115
    %v447 = vunpack.c.h.b16 %v115
    %v448 = vunpack.c.l.b16 %v116
    %v449 = vunpack.c.h.b16 %v116
    %v450 = vunpack.c.l.b16 %v117
    %v451 = vunpack.c.h.b16 %v117
    %v452 = vunpack.c.l.b16 %v118
    %v453 = vunpack.c.h.b16 %v118
    %v454 = vunpack.c.l.b16 %v119
    %v455 = vunpack.c.h.b16 %v119
    %v456 = vunpack.c.l.b16 %v120
    %v457 = vunpack.c.h.b16 %v120
    %v458 = vunpack.c.l.b16 %v121
    %v459 = vunpack.c.h.b16 %v121
    %v460 = vunpack.c.l.b16 %v122
    %v461 = vunpack.c.h.b16 %v122
    %v462 = vunpack.c.l.b16 %v123
    %v463 = vunpack.c.h.b16 %v123
    %v464 = vunpack.c.l.b16 %v124
    %v465 = vunpack.c.h.b16 %v124
    %v466 = vunpack.c.l.b16 %v125
    %v467 = vunpack.c.h.b16 %v125
    %v468 = vunpack.c.l.b16 %v126
    %v469 = vunpack.c.h.b16 %v126
    %v470 = vunpack.c.l.b16 %v127
    %v471 = vunpack.c.h.b16 %v127
    %v472 = vunpack.c.l.b16 %v128
    %v473 = vunpack.c.h.b16 %v128
    %v474 = vunpack.c.l.b16 %v129
    %v475 = vunpack.c.h.b16 %v129
    %v476 = vunpack.c.l.b16 %v130
    %v477 = vunpack.c.h.b16 %v130
    %v478 = vunpack.c.l.b16 %v131
    %v479 = vunpack.c.h.b16 %v131
    %v480 = vunpack.c.l.b16 %v132
    %v481 = vunpack.c.h.b16 %v132
    %v482 = vunpack.c.l.b16 %v133
    %v483 = vunpack.c.h.b16 %v133
    %v484 = vunpack.c.l.b16 %v134
    %v485 = vunpack.c.h.b16 %v134
    %v486 = vunpack.c.l.b16 %v135
    %v487 = vunpack.c.h.b16 %v135
    %v488 = vunpack.c.l.b16 %v136
    %v489 = vunpack.c.h.b16 %v136
    %v490 = vunpack.c.l.b16 %v137
    %v491 = vunpack.c.h.b16 %v137
    %v492 = vunpack.c.l.b16 %v138
    %v493 = vunpack.c.h.b16 %v138
    %v494 = vunpack.c.l.b16 %v139
    %v495 = vunpack.c.h.b16 %v139
    %v496 = vunpack.c.l.b16 %v140
    %v497 = vunpack.c.h.b16 %v140
    %v498 = vunpack.c.l.b16 %v141
    %v499 = vunpack.c.h.b16 %v141
    %v500 = vpack.c.b16 %v410, %v404
    %v501 = vpack.c.b16 %v411, %v405
    %v502 = vpack.c.b16 %v412, %v406
    %v503 = vpack.c.b16 %v413, %v407
    %v504 = vpack.c.b16 %v414, %v408
    %v505 = vpack.c.b16 %v415, %v409
    %v506 = vpack.c.b16 %v422, %v416
    %v507 = vpack.c.b16 %v423, %v417
    %v508 = vpack.c.b16 %v424, %v418
    %v509 = vpack.c.b16 %v425, %v419
    %v510 = vpack.c.b16 %v426, %v420
    %v511 = vpack.c.b16 %v427, %v421
    %v512 = vpack.c.b16 %v434, %v428
    %v513 = vpack.c.b16 %v435, %v429
    %v514 = vpack.c.b16 %v436, %v430
    %v515 = vpack.c.b16 %v437, %v431
    %v516 = vpack.c.b16 %v438, %v432
    %v517 = vpack.c.b16 %v439, %v433
    %v518 = vpack.c.b16 %v446, %v440
    %v519 = vpack.c.b16 %v447, %v441
    %v520 = vpack.c.b16 %v448, %v442
    %v521 = vpack.c.b16 %v449, %v443
    %v522 = vpack.c.b16 %v450, %v444
    %v523 = vpack.c.b16 %v451, %v445
    %v524 = vpack.c.b16 %v458, %v452
    %v525 = vpack.c.b16 %v459, %v453
    %v526 = vpack.c.b16 %v460, %v454
    %v527 = vpack.c.b16 %v461, %v455
    %v528 = vpack.c.b16 %v462, %v456
    %v529 = vpack.c.b16 %v463, %v457
    %v530 = vpack.c.b16 %v470, %v464
    %v531 = vpack.c.b16 %v471, %v465
    %v532 = vpack.c.b16 %v472, %v466
    %v533 = vpack.c.b16 %v473, %v467
    %v534 = vpack.c.b16 %v474, %v468
    %v535 = vpack.c.b16 %v475, %v469
    %v536 = vpack.c.b16 %v482, %v476
    %v537 = vpack.c.b16 %v483, %v477
    %v538 = vpack.c.b16 %v484, %v478
    %v539 = vpack.c.b16 %v485, %v479
    %v540 = vpack.c.b16 %v486, %v480
    %v541 = vpack.c.b16 %v487, %v481
    %v542 = vpack.c.b16 %v494, %v488
    %v543 = vpack.c.b16 %v495, %v489
    %v544 = vpack.c.b16 %v496, %v490
    %v545 = vpack.c.b16 %v497, %v491
    %v546 = vpack.c.b16 %v498, %v492
    %v547 = vpack.c.b16 %v499, %v493
    %v788 = vunpack.c.l.b16 %v142
    %v789 = vunpack.c.h.b16 %v142
    %v790 = vunpack.c.l.b16 %v143
    %v791 = vunpack.c.h.b16 %v143
    %v792 = vunpack.c.l.b16 %v144
    %v793 = vunpack.c.h.b16 %v144
    %v794 = vunpack.c.l.b16 %v145
    %v795 = vunpack.c.h.b16 %v145
    %v796 = vunpack.c.l.b16 %v146
    %v797 = vunpack.c.h.b16 %v146
    %v798 = vunpack.c.l.b16 %v147
    %v799 = vunpack.c.h.b16 %v147
    %v800 = vunpack.c.l.b16 %v148
    %v801 = vunpack.c.h.b16 %v148
    %v802 = vunpack.c.l.b16 %v149
    %v803 = vunpack.c.h.b16 %v149
    %v804 = vunpack.c.l.b16 %v150
    %v805 = vunpack.c.h.b16 %v150
    %v806 = vunpack.c.l.b16 %v151
    %v807 = vunpack.c.h.b16 %v151
    %v808 = vunpack.c.l.b16 %v152
    %v809 = vunpack.c.h.b16 %v152
    %v810 = vunpack.c.l.b16 %v153
    %v811 = vunpack.c.h.b16 %v153
    %v812 = vunpack.c.l.b16 %v154
    %v813 = vunpack.c.h.b16 %v154
    %v814 = vunpack.c.l.b16 %v155
    %v815 = vunpack.c.h.b16 %v155
    %v816 = vunpack.c.l.b16 %v156
    %v817 = vunpack.c.h.b16 %v156
    %v818 = vunpack.c.l.b16 %v157
    %v819 = vunpack.c.h.b16 %v157
    %v820 = vunpack.c.l.b16 %v158
    %v821 = vunpack.c.h.b16 %v158
    %v822 = vunpack.c.l.b16 %v159
    %v823 = vunpack.c.h.b16 %v159
    %v824 = vunpack.c.l.b16 %v160
    %v825 = vunpack.c.h.b16 %v160
    %v826 = vunpack.c.l.b16 %v161
    %v827 = vunpack.c.h.b16 %v161
    %v828 = vunpack.c.l.b16 %v162
    %v829 = vunpack.c.h.b16 %v162
    %v830 = vunpack.c.l.b16 %v163
    %v831 = vunpack.c.h.b16 %v163
    %v832 = vunpack.c.l.b16 %v164
    %v833 = vunpack.c.h.b16 %v164
    %v834 = vunpack.c.l.b16 %v165
    %v835 = vunpack.c.h.b16 %v165
    %v836 = vunpack.c.l.b16 %v166
    %v837 = vunpack.c.h.b16 %v166
    %v838 = vunpack.c.l.b16 %v167
    %v839 = vunpack.c.h.b16 %v167
    %v840 = vunpack.c.l.b16 %v168
    %v841 = vunpack.c.h.b16 %v168
    %v842 = vunpack.c.l.b16 %v169
    %v843 = vunpack.c.h.b16 %v169
    %v844 = vunpack.c.l.b16 %v170
    %v845 = vunpack.c.h.b16 %v170
    %v846 = vunpack.c.l.b16 %v171
    %v847 = vunpack.c.h.b16 %v171
    %v848 = vunpack.c.l.b16 %v172
    %v849 = vunpack.c.h.b16 %v172
    %v850 = vunpack.c.l.b16 %v173
    %v851 = vunpack.c.h.b16 %v173
    %v852 = vunpack.c.l.b16 %v174
    %v853 = vunpack.c.h.b16 %v174
    %v854 = vunpack.c.l.b16 %v175
    %v855 = vunpack.c.h.b16 %v175
    %v856 = vunpack.c.l.b16 %v176
    %v857 = vunpack.c.h.b16 %v176
    %v858 = vunpack.c.l.b16 %v177
    %v859 = vunpack.c.h.b16 %v177
    %v860 = vunpack.c.l.b16 %v178
    %v861 = vunpack.c.h.b16 %v178
    %v862 = vunpack.c.l.b16 %v179
    %v863 = vunpack.c.h.b16 %v179
    %v864 = vunpack.c.l.b16 %v180
    %v865 = vunpack.c.h.b16 %v180
    %v866 = vunpack.c.l.b16 %v181
    %v867 = vunpack.c.h.b16 %v181
    %v868 = vunpack.c.l.b16 %v182
    %v869 = vunpack.c.h.b16 %v182
    %v870 = vunpack.c.l.b16 %v183
    %v871 = vunpack.c.h.b16 %v183
    %v872 = vunpack.c.l.b16 %v184
    %v873 = vunpack.c.h.b16 %v184
    %v874 = vunpack.c.l.b16 %v185
    %v875 = vunpack.c.h.b16 %v185
    %v876 = vunpack.c.l.b16 %v186
    %v877 = vunpack.c.h.b16 %v186
    %v878 = vunpack.c.l.b16 %v187
    %v879 = vunpack.c.h.b16 %v187
    %v880 = vunpack.c.l.b16 %v188
    %v881 = vunpack.c.h.b16 %v188
    %v882 = vunpack.c.l.b16 %v189
    %v883 = vunpack.c.h.b16 %v189
    %v884 = vunpack.c.l.b16 %v190
    %v885 = vunpack.c.h.b16 %v190
    %v886 = vunpack.c.l.b16 %v191
    %v887 = vunpack.c.h.b16 %v191
    %v888 = vunpack.c.l.b16 %v192
    %v889 = vunpack.c.h.b16 %v192
    %v890 = vunpack.c.l.b16 %v193
    %v891 = vunpack.c.h.b16 %v193
    %v892 = vunpack.c.l.b16 %v194
    %v893 = vunpack.c.h.b16 %v194
    %v894 = vunpack.c.l.b16 %v195
    %v895 = vunpack.c.h.b16 %v195
    %v896 = vunpack.c.l.b16 %v196
    %v897 = vunpack.c.h.b16 %v196
    %v898 = vunpack.c.l.b16 %v197
    %v899 = vunpack.c.h.b16 %v197
    %v900 = vunpack.c.l.b16 %v198
    %v901 = vunpack.c.h.b16 %v198
    %v902 = vunpack.c.l.b16 %v199
    %v903 = vunpack.c.h.b16 %v199
    %v904 = vunpack.c.l.b16 %v200
    %v905 = vunpack.c.h.b16 %v200
    %v906 = vunpack.c.l.b16 %v201
    %v907 = vunpack.c.h.b16 %v201
    %v908 = vunpack.c.l.b16 %v202
    %v909 = vunpack.c.h.b16 %v202
    %v910 = vunpack.c.l.b16 %v203
    %v911 = vunpack.c.h.b16 %v203
    %v912 = vunpack.c.l.b16 %v204
    %v913 = vunpack.c.h.b16 %v204
    %v914 = vunpack.c.l.b16 %v205
    %v915 = vunpack.c.h.b16 %v205
    %v916 = vunpack.c.l.b16 %v206
    %v917 = vunpack.c.h.b16 %v206
    %v918 = vunpack.c.l.b16 %v207
    %v919 = vunpack.c.h.b16 %v207
    %v920 = vunpack.c.l.b16 %v208
    %v921 = vunpack.c.h.b16 %v208
    %v922 = vunpack.c.l.b16 %v209
    %v923 = vunpack.c.h.b16 %v209
    %v924 = vunpack.c.l.b16 %v210
    %v925 = vunpack.c.h.b16 %v210
    %v926 = vunpack.c.l.b16 %v211
    %v927 = vunpack.c.h.b16 %v211
    %v928 = vunpack.c.l.b16 %v212
    %v929 = vunpack.c.h.b16 %v212
    %v930 = vunpack.c.l.b16 %v213
    %v931 = vunpack.c.h.b16 %v213
    %v932 = vunpack.c.l.b16 %v214
    %v933 = vunpack.c.h.b16 %v214
    %v934 = vunpack.c.l.b16 %v215
    %v935 = vunpack.c.h.b16 %v215
    %v936 = vunpack.c.l.b16 %v216
    %v937 = vunpack.c.h.b16 %v216
    %v938 = vunpack.c.l.b16 %v217
    %v939 = vunpack.c.h.b16 %v217
    %v940 = vunpack.c.l.b16 %v218
    %v941 = vunpack.c.h.b16 %v218
    %v942 = vunpack.c.l.b16 %v219
    %v943 = vunpack.c.h.b16 %v219
    %v944 = vunpack.c.l.b16 %v220
    %v945 = vunpack.c.h.b16 %v220
    %v946 = vunpack.c.l.b16 %v221
    %v947 = vunpack.c.h.b16 %v221
    %v948 = vunpack.c.l.b16 %v222
    %v949 = vunpack.c.h.b16 %v222
    %v950 = vunpack.c.l.b16 %v223
    %v951 = vunpack.c.h.b16 %v223
    %v952 = vunpack.c.l.b16 %v224
    %v953 = vunpack.c.h.b16 %v224
    %v954 = vunpack.c.l.b16 %v225
    %v955 = vunpack.c.h.b16 %v225
    %v956 = vunpack.c.l.b16 %v226
    %v957 = vunpack.c.h.b16 %v226
    %v958 = vunpack.c.l.b16 %v227
    %v959 = vunpack.c.h.b16 %v227
    %v960 = vunpack.c.l.b16 %v228
    %v961 = vunpack.c.h.b16 %v228
    %v962 = vunpack.c.l.b16 %v229
    %v963 = vunpack.c.h.b16 %v229
    %v964 = vunpack.c.l.b16 %v230
    %v965 = vunpack.c.h.b16 %v230
    %v966 = vunpack.c.l.b16 %v231
    %v967 = vunpack.c.h.b16 %v231
    %v968 = vunpack.c.l.b16 %v232
    %v969 = vunpack.c.h.b16 %v232
    %v970 = vunpack.c.l.b16 %v233
    %v971 = vunpack.c.h.b16 %v233
    %v972 = vunpack.c.l.b16 %v234
    %v973 = vunpack.c.h.b16 %v234
    %v974 = vunpack.c.l.b16 %v235
    %v975 = vunpack.c.h.b16 %v235
    %v976 = vunpack.c.l.b16 %v236
    %v977 = vunpack.c.h.b16 %v236
    %v978 = vunpack.c.l.b16 %v237
    %v979 = vunpack.c.h.b16 %v237
    %v980 = vunpack.c.l.b16 %v238
    %v981 = vunpack.c.h.b16 %v238
    %v982 = vunpack.c.l.b16 %v239
    %v983 = vunpack.c.h.b16 %v239
    %v984 = vunpack.c.l.b16 %v240
    %v985 = vunpack.c.h.b16 %v240
    %v986 = vunpack.c.l.b16 %v241
    %v987 = vunpack.c.h.b16 %v241
    %v988 = vunpack.c.l.b16 %v242
    %v989 = vunpack.c.h.b16 %v242
    %v990 = vunpack.c.l.b16 %v243
    %v991 = vunpack.c.h.b16 %v243
    %v992 = vunpack.c.l.b16 %v244
    %v993 = vunpack.c.h.b16 %v244
    %v994 = vunpack.c.l.b16 %v245
    %v995 = vunpack.c.h.b16 %v245
    %v996 = vunpack.c.l.b16 %v246
    %v997 = vunpack.c.h.b16 %v246
    %v998 = vunpack.c.l.b16 %v247
    %v999 = vunpack.c.h.b16 %v247
    %v1000 = vunpack.c.l.b16 %v248
    %v1001 = vunpack.c.h.b16 %v248
    %v1002 = vunpack.c.l.b16 %v249
    %v1003 = vunpack.c.h.b16 %v249
    %v1004 = vunpack.c.l.b16 %v250
    %v1005 = vunpack.c.h.b16 %v250
    %v1006 = vunpack.c.l.b16 %v251
    %v1007 = vunpack.c.h.b16 %v251
    %v1008 = vunpack.c.l.b16 %v252
    %v1009 = vunpack.c.h.b16 %v252
    %v1010 = vunpack.c.l.b16 %v253
    %v1011 = vunpack.c.h.b16 %v253
    %v1012 = vunpack.c.l.b16 %v254
    %v1013 = vunpack.c.h.b16 %v254
    %v1014 = vunpack.c.l.b16 %v255
    %v1015 = vunpack.c.h.b16 %v255
    %v1016 = vunpack.c.l.b16 %v256
    %v1017 = vunpack.c.h.b16 %v256
    %v1018 = vunpack.c.l.b16 %v257
    %v1019 = vunpack.c.h.b16 %v257
    %v1020 = vunpack.c.l.b16 %v258
    %v1021 = vunpack.c.h.b16 %v258
    %v1022 = vunpack.c.l.b16 %v259
    %v1023 = vunpack.c.h.b16 %v259
    %v1024 = vunpack.c.l.b16 %v260
    %v1025 = vunpack.c.h.b16 %v260
    %v1026 = vunpack.c.l.b16 %v261
    %v1027 = vunpack.c.h.b16 %v261
    %v1028 = vunpack.c.l.b16 %v262
    %v1029 = vunpack.c.h.b16 %v262
    %v1030 = vunpack.c.l.b16 %v263
    %v1031 = vunpack.c.h.b16 %v263
    %v1032 = vunpack.c.l.b16 %v264
    %v1033 = vunpack.c.h.b16 %v264
    %v1034 = vunpack.c.l.b16 %v265
    %v1035 = vunpack.c.h.b16 %v265
    %v1036 = vunpack.c.l.b16 %v266
    %v1037 = vunpack.c.h.b16 %v266
    %v1038 = vunpack.c.l.b16 %v267
    %v1039 = vunpack.c.h.b16 %v267
    %v1040 = vunpack.c.l.b16 %v268
    %v1041 = vunpack.c.h.b16 %v268
    %v1042 = vunpack.c.l.b16 %v269
    %v1043 = vunpack.c.h.b16 %v269
    %v1044 = vunpack.c.l.b16 %v270
    %v1045 = vunpack.c.h.b16 %v270
    %v1046 = vunpack.c.l.b16 %v271
    %v1047 = vunpack.c.h.b16 %v271
    %v1048 = vunpack.c.l.b16 %v272
    %v1049 = vunpack.c.h.b16 %v272
    %v1050 = vunpack.c.l.b16 %v273
    %v1051 = vunpack.c.h.b16 %v273
    %v1052 = vunpack.c.l.b16 %v274
    %v1053 = vunpack.c.h.b16 %v274
    %v1054 = vunpack.c.l.b16 %v275
    %v1055 = vunpack.c.h.b16 %v275
    %v1056 = vunpack.c.l.b16 %v276
    %v1057 = vunpack.c.h.b16 %v276
    %v1058 = vunpack.c.l.b16 %v277
    %v1059 = vunpack.c.h.b16 %v277
    %v1060 = vunpack.c.l.b16 %v278
    %v1061 = vunpack.c.h.b16 %v278
    %v1062 = vunpack.c.l.b16 %v279
    %v1063 = vunpack.c.h.b16 %v279
    %v1064 = vunpack.c.l.b16 %v280
    %v1065 = vunpack.c.h.b16 %v280
    %v1066 = vunpack.c.l.b16 %v281
    %v1067 = vunpack.c.h.b16 %v281
    %v1068 = vunpack.c.l.b16 %v282
    %v1069 = vunpack.c.h.b16 %v282
    %v1070 = vunpack.c.l.b16 %v283
    %v1071 = vunpack.c.h.b16 %v283
    %v1072 = vunpack.c.l.b16 %v284
    %v1073 = vunpack.c.h.b16 %v284
    %v1074 = vunpack.c.l.b16 %v285
    %v1075 = vunpack.c.h.b16 %v285
    %v1076 = vunpack.c.l.b16 %v286
    %v1077 = vunpack.c.h.b16 %v286
    %v1078 = vunpack.c.l.b16 %v287
    %v1079 = vunpack.c.h.b16 %v287
    %v1080 = vunpack.c.l.b16 %v288
    %v1081 = vunpack.c.h.b16 %v288
    %v1082 = vunpack.c.l.b16 %v289
    %v1083 = vunpack.c.h.b16 %v289
    %v1084 = vunpack.c.l.b16 %v290
    %v1085 = vunpack.c.h.b16 %v290
    %v1086 = vunpack.c.l.b16 %v291
    %v1087 = vunpack.c.h.b16 %v291
    %v1088 = vunpack.c.l.b16 %v292
    %v1089 = vunpack.c.h.b16 %v292
    %v1090 = vunpack.c.l.b16 %v293
    %v1091 = vunpack.c.h.b16 %v293
    %v1092 = vunpack.c.l.b16 %v294
    %v1093 = vunpack.c.h.b16 %v294
    %v1094 = vunpack.c.l.b16 %v295
    %v1095 = vunpack.c.h.b16 %v295
    %v1096 = vunpack.c.l.b16 %v296
    %v1097 = vunpack.c.h.b16 %v296
    %v1098 = vunpack.c.l.b16 %v297
    %v1099 = vunpack.c.h.b16 %v297
    %v1100 = vunpack.c.l.b16 %v298
    %v1101 = vunpack.c.h.b16 %v298
    %v1102 = vunpack.c.l.b16 %v299
    %v1103 = vunpack.c.h.b16 %v299
    %v1104 = vunpack.c.l.b16 %v300
    %v1105 = vunpack.c.h.b16 %v300
    %v1106 = vunpack.c.l.b16 %v301
    %v1107 = vunpack.c.h.b16 %v301
    %v1108 = vunpack.c.l.b16 %v302
    %v1109 = vunpack.c.h.b16 %v302
    %v1110 = vunpack.c.l.b16 %v303
    %v1111 = vunpack.c.h.b16 %v303
    %v1112 = vunpack.c.l.b16 %v304
    %v1113 = vunpack.c.h.b16 %v304
    %v1114 = vunpack.c.l.b16 %v305
    %v1115 = vunpack.c.h.b16 %v305
    %v1116 = vunpack.c.l.b16 %v306
    %v1117 = vunpack.c.h.b16 %v306
    %v1118 = vunpack.c.l.b16 %v307
    %v1119 = vunpack.c.h.b16 %v307
    %v1120 = vunpack.c.l.b16 %v308
    %v1121 = vunpack.c.h.b16 %v308
    %v1122 = vunpack.c.l.b16 %v309
    %v1123 = vunpack.c.h.b16 %v309
    %v1124 = vunpack.c.l.b16 %v310
    %v1125 = vunpack.c.h.b16 %v310
    %v1126 = vunpack.c.l.b16 %v311
    %v1127 = vunpack.c.h.b16 %v311
    %v1128 = vunpack.c.l.b16 %v312
    %v1129 = vunpack.c.h.b16 %v312
    %v1130 = vunpack.c.l.b16 %v313
    %v1131 = vunpack.c.h.b16 %v313
    %v1132 = vunpack.c.l.b16 %v314
    %v1133 = vunpack.c.h.b16 %v314
    %v1134 = vunpack.c.l.b16 %v315
    %v1135 = vunpack.c.h.b16 %v315
    %v1136 = vunpack.c.l.b16 %v316
    %v1137 = vunpack.c.h.b16 %v316
    %v1138 = vunpack.c.l.b16 %v317
    %v1139 = vunpack.c.h.b16 %v317
    %v1140 = vunpack.c.l.b16 %v318
    %v1141 = vunpack.c.h.b16 %v318
    %v1142 = vunpack.c.l.b16 %v319
    %v1143 = vunpack.c.h.b16 %v319
    %v1144 = vunpack.c.l.b16 %v320
    %v1145 = vunpack.c.h.b16 %v320
    %v1146 = vunpack.c.l.b16 %v321
    %v1147 = vunpack.c.h.b16 %v321
    %v1148 = vunpack.c.l.b16 %v322
    %v1149 = vunpack.c.h.b16 %v322
    %v1150 = vunpack.c.l.b16 %v323
    %v1151 = vunpack.c.h.b16 %v323
    %v1152 = vunpack.c.l.b16 %v324
    %v1153 = vunpack.c.h.b16 %v324
    %v1154 = vunpack.c.l.b16 %v325
    %v1155 = vunpack.c.h.b16 %v325
    %v1156 = vunpack.c.l.b16 %v326
    %v1157 = vunpack.c.h.b16 %v326
    %v1158 = vunpack.c.l.b16 %v327
    %v1159 = vunpack.c.h.b16 %v327
    %v1160 = vunpack.c.l.b16 %v328
    %v1161 = vunpack.c.h.b16 %v328
    %v1162 = vunpack.c.l.b16 %v329
    %v1163 = vunpack.c.h.b16 %v329
    %v1164 = vunpack.c.l.b16 %v330
    %v1165 = vunpack.c.h.b16 %v330
    %v1166 = vunpack.c.l.b16 %v331
    %v1167 = vunpack.c.h.b16 %v331
    %v1168 = vunpack.c.l.b16 %v332
    %v1169 = vunpack.c.h.b16 %v332
    %v1170 = vunpack.c.l.b16 %v333
    %v1171 = vunpack.c.h.b16 %v333
    %v1172 = vpack.c.b16 %v792, %v788
    %v1173 = vpack.c.b16 %v793, %v789
    %v1174 = vpack.c.b16 %v794, %v790
    %v1175 = vpack.c.b16 %v795, %v791
    %v1176 = vpack.c.b16 %v800, %v796
    %v1177 = vpack.c.b16 %v801, %v797
    %v1178 = vpack.c.b16 %v802, %v798
    %v1179 = vpack.c.b16 %v803, %v799
    %v1180 = vpack.c.b16 %v808, %v804
    %v1181 = vpack.c.b16 %v809, %v805
    %v1182 = vpack.c.b16 %v810, %v806
    %v1183 = vpack.c.b16 %v811, %v807
    %v1184 = vpack.c.b16 %v816, %v812
    %v1185 = vpack.c.b16 %v817, %v813
    %v1186 = vpack.c.b16 %v818, %v814
    %v1187 = vpack.c.b16 %v819, %v815
    %v1188 = vpack.c.b16 %v824, %v820
    %v1189 = vpack.c.b16 %v825, %v821
    %v1190 = vpack.c.b16 %v826, %v822
    %v1191 = vpack.c.b16 %v827, %v823
    %v1192 = vpack.c.b16 %v832, %v828
    %v1193 = vpack.c.b16 %v833, %v829
    %v1194 = vpack.c.b16 %v834, %v830
    %v1195 = vpack.c.b16 %v835, %v831
    %v1196 = vpack.c.b16 %v840, %v836
    %v1197 = vpack.c.b16 %v841, %v837
    %v1198 = vpack.c.b16 %v842, %v838
    %v1199 = vpack.c.b16 %v843, %v839
    %v1200 = vpack.c.b16 %v848, %v844
    %v1201 = vpack.c.b16 %v849, %v845
    %v1202 = vpack.c.b16 %v850, %v846
    %v1203 = vpack.c.b16 %v851, %v847
    %v1204 = vpack.c.b16 %v856, %v852
    %v1205 = vpack.c.b16 %v857, %v853
    %v1206 = vpack.c.b16 %v858, %v854
    %v1207 = vpack.c.b16 %v859, %v855
    %v1208 = vpack.c.b16 %v864, %v860
    %v1209 = vpack.c.b16 %v865, %v861
    %v1210 = vpack.c.b16 %v866, %v862
    %v1211 = vpack.c.b16 %v867, %v863
    %v1212 = vpack.c.b16 %v872, %v868
    %v1213 = vpack.c.b16 %v873, %v869
    %v1214 = vpack.c.b16 %v874, %v870
    %v1215 = vpack.c.b16 %v875, %v871
    %v1216 = vpack.c.b16 %v880, %v876
    %v1217 = vpack.c.b16 %v881, %v877
    %v1218 = vpack.c.b16 %v882, %v878
    %v1219 = vpack.c.b16 %v883, %v879
    %v1220 = vpack.c.b16 %v888, %v884
    %v1221 = vpack.c.b16 %v889, %v885
    %v1222 = vpack.c.b16 %v890, %v886
    %v1223 = vpack.c.b16 %v891, %v887
    %v1224 = vpack.c.b16 %v896, %v892
    %v1225 = vpack.c.b16 %v897, %v893
    %v1226 = vpack.c.b16 %v898, %v894
    %v1227 = vpack.c.b16 %v899, %v895
    %v1228 = vpack.c.b16 %v904, %v900
    %v1229 = vpack.c.b16 %v905, %v901
    %v1230 = vpack.c.b16 %v906, %v902
    %v1231 = vpack.c.b16 %v907, %v903
    %v1232 = vpack.c.b16 %v912, %v908
    %v1233 = vpack.c.b16 %v913, %v909
    %v1234 = vpack.c.b16 %v914, %v910
    %v1235 = vpack.c.b16 %v915, %v911
    %v1236 = vpack.c.b16 %v920, %v916
    %v1237 = vpack.c.b16 %v921, %v917
    %v1238 = vpack.c.b16 %v922, %v918
    %v1239 = vpack.c.b16 %v923, %v919
    %v1240 = vpack.c.b16 %v928, %v924
    %v1241 = vpack.c.b16 %v929, %v925
    %v1242 = vpack.c.b16 %v930, %v926
    %v1243 = vpack.c.b16 %v931, %v927
    %v1244 = vpack.c.b16 %v936, %v932
    %v1245 = vpack.c.b16 %v937, %v933
    %v1246 = vpack.c.b16 %v938, %v934
    %v1247 = vpack.c.b16 %v939, %v935
    %v1248 = vpack.c.b16 %v944, %v940
    %v1249 = vpack.c.b16 %v945, %v941
    %v1250 = vpack.c.b16 %v946, %v942
    %v1251 = vpack.c.b16 %v947, %v943
    %v1252 = vpack.c.b16 %v952, %v948
    %v1253 = vpack.c.b16 %v953, %v949
    %v1254 = vpack.c.b16 %v954, %v950
    %v1255 = vpack.c.b16 %v955, %v951
    %v1256 = vpack.c.b16 %v960, %v956
    %v1257 = vpack.c.b16 %v961, %v957
    %v1258 = vpack.c.b16 %v962, %v958
    %v1259 = vpack.c.b16 %v963, %v959
    %v1260 = vpack.c.b16 %v968, %v964
    %v1261 = vpack.c.b16 %v969, %v965
    %v1262 = vpack.c.b16 %v970, %v966
    %v1263 = vpack.c.b16 %v971, %v967
    %v1264 = vpack.c.b16 %v976, %v972
    %v1265 = vpack.c.b16 %v977, %v973
    %v1266 = vpack.c.b16 %v978, %v974
    %v1267 = vpack.c.b16 %v979, %v975
    %v1268 = vpack.c.b16 %v984, %v980
    %v1269 = vpack.c.b16 %v985, %v981
    %v1270 = vpack.c.b16 %v986, %v982
    %v1271 = vpack.c.b16 %v987, %v983
    %v1272 = vpack.c.b16 %v992, %v988
    %v1273 = vpack.c.b16 %v993, %v989
    %v1274 = vpack.c.b16 %v994, %v990
    %v1275 = vpack.c.b16 %v995, %v991
    %v1276 = vpack.c.b16 %v1000, %v996
    %v1277 = vpack.c.b16 %v1001, %v997
    %v1278 = vpack.c.b16 %v1002, %v998
    %v1279 = vpack.c.b16 %v1003, %v999
    %v1280 = vpack.c.b16 %v1008, %v1004
    %v1281 = vpack.c.b16 %v1009, %v1005
    %v1282 = vpack.c.b16 %v1010, %v1006
    %v1283 = vpack.c.b16 %v1011, %v1007
    %v1284 = vpack.c.b16 %v1016, %v1012
    %v1285 = vpack.c.b16 %v1017, %v1013
    %v1286 = vpack.c.b16 %v1018, %v1014
    %v1287 = vpack.c.b16 %v1019, %v1015
    %v1288 = vpack.c.b16 %v1024, %v1020
    %v1289 = vpack.c.b16 %v1025, %v1021
    %v1290 = vpack.c.b16 %v1026, %v1022
    %v1291 = vpack.c.b16 %v1027, %v1023
    %v1292 = vpack.c.b16 %v1032, %v1028
    %v1293 = vpack.c.b16 %v1033, %v1029
    %v1294 = vpack.c.b16 %v1034, %v1030
    %v1295 = vpack.c.b16 %v1035, %v1031
    %v1296 = vpack.c.b16 %v1040, %v1036
    %v1297 = vpack.c.b16 %v1041, %v1037
    %v1298 = vpack.c.b16 %v1042, %v1038
    %v1299 = vpack.c.b16 %v1043, %v1039
    %v1300 = vpack.c.b16 %v1048, %v1044
    %v1301 = vpack.c.b16 %v1049, %v1045
    %v1302 = vpack.c.b16 %v1050, %v1046
    %v1303 = vpack.c.b16 %v1051, %v1047
    %v1304 = vpack.c.b16 %v1056, %v1052
    %v1305 = vpack.c.b16 %v1057, %v1053
    %v1306 = vpack.c.b16 %v1058, %v1054
    %v1307 = vpack.c.b16 %v1059, %v1055
    %v1308 = vpack.c.b16 %v1064, %v1060
    %v1309 = vpack.c.b16 %v1065, %v1061
    %v1310 = vpack.c.b16 %v1066, %v1062
    %v1311 = vpack.c.b16 %v1067, %v1063
    %v1312 = vpack.c.b16 %v1072, %v1068
    %v1313 = vpack.c.b16 %v1073, %v1069
    %v1314 = vpack.c.b16 %v1074, %v1070
    %v1315 = vpack.c.b16 %v1075, %v1071
    %v1316 = vpack.c.b16 %v1080, %v1076
    %v1317 = vpack.c.b16 %v1081, %v1077
    %v1318 = vpack.c.b16 %v1082, %v1078
    %v1319 = vpack.c.b16 %v1083, %v1079
    %v1320 = vpack.c.b16 %v1088, %v1084
    %v1321 = vpack.c.b16 %v1089, %v1085
    %v1322 = vpack.c.b16 %v1090, %v1086
    %v1323 = vpack.c.b16 %v1091, %v1087
    %v1324 = vpack.c.b16 %v1096, %v1092
    %v1325 = vpack.c.b16 %v1097, %v1093
    %v1326 = vpack.c.b16 %v1098, %v1094
    %v1327 = vpack.c.b16 %v1099, %v1095
    %v1328 = vpack.c.b16 %v1104, %v1100
    %v1329 = vpack.c.b16 %v1105, %v1101
    %v1330 = vpack.c.b16 %v1106, %v1102
    %v1331 = vpack.c.b16 %v1107, %v1103
    %v1332 = vpack.c.b16 %v1112, %v1108
    %v1333 = vpack.c.b16 %v1113, %v1109
    %v1334 = vpack.c.b16 %v1114, %v1110
    %v1335 = vpack.c.b16 %v1115, %v1111
    %v1336 = vpack.c.b16 %v1120, %v1116
    %v1337 = vpack.c.b16 %v1121, %v1117
    %v1338 = vpack.c.b16 %v1122, %v1118
    %v1339 = vpack.c.b16 %v1123, %v1119
    %v1340 = vpack.c.b16 %v1128, %v1124
    %v1341 = vpack.c.b16 %v1129, %v1125
    %v1342 = vpack.c.b16 %v1130, %v1126
    %v1343 = vpack.c.b16 %v1131, %v1127
    %v1344 = vpack.c.b16 %v1136, %v1132
    %v1345 = vpack.c.b16 %v1137, %v1133
    %v1346 = vpack.c.b16 %v1138, %v1134
    %v1347 = vpack.c.b16 %v1139, %v1135
    %v1348 = vpack.c.b16 %v1144, %v1140
    %v1349 = vpack.c.b16 %v1145, %v1141
    %v1350 = vpack.c.b16 %v1146, %v1142
    %v1351 = vpack.c.b16 %v1147, %v1143
    %v1352 = vpack.c.b16 %v1152, %v1148
    %v1353 = vpack.c.b16 %v1153, %v1149
    %v1354 = vpack.c.b16 %v1154, %v1150
    %v1355 = vpack.c.b16 %v1155, %v1151
    %v1356 = vpack.c.b16 %v1160, %v1156
    %v1357 = vpack.c.b16 %v1161, %v1157
    %v1358 = vpack.c.b16 %v1162, %v1158
    %v1359 = vpack.c.b16 %v1163, %v1159
    %v1360 = vpack.c.b16 %v1168, %v1164
    %v1361 = vpack.c.b16 %v1169, %v1165
    %v1362 = vpack.c.b16 %v1170, %v1166
    %v1363 = vpack.c.b16 %v1171, %v1167
    %1556 = vmatprep.subr.bf16.mxu0 %v1173
    %1557 = vmatpush1.bf16.msra.mxu0 %v1172
    %1558 = vmatprep.subr.bf16.mxu0 %v1177
    %1559 = vmatpush1.bf16.msra.mxu0 %v1176
    %1560 = vmatprep.subr.bf16.mxu0 %v1181
    %1561 = vmatpush1.bf16.msra.mxu0 %v1180
    %1562 = vmatprep.subr.bf16.mxu0 %v1185
    %1563 = vmatpush1.bf16.msra.mxu0 %v1184
    %1564 = vmatprep.subr.bf16.mxu0 %v1189
    %1565 = vmatpush1.bf16.msra.mxu0 %v1188
    %1566 = vmatprep.subr.bf16.mxu0 %v1193
    %1567 = vmatpush1.bf16.msra.mxu0 %v1192
    %1568 = vmatprep.subr.bf16.mxu0 %v1197
    %1569 = vmatpush1.bf16.msra.mxu0 %v1196
    %1570 = vmatprep.subr.bf16.mxu0 %v1201
    %1571 = vmatpush1.bf16.msra.mxu0 %v1200
    %1572 = vmatprep.subr.bf16.mxu0 %v1205
    %1573 = vmatpush1.bf16.msra.mxu0 %v1204
    %1574 = vmatprep.subr.bf16.mxu0 %v1209
    %1575 = vmatpush1.bf16.msra.mxu0 %v1208
    %1576 = vmatprep.subr.bf16.mxu0 %v1213
    %1577 = vmatpush1.bf16.msra.mxu0 %v1212
    %1578 = vmatprep.subr.bf16.mxu0 %v1217
    %1579 = vmatpush1.bf16.msra.mxu0 %v1216
    %1580 = vmatprep.subr.bf16.mxu0 %v1221
    %1581 = vmatpush1.bf16.msra.mxu0 %v1220
    %1582 = vmatprep.subr.bf16.mxu0 %v1225
    %1583 = vmatpush1.bf16.msra.mxu0 %v1224
    %1584 = vmatprep.subr.bf16.mxu0 %v1229
    %1585 = vmatpush1.bf16.msra.mxu0 %v1228
    %1586 = vmatprep.subr.bf16.mxu0 %v1233
    %1587 = vmatpush1.bf16.msra.mxu0 %v1232
    %1588 = vmatprep.mubr.bf16.mxu0 %v501
    %1589 = vmatmul.mubr.bf16.gmra.mrb[0].mxu0 %v500
    %v1590 = vpop.f32.mrb[0].mxu0
    %v1591 = vadd.f32 %v339, %v1590
    %v1592 = vpop.f32.mrb[0].mxu0
    %v1593 = vadd.f32 %v343, %v1592
    %v1594 = vpop.f32.mrb[0].mxu0
    %v1595 = vadd.f32 %v339, %v1594
    %v1596 = vpop.f32.mrb[0].mxu0
    %v1597 = vadd.f32 %v343, %v1596
    %1598 = vmatprep.mubr.bf16.mxu0 %v507
    %1599 = vmatmul.mubr.bf16.gmra.mrb[0].mxu0 %v506
    %v1600 = vpop.f32.mrb[0].mxu0
    %v1601 = vadd.f32 %v339, %v1600
    %v1602 = vpop.f32.mrb[0].mxu0
    %v1603 = vadd.f32 %v343, %v1602
    %v1604 = vpop.f32.mrb[0].mxu0
    %v1605 = vadd.f32 %v339, %v1604
    %v1606 = vpop.f32.mrb[0].mxu0
    %v1607 = vadd.f32 %v343, %v1606
    %1608 = vmatprep.mubr.bf16.mxu0 %v513
    %1609 = vmatmul.mubr.bf16.gmra.mrb[0].mxu0 %v512
    %v1610 = vpop.f32.mrb[0].mxu0
    %v1611 = vadd.f32 %v339, %v1610
    %v1612 = vpop.f32.mrb[0].mxu0
    %v1613 = vadd.f32 %v343, %v1612
    %v1614 = vpop.f32.mrb[0].mxu0
    %v1615 = vadd.f32 %v339, %v1614
    %v1616 = vpop.f32.mrb[0].mxu0
    %v1617 = vadd.f32 %v343, %v1616
    %1618 = vmatprep.mubr.bf16.mxu0 %v519
    %1619 = vmatmul.mubr.bf16.gmra.mrb[0].mxu0 %v518
    %v1620 = vpop.f32.mrb[0].mxu0
    %v1621 = vadd.f32 %v339, %v1620
    %v1622 = vpop.f32.mrb[0].mxu0
    %v1623 = vadd.f32 %v343, %v1622
    %v1624 = vpop.f32.mrb[0].mxu0
    %v1625 = vadd.f32 %v339, %v1624
    %v1626 = vpop.f32.mrb[0].mxu0
    %v1627 = vadd.f32 %v343, %v1626
    %1628 = vmatprep.mubr.bf16.mxu0 %v525
    %1629 = vmatmul.mubr.bf16.gmra.mrb[0].mxu0 %v524
    %v1630 = vpop.f32.mrb[0].mxu0
    %v1631 = vadd.f32 %v339, %v1630
    %v1632 = vpop.f32.mrb[0].mxu0
    %v1633 = vadd.f32 %v343, %v1632
    %v1634 = vpop.f32.mrb[0].mxu0
    %v1635 = vadd.f32 %v339, %v1634
    %v1636 = vpop.f32.mrb[0].mxu0
    %v1637 = vadd.f32 %v343, %v1636
    %1638 = vmatprep.mubr.bf16.mxu0 %v531
    %1639 = vmatmul.mubr.bf16.gmra.mrb[0].mxu0 %v530
    %v1640 = vpop.f32.mrb[0].mxu0
    %v1641 = vadd.f32 %v339, %v1640
    %v1642 = vpop.f32.mrb[0].mxu0
    %v1643 = vadd.f32 %v343, %v1642
    %v1644 = vpop.f32.mrb[0].mxu0
    %v1645 = vadd.f32 %v339, %v1644
    %v1646 = vpop.f32.mrb[0].mxu0
    %v1647 = vadd.f32 %v343, %v1646
    %1648 = vmatprep.mubr.bf16.mxu0 %v537
    %1649 = vmatmul.mubr.bf16.gmra.mrb[0].mxu0 %v536
    %v1650 = vpop.f32.mrb[0].mxu0
    %v1651 = vadd.f32 %v339, %v1650
    %v1652 = vpop.f32.mrb[0].mxu0
    %v1653 = vadd.f32 %v343, %v1652
    %v1654 = vpop.f32.mrb[0].mxu0
    %v1655 = vadd.f32 %v339, %v1654
    %v1656 = vpop.f32.mrb[0].mxu0
    %v1657 = vadd.f32 %v343, %v1656
    %1658 = vmatprep.mubr.bf16.mxu0 %v543
    %1659 = vmatmul.mubr.bf16.gmra.mrb[0].mxu0 %v542
    %v1660 = vpop.f32.mrb[0].mxu0
    %v1661 = vadd.f32 %v339, %v1660
    %v1662 = vpop.f32.mrb[0].mxu0
    %v1663 = vadd.f32 %v343, %v1662
    %v1664 = vpop.f32.mrb[0].mxu0
    %v1665 = vadd.f32 %v339, %v1664
    %v1666 = vpop.f32.mrb[0].mxu0
    %v1667 = vadd.f32 %v343, %v1666
    %1668 = vdwg.mxu0
    %1669 = vmatprep.subr.bf16.mxu0 %v1237
    %1670 = vmatpush1.bf16.msra.mxu0 %v1236
    %1671 = vmatprep.subr.bf16.mxu0 %v1241
    %1672 = vmatpush1.bf16.msra.mxu0 %v1240
    %1673 = vmatprep.subr.bf16.mxu0 %v1245
    %1674 = vmatpush1.bf16.msra.mxu0 %v1244
    %1675 = vmatprep.subr.bf16.mxu0 %v1249
    %1676 = vmatpush1.bf16.msra.mxu0 %v1248
    %1677 = vmatprep.subr.bf16.mxu0 %v1253
    %1678 = vmatpush1.bf16.msra.mxu0 %v1252
    %1679 = vmatprep.subr.bf16.mxu0 %v1257
    %1680 = vmatpush1.bf16.msra.mxu0 %v1256
    %1681 = vmatprep.subr.bf16.mxu0 %v1261
    %1682 = vmatpush1.bf16.msra.mxu0 %v1260
    %1683 = vmatprep.subr.bf16.mxu0 %v1265
    %1684 = vmatpush1.bf16.msra.mxu0 %v1264
    %1685 = vmatprep.subr.bf16.mxu0 %v1269
    %1686 = vmatpush1.bf16.msra.mxu0 %v1268
    %1687 = vmatprep.subr.bf16.mxu0 %v1273
    %1688 = vmatpush1.bf16.msra.mxu0 %v1272
    %1689 = vmatprep.subr.bf16.mxu0 %v1277
    %1690 = vmatpush1.bf16.msra.mxu0 %v1276
    %1691 = vmatprep.subr.bf16.mxu0 %v1281
    %1692 = vmatpush1.bf16.msra.mxu0 %v1280
    %1693 = vmatprep.subr.bf16.mxu0 %v1285
    %1694 = vmatpush1.bf16.msra.mxu0 %v1284
    %1695 = vmatprep.subr.bf16.mxu0 %v1289
    %1696 = vmatpush1.bf16.msra.mxu0 %v1288
    %1697 = vmatprep.subr.bf16.mxu0 %v1293
    %1698 = vmatpush1.bf16.msra.mxu0 %v1292
    %1699 = vmatprep.subr.bf16.mxu0 %v1297
    %1700 = vmatpush1.bf16.msra.mxu0 %v1296
    %1701 = vmatprep.mubr.bf16.mxu0 %v503
    %1702 = vmatmul.mubr.bf16.gmra.mrb[0].mxu0 %v502
    %v1703 = vpop.f32.mrb[0].mxu0
    %v1704 = vadd.f32 %v1591, %v1703
    %v1705 = vpop.f32.mrb[0].mxu0
    %v1706 = vadd.f32 %v1593, %v1705
    %v1707 = vpop.f32.mrb[0].mxu0
    %v1708 = vadd.f32 %v1595, %v1707
    %v1709 = vpop.f32.mrb[0].mxu0
    %v1710 = vadd.f32 %v1597, %v1709
    %1711 = vmatprep.mubr.bf16.mxu0 %v509
    %1712 = vmatmul.mubr.bf16.gmra.mrb[0].mxu0 %v508
    %v1713 = vpop.f32.mrb[0].mxu0
    %v1714 = vadd.f32 %v1601, %v1713
    %v1715 = vpop.f32.mrb[0].mxu0
    %v1716 = vadd.f32 %v1603, %v1715
    %v1717 = vpop.f32.mrb[0].mxu0
    %v1718 = vadd.f32 %v1605, %v1717
    %v1719 = vpop.f32.mrb[0].mxu0
    %v1720 = vadd.f32 %v1607, %v1719
    %1721 = vmatprep.mubr.bf16.mxu0 %v515
    %1722 = vmatmul.mubr.bf16.gmra.mrb[0].mxu0 %v514
    %v1723 = vpop.f32.mrb[0].mxu0
    %v1724 = vadd.f32 %v1611, %v1723
    %v1725 = vpop.f32.mrb[0].mxu0
    %v1726 = vadd.f32 %v1613, %v1725
    %v1727 = vpop.f32.mrb[0].mxu0
    %v1728 = vadd.f32 %v1615, %v1727
    %v1729 = vpop.f32.mrb[0].mxu0
    %v1730 = vadd.f32 %v1617, %v1729
    %1731 = vmatprep.mubr.bf16.mxu0 %v521
    %1732 = vmatmul.mubr.bf16.gmra.mrb[0].mxu0 %v520
    %v1733 = vpop.f32.mrb[0].mxu0
    %v1734 = vadd.f32 %v1621, %v1733
    %v1735 = vpop.f32.mrb[0].mxu0
    %v1736 = vadd.f32 %v1623, %v1735
    %v1737 = vpop.f32.mrb[0].mxu0
    %v1738 = vadd.f32 %v1625, %v1737
    %v1739 = vpop.f32.mrb[0].mxu0
    %v1740 = vadd.f32 %v1627, %v1739
    %1741 = vmatprep.mubr.bf16.mxu0 %v527
    %1742 = vmatmul.mubr.bf16.gmra.mrb[0].mxu0 %v526
    %v1743 = vpop.f32.mrb[0].mxu0
    %v1744 = vadd.f32 %v1631, %v1743
    %v1745 = vpop.f32.mrb[0].mxu0
    %v1746 = vadd.f32 %v1633, %v1745
    %v1747 = vpop.f32.mrb[0].mxu0
    %v1748 = vadd.f32 %v1635, %v1747
    %v1749 = vpop.f32.mrb[0].mxu0
    %v1750 = vadd.f32 %v1637, %v1749
    %1751 = vmatprep.mubr.bf16.mxu0 %v533
    %1752 = vmatmul.mubr.bf16.gmra.mrb[0].mxu0 %v532
    %v1753 = vpop.f32.mrb[0].mxu0
    %v1754 = vadd.f32 %v1641, %v1753
    %v1755 = vpop.f32.mrb[0].mxu0
    %v1756 = vadd.f32 %v1643, %v1755
    %v1757 = vpop.f32.mrb[0].mxu0
    %v1758 = vadd.f32 %v1645, %v1757
    %v1759 = vpop.f32.mrb[0].mxu0
    %v1760 = vadd.f32 %v1647, %v1759
    %1761 = vmatprep.mubr.bf16.mxu0 %v539
    %1762 = vmatmul.mubr.bf16.gmra.mrb[0].mxu0 %v538
    %v1763 = vpop.f32.mrb[0].mxu0
    %v1764 = vadd.f32 %v1651, %v1763
    %v1765 = vpop.f32.mrb[0].mxu0
    %v1766 = vadd.f32 %v1653, %v1765
    %v1767 = vpop.f32.mrb[0].mxu0
    %v1768 = vadd.f32 %v1655, %v1767
    %v1769 = vpop.f32.mrb[0].mxu0
    %v1770 = vadd.f32 %v1657, %v1769
    %1771 = vmatprep.mubr.bf16.mxu0 %v545
    %1772 = vmatmul.mubr.bf16.gmra.mrb[0].mxu0 %v544
    %v1773 = vpop.f32.mrb[0].mxu0
    %v1774 = vadd.f32 %v1661, %v1773
    %v1775 = vpop.f32.mrb[0].mxu0
    %v1776 = vadd.f32 %v1663, %v1775
    %v1777 = vpop.f32.mrb[0].mxu0
    %v1778 = vadd.f32 %v1665, %v1777
    %v1779 = vpop.f32.mrb[0].mxu0
    %v1780 = vadd.f32 %v1667, %v1779
    %1781 = vdwg.mxu0
    %1782 = vmatprep.subr.bf16.mxu0 %v1301
    %1783 = vmatpush1.bf16.msra.mxu0 %v1300
    %1784 = vmatprep.subr.bf16.mxu0 %v1305
    %1785 = vmatpush1.bf16.msra.mxu0 %v1304
    %1786 = vmatprep.subr.bf16.mxu0 %v1309
    %1787 = vmatpush1.bf16.msra.mxu0 %v1308
    %1788 = vmatprep.subr.bf16.mxu0 %v1313
    %1789 = vmatpush1.bf16.msra.mxu0 %v1312
    %1790 = vmatprep.subr.bf16.mxu0 %v1317
    %1791 = vmatpush1.bf16.msra.mxu0 %v1316
    %1792 = vmatprep.subr.bf16.mxu0 %v1321
    %1793 = vmatpush1.bf16.msra.mxu0 %v1320
    %1794 = vmatprep.subr.bf16.mxu0 %v1325
    %1795 = vmatpush1.bf16.msra.mxu0 %v1324
    %1796 = vmatprep.subr.bf16.mxu0 %v1329
    %1797 = vmatpush1.bf16.msra.mxu0 %v1328
    %1798 = vmatprep.subr.bf16.mxu0 %v1333
    %1799 = vmatpush1.bf16.msra.mxu0 %v1332
    %1800 = vmatprep.subr.bf16.mxu0 %v1337
    %1801 = vmatpush1.bf16.msra.mxu0 %v1336
    %1802 = vmatprep.subr.bf16.mxu0 %v1341
    %1803 = vmatpush1.bf16.msra.mxu0 %v1340
    %1804 = vmatprep.subr.bf16.mxu0 %v1345
    %1805 = vmatpush1.bf16.msra.mxu0 %v1344
    %1806 = vmatprep.subr.bf16.mxu0 %v1349
    %1807 = vmatpush1.bf16.msra.mxu0 %v1348
    %1808 = vmatprep.subr.bf16.mxu0 %v1353
    %1809 = vmatpush1.bf16.msra.mxu0 %v1352
    %1810 = vmatprep.subr.bf16.mxu0 %v1357
    %1811 = vmatpush1.bf16.msra.mxu0 %v1356
    %1812 = vmatprep.subr.bf16.mxu0 %v1361
    %1813 = vmatpush1.bf16.msra.mxu0 %v1360
    %1814 = vmatprep.mubr.bf16.mxu0 %v505
    %1815 = vmatmul.mubr.bf16.gmra.mrb[0].mxu0 %v504
    %v1816 = vpop.f32.mrb[0].mxu0
    %v1817 = vadd.f32 %v1704, %v1816
    %v1818 = vpop.f32.mrb[0].mxu0
    %v1819 = vadd.f32 %v1706, %v1818
    %v1820 = vpop.f32.mrb[0].mxu0
    %v1821 = vadd.f32 %v1708, %v1820
    %v1822 = vpop.f32.mrb[0].mxu0
    %v1823 = vadd.f32 %v1710, %v1822
    %1824 = vmatprep.mubr.bf16.mxu0 %v511
    %1825 = vmatmul.mubr.bf16.gmra.mrb[0].mxu0 %v510
    %v1826 = vpop.f32.mrb[0].mxu0
    %v1827 = vadd.f32 %v1714, %v1826
    %v1828 = vpop.f32.mrb[0].mxu0
    %v1829 = vadd.f32 %v1716, %v1828
    %v1830 = vpop.f32.mrb[0].mxu0
    %v1831 = vadd.f32 %v1718, %v1830
    %v1832 = vpop.f32.mrb[0].mxu0
    %v1833 = vadd.f32 %v1720, %v1832
    %1834 = vmatprep.mubr.bf16.mxu0 %v517
    %1835 = vmatmul.mubr.bf16.gmra.mrb[0].mxu0 %v516
    %v1836 = vpop.f32.mrb[0].mxu0
    %v1837 = vadd.f32 %v1724, %v1836
    %v1838 = vpop.f32.mrb[0].mxu0
    %v1839 = vadd.f32 %v1726, %v1838
    %v1840 = vpop.f32.mrb[0].mxu0
    %v1841 = vadd.f32 %v1728, %v1840
    %v1842 = vpop.f32.mrb[0].mxu0
    %v1843 = vadd.f32 %v1730, %v1842
    %1844 = vmatprep.mubr.bf16.mxu0 %v523
    %1845 = vmatmul.mubr.bf16.gmra.mrb[0].mxu0 %v522
    %v1846 = vpop.f32.mrb[0].mxu0
    %v1847 = vadd.f32 %v1734, %v1846
    %v1848 = vpop.f32.mrb[0].mxu0
    %v1849 = vadd.f32 %v1736, %v1848
    %v1850 = vpop.f32.mrb[0].mxu0
    %v1851 = vadd.f32 %v1738, %v1850
    %v1852 = vpop.f32.mrb[0].mxu0
    %v1853 = vadd.f32 %v1740, %v1852
    %1854 = vmatprep.mubr.bf16.mxu0 %v529
    %1855 = vmatmul.mubr.bf16.gmra.mrb[0].mxu0 %v528
    %v1856 = vpop.f32.mrb[0].mxu0
    %v1857 = vadd.f32 %v1744, %v1856
    %v1858 = vpop.f32.mrb[0].mxu0
    %v1859 = vadd.f32 %v1746, %v1858
    %v1860 = vpop.f32.mrb[0].mxu0
    %v1861 = vadd.f32 %v1748, %v1860
    %v1862 = vpop.f32.mrb[0].mxu0
    %v1863 = vadd.f32 %v1750, %v1862
    %1864 = vmatprep.mubr.bf16.mxu0 %v535
    %1865 = vmatmul.mubr.bf16.gmra.mrb[0].mxu0 %v534
    %v1866 = vpop.f32.mrb[0].mxu0
    %v1867 = vadd.f32 %v1754, %v1866
    %v1868 = vpop.f32.mrb[0].mxu0
    %v1869 = vadd.f32 %v1756, %v1868
    %v1870 = vpop.f32.mrb[0].mxu0
    %v1871 = vadd.f32 %v1758, %v1870
    %v1872 = vpop.f32.mrb[0].mxu0
    %v1873 = vadd.f32 %v1760, %v1872
    %1874 = vmatprep.mubr.bf16.mxu0 %v541
    %1875 = vmatmul.mubr.bf16.gmra.mrb[0].mxu0 %v540
    %v1876 = vpop.f32.mrb[0].mxu0
    %v1877 = vadd.f32 %v1764, %v1876
    %v1878 = vpop.f32.mrb[0].mxu0
    %v1879 = vadd.f32 %v1766, %v1878
    %v1880 = vpop.f32.mrb[0].mxu0
    %v1881 = vadd.f32 %v1768, %v1880
    %v1882 = vpop.f32.mrb[0].mxu0
    %v1883 = vadd.f32 %v1770, %v1882
    %1884 = vmatprep.mubr.bf16.mxu0 %v547
    %1885 = vmatmul.mubr.bf16.gmra.mrb[0].mxu0 %v546
    %v1886 = vpop.f32.mrb[0].mxu0
    %v1887 = vadd.f32 %v1774, %v1886
    %v1888 = vpop.f32.mrb[0].mxu0
    %v1889 = vadd.f32 %v1776, %v1888
    %v1890 = vpop.f32.mrb[0].mxu0
    %v1891 = vadd.f32 %v1778, %v1890
    %v1892 = vpop.f32.mrb[0].mxu0
    %v1893 = vadd.f32 %v1780, %v1892
    %1894 = vdwg.mxu0
    %1895 = vmatprep.subr.bf16.mxu0 %v1175
    %1896 = vmatpush1.bf16.msra.mxu0 %v1174
    %1897 = vmatprep.subr.bf16.mxu0 %v1179
    %1898 = vmatpush1.bf16.msra.mxu0 %v1178
    %1899 = vmatprep.subr.bf16.mxu0 %v1183
    %1900 = vmatpush1.bf16.msra.mxu0 %v1182
    %1901 = vmatprep.subr.bf16.mxu0 %v1187
    %1902 = vmatpush1.bf16.msra.mxu0 %v1186
    %1903 = vmatprep.subr.bf16.mxu0 %v1191
    %1904 = vmatpush1.bf16.msra.mxu0 %v1190
    %1905 = vmatprep.subr.bf16.mxu0 %v1195
    %1906 = vmatpush1.bf16.msra.mxu0 %v1194
    %1907 = vmatprep.subr.bf16.mxu0 %v1199
    %1908 = vmatpush1.bf16.msra.mxu0 %v1198
    %1909 = vmatprep.subr.bf16.mxu0 %v1203
    %1910 = vmatpush1.bf16.msra.mxu0 %v1202
    %1911 = vmatprep.subr.bf16.mxu0 %v1207
    %1912 = vmatpush1.bf16.msra.mxu0 %v1206
    %1913 = vmatprep.subr.bf16.mxu0 %v1211
    %1914 = vmatpush1.bf16.msra.mxu0 %v1210
    %1915 = vmatprep.subr.bf16.mxu0 %v1215
    %1916 = vmatpush1.bf16.msra.mxu0 %v1214
    %1917 = vmatprep.subr.bf16.mxu0 %v1219
    %1918 = vmatpush1.bf16.msra.mxu0 %v1218
    %1919 = vmatprep.subr.bf16.mxu0 %v1223
    %1920 = vmatpush1.bf16.msra.mxu0 %v1222
    %1921 = vmatprep.subr.bf16.mxu0 %v1227
    %1922 = vmatpush1.bf16.msra.mxu0 %v1226
    %1923 = vmatprep.subr.bf16.mxu0 %v1231
    %1924 = vmatpush1.bf16.msra.mxu0 %v1230
    %1925 = vmatprep.subr.bf16.mxu0 %v1235
    %1926 = vmatpush1.bf16.msra.mxu0 %v1234
    %1927 = vmatprep.mubr.bf16.mxu0 %v501
    %1928 = vmatmul.mubr.bf16.gmra.mrb[0].mxu0 %v500
    %v1929 = vpop.f32.mrb[0].mxu0
    %v1930 = vadd.f32 %v347, %v1929
    %v1931 = vpop.f32.mrb[0].mxu0
    %v1932 = vadd.f32 %v351, %v1931
    %v1933 = vpop.f32.mrb[0].mxu0
    %v1934 = vadd.f32 %v347, %v1933
    %v1935 = vpop.f32.mrb[0].mxu0
    %v1936 = vadd.f32 %v351, %v1935
    %1937 = vmatprep.mubr.bf16.mxu0 %v507
    %1938 = vmatmul.mubr.bf16.gmra.mrb[0].mxu0 %v506
    %v1939 = vpop.f32.mrb[0].mxu0
    %v1940 = vadd.f32 %v347, %v1939
    %v1941 = vpop.f32.mrb[0].mxu0
    %v1942 = vadd.f32 %v351, %v1941
    %v1943 = vpop.f32.mrb[0].mxu0
    %v1944 = vadd.f32 %v347, %v1943
    %v1945 = vpop.f32.mrb[0].mxu0
    %v1946 = vadd.f32 %v351, %v1945
    %1947 = vmatprep.mubr.bf16.mxu0 %v513
    %1948 = vmatmul.mubr.bf16.gmra.mrb[0].mxu0 %v512
    %v1949 = vpop.f32.mrb[0].mxu0
    %v1950 = vadd.f32 %v347, %v1949
    %v1951 = vpop.f32.mrb[0].mxu0
    %v1952 = vadd.f32 %v351, %v1951
    %v1953 = vpop.f32.mrb[0].mxu0
    %v1954 = vadd.f32 %v347, %v1953
    %v1955 = vpop.f32.mrb[0].mxu0
    %v1956 = vadd.f32 %v351, %v1955
    %1957 = vmatprep.mubr.bf16.mxu0 %v519
    %1958 = vmatmul.mubr.bf16.gmra.mrb[0].mxu0 %v518
    %v1959 = vpop.f32.mrb[0].mxu0
    %v1960 = vadd.f32 %v347, %v1959
    %v1961 = vpop.f32.mrb[0].mxu0
    %v1962 = vadd.f32 %v351, %v1961
    %v1963 = vpop.f32.mrb[0].mxu0
    %v1964 = vadd.f32 %v347, %v1963
    %v1965 = vpop.f32.mrb[0].mxu0
    %v1966 = vadd.f32 %v351, %v1965
    %1967 = vmatprep.mubr.bf16.mxu0 %v525
    %1968 = vmatmul.mubr.bf16.gmra.mrb[0].mxu0 %v524
    %v1969 = vpop.f32.mrb[0].mxu0
    %v1970 = vadd.f32 %v347, %v1969
    %v1971 = vpop.f32.mrb[0].mxu0
    %v1972 = vadd.f32 %v351, %v1971
    %v1973 = vpop.f32.mrb[0].mxu0
    %v1974 = vadd.f32 %v347, %v1973
    %v1975 = vpop.f32.mrb[0].mxu0
    %v1976 = vadd.f32 %v351, %v1975
    %1977 = vmatprep.mubr.bf16.mxu0 %v531
    %1978 = vmatmul.mubr.bf16.gmra.mrb[0].mxu0 %v530
    %v1979 = vpop.f32.mrb[0].mxu0
    %v1980 = vadd.f32 %v347, %v1979
    %v1981 = vpop.f32.mrb[0].mxu0
    %v1982 = vadd.f32 %v351, %v1981
    %v1983 = vpop.f32.mrb[0].mxu0
    %v1984 = vadd.f32 %v347, %v1983
    %v1985 = vpop.f32.mrb[0].mxu0
    %v1986 = vadd.f32 %v351, %v1985
    %1987 = vmatprep.mubr.bf16.mxu0 %v537
    %1988 = vmatmul.mubr.bf16.gmra.mrb[0].mxu0 %v536
    %v1989 = vpop.f32.mrb[0].mxu0
    %v1990 = vadd.f32 %v347, %v1989
    %v1991 = vpop.f32.mrb[0].mxu0
    %v1992 = vadd.f32 %v351, %v1991
    %v1993 = vpop.f32.mrb[0].mxu0
    %v1994 = vadd.f32 %v347, %v1993
    %v1995 = vpop.f32.mrb[0].mxu0
    %v1996 = vadd.f32 %v351, %v1995
    %1997 = vmatprep.mubr.bf16.mxu0 %v543
    %1998 = vmatmul.mubr.bf16.gmra.mrb[0].mxu0 %v542
    %v1999 = vpop.f32.mrb[0].mxu0
    %v2000 = vadd.f32 %v347, %v1999
    %v2001 = vpop.f32.mrb[0].mxu0
    %v2002 = vadd.f32 %v351, %v2001
    %v2003 = vpop.f32.mrb[0].mxu0
    %v2004 = vadd.f32 %v347, %v2003
    %v2005 = vpop.f32.mrb[0].mxu0
    %v2006 = vadd.f32 %v351, %v2005
    %2007 = vdwg.mxu0
    %2008 = vmatprep.subr.bf16.mxu0 %v1239
    %2009 = vmatpush1.bf16.msra.mxu0 %v1238
    %2010 = vmatprep.subr.bf16.mxu0 %v1243
    %2011 = vmatpush1.bf16.msra.mxu0 %v1242
    %2012 = vmatprep.subr.bf16.mxu0 %v1247
    %2013 = vmatpush1.bf16.msra.mxu0 %v1246
    %2014 = vmatprep.subr.bf16.mxu0 %v1251
    %2015 = vmatpush1.bf16.msra.mxu0 %v1250
    %2016 = vmatprep.subr.bf16.mxu0 %v1255
    %2017 = vmatpush1.bf16.msra.mxu0 %v1254
    %2018 = vmatprep.subr.bf16.mxu0 %v1259
    %2019 = vmatpush1.bf16.msra.mxu0 %v1258
    %2020 = vmatprep.subr.bf16.mxu0 %v1263
    %2021 = vmatpush1.bf16.msra.mxu0 %v1262
    %2022 = vmatprep.subr.bf16.mxu0 %v1267
    %2023 = vmatpush1.bf16.msra.mxu0 %v1266
    %2024 = vmatprep.subr.bf16.mxu0 %v1271
    %2025 = vmatpush1.bf16.msra.mxu0 %v1270
    %2026 = vmatprep.subr.bf16.mxu0 %v1275
    %2027 = vmatpush1.bf16.msra.mxu0 %v1274
    %2028 = vmatprep.subr.bf16.mxu0 %v1279
    %2029 = vmatpush1.bf16.msra.mxu0 %v1278
    %2030 = vmatprep.subr.bf16.mxu0 %v1283
    %2031 = vmatpush1.bf16.msra.mxu0 %v1282
    %2032 = vmatprep.subr.bf16.mxu0 %v1287
    %2033 = vmatpush1.bf16.msra.mxu0 %v1286
    %2034 = vmatprep.subr.bf16.mxu0 %v1291
    %2035 = vmatpush1.bf16.msra.mxu0 %v1290
    %2036 = vmatprep.subr.bf16.mxu0 %v1295
    %2037 = vmatpush1.bf16.msra.mxu0 %v1294
    %2038 = vmatprep.subr.bf16.mxu0 %v1299
    %2039 = vmatpush1.bf16.msra.mxu0 %v1298
    %2040 = vmatprep.mubr.bf16.mxu0 %v503
    %2041 = vmatmul.mubr.bf16.gmra.mrb[0].mxu0 %v502
    %v2042 = vpop.f32.mrb[0].mxu0
    %v2043 = vadd.f32 %v1930, %v2042
    %v2044 = vpop.f32.mrb[0].mxu0
    %v2045 = vadd.f32 %v1932, %v2044
    %v2046 = vpop.f32.mrb[0].mxu0
    %v2047 = vadd.f32 %v1934, %v2046
    %v2048 = vpop.f32.mrb[0].mxu0
    %v2049 = vadd.f32 %v1936, %v2048
    %2050 = vmatprep.mubr.bf16.mxu0 %v509
    %2051 = vmatmul.mubr.bf16.gmra.mrb[0].mxu0 %v508
    %v2052 = vpop.f32.mrb[0].mxu0
    %v2053 = vadd.f32 %v1940, %v2052
    %v2054 = vpop.f32.mrb[0].mxu0
    %v2055 = vadd.f32 %v1942, %v2054
    %v2056 = vpop.f32.mrb[0].mxu0
    %v2057 = vadd.f32 %v1944, %v2056
    %v2058 = vpop.f32.mrb[0].mxu0
    %v2059 = vadd.f32 %v1946, %v2058
    %2060 = vmatprep.mubr.bf16.mxu0 %v515
    %2061 = vmatmul.mubr.bf16.gmra.mrb[0].mxu0 %v514
    %v2062 = vpop.f32.mrb[0].mxu0
    %v2063 = vadd.f32 %v1950, %v2062
    %v2064 = vpop.f32.mrb[0].mxu0
    %v2065 = vadd.f32 %v1952, %v2064
    %v2066 = vpop.f32.mrb[0].mxu0
    %v2067 = vadd.f32 %v1954, %v2066
    %v2068 = vpop.f32.mrb[0].mxu0
    %v2069 = vadd.f32 %v1956, %v2068
    %2070 = vmatprep.mubr.bf16.mxu0 %v521
    %2071 = vmatmul.mubr.bf16.gmra.mrb[0].mxu0 %v520
    %v2072 = vpop.f32.mrb[0].mxu0
    %v2073 = vadd.f32 %v1960, %v2072
    %v2074 = vpop.f32.mrb[0].mxu0
    %v2075 = vadd.f32 %v1962, %v2074
    %v2076 = vpop.f32.mrb[0].mxu0
    %v2077 = vadd.f32 %v1964, %v2076
    %v2078 = vpop.f32.mrb[0].mxu0
    %v2079 = vadd.f32 %v1966, %v2078
    %2080 = vmatprep.mubr.bf16.mxu0 %v527
    %2081 = vmatmul.mubr.bf16.gmra.mrb[0].mxu0 %v526
    %v2082 = vpop.f32.mrb[0].mxu0
    %v2083 = vadd.f32 %v1970, %v2082
    %v2084 = vpop.f32.mrb[0].mxu0
    %v2085 = vadd.f32 %v1972, %v2084
    %v2086 = vpop.f32.mrb[0].mxu0
    %v2087 = vadd.f32 %v1974, %v2086
    %v2088 = vpop.f32.mrb[0].mxu0
    %v2089 = vadd.f32 %v1976, %v2088
    %2090 = vmatprep.mubr.bf16.mxu0 %v533
    %2091 = vmatmul.mubr.bf16.gmra.mrb[0].mxu0 %v532
    %v2092 = vpop.f32.mrb[0].mxu0
    %v2093 = vadd.f32 %v1980, %v2092
    %v2094 = vpop.f32.mrb[0].mxu0
    %v2095 = vadd.f32 %v1982, %v2094
    %v2096 = vpop.f32.mrb[0].mxu0
    %v2097 = vadd.f32 %v1984, %v2096
    %v2098 = vpop.f32.mrb[0].mxu0
    %v2099 = vadd.f32 %v1986, %v2098
    %2100 = vmatprep.mubr.bf16.mxu0 %v539
    %2101 = vmatmul.mubr.bf16.gmra.mrb[0].mxu0 %v538
    %v2102 = vpop.f32.mrb[0].mxu0
    %v2103 = vadd.f32 %v1990, %v2102
    %v2104 = vpop.f32.mrb[0].mxu0
    %v2105 = vadd.f32 %v1992, %v2104
    %v2106 = vpop.f32.mrb[0].mxu0
    %v2107 = vadd.f32 %v1994, %v2106
    %v2108 = vpop.f32.mrb[0].mxu0
    %v2109 = vadd.f32 %v1996, %v2108
    %2110 = vmatprep.mubr.bf16.mxu0 %v545
    %2111 = vmatmul.mubr.bf16.gmra.mrb[0].mxu0 %v544
    %v2112 = vpop.f32.mrb[0].mxu0
    %v2113 = vadd.f32 %v2000, %v2112
    %v2114 = vpop.f32.mrb[0].mxu0
    %v2115 = vadd.f32 %v2002, %v2114
    %v2116 = vpop.f32.mrb[0].mxu0
    %v2117 = vadd.f32 %v2004, %v2116
    %v2118 = vpop.f32.mrb[0].mxu0
    %v2119 = vadd.f32 %v2006, %v2118
    %2120 = vdwg.mxu0
    %2121 = vmatprep.subr.bf16.mxu0 %v1303
    %2122 = vmatpush1.bf16.msra.mxu0 %v1302
    %2123 = vmatprep.subr.bf16.mxu0 %v1307
    %2124 = vmatpush1.bf16.msra.mxu0 %v1306
    %2125 = vmatprep.subr.bf16.mxu0 %v1311
    %2126 = vmatpush1.bf16.msra.mxu0 %v1310
    %2127 = vmatprep.subr.bf16.mxu0 %v1315
    %2128 = vmatpush1.bf16.msra.mxu0 %v1314
    %2129 = vmatprep.subr.bf16.mxu0 %v1319
    %2130 = vmatpush1.bf16.msra.mxu0 %v1318
    %2131 = vmatprep.subr.bf16.mxu0 %v1323
    %2132 = vmatpush1.bf16.msra.mxu0 %v1322
    %2133 = vmatprep.subr.bf16.mxu0 %v1327
    %2134 = vmatpush1.bf16.msra.mxu0 %v1326
    %2135 = vmatprep.subr.bf16.mxu0 %v1331
    %2136 = vmatpush1.bf16.msra.mxu0 %v1330
    %2137 = vmatprep.subr.bf16.mxu0 %v1335
    %2138 = vmatpush1.bf16.msra.mxu0 %v1334
    %2139 = vmatprep.subr.bf16.mxu0 %v1339
    %2140 = vmatpush1.bf16.msra.mxu0 %v1338
    %2141 = vmatprep.subr.bf16.mxu0 %v1343
    %2142 = vmatpush1.bf16.msra.mxu0 %v1342
    %2143 = vmatprep.subr.bf16.mxu0 %v1347
    %2144 = vmatpush1.bf16.msra.mxu0 %v1346
    %2145 = vmatprep.subr.bf16.mxu0 %v1351
    %2146 = vmatpush1.bf16.msra.mxu0 %v1350
    %2147 = vmatprep.subr.bf16.mxu0 %v1355
    %2148 = vmatpush1.bf16.msra.mxu0 %v1354
    %2149 = vmatprep.subr.bf16.mxu0 %v1359
    %2150 = vmatpush1.bf16.msra.mxu0 %v1358
    %2151 = vmatprep.subr.bf16.mxu0 %v1363
    %2152 = vmatpush1.bf16.msra.mxu0 %v1362
    %2153 = vmatprep.mubr.bf16.mxu0 %v505
    %2154 = vmatmul.mubr.bf16.gmra.mrb[0].mxu0 %v504
    %v2155 = vpop.f32.mrb[0].mxu0
    %v2156 = vadd.f32 %v2043, %v2155
    %v2157 = vpop.f32.mrb[0].mxu0
    %v2158 = vadd.f32 %v2045, %v2157
    %v2159 = vpop.f32.mrb[0].mxu0
    %v2160 = vadd.f32 %v2047, %v2159
    %v2161 = vpop.f32.mrb[0].mxu0
    %v2162 = vadd.f32 %v2049, %v2161
    %2163 = vmatprep.mubr.bf16.mxu0 %v511
    %2164 = vmatmul.mubr.bf16.gmra.mrb[0].mxu0 %v510
    %v2165 = vpop.f32.mrb[0].mxu0
    %v2166 = vadd.f32 %v2053, %v2165
    %v2167 = vpop.f32.mrb[0].mxu0
    %v2168 = vadd.f32 %v2055, %v2167
    %v2169 = vpop.f32.mrb[0].mxu0
    %v2170 = vadd.f32 %v2057, %v2169
    %v2171 = vpop.f32.mrb[0].mxu0
    %v2172 = vadd.f32 %v2059, %v2171
    %2173 = vmatprep.mubr.bf16.mxu0 %v517
    %2174 = vmatmul.mubr.bf16.gmra.mrb[0].mxu0 %v516
    %v2175 = vpop.f32.mrb[0].mxu0
    %v2176 = vadd.f32 %v2063, %v2175
    %v2177 = vpop.f32.mrb[0].mxu0
    %v2178 = vadd.f32 %v2065, %v2177
    %v2179 = vpop.f32.mrb[0].mxu0
    %v2180 = vadd.f32 %v2067, %v2179
    %v2181 = vpop.f32.mrb[0].mxu0
    %v2182 = vadd.f32 %v2069, %v2181
    %2183 = vmatprep.mubr.bf16.mxu0 %v523
    %2184 = vmatmul.mubr.bf16.gmra.mrb[0].mxu0 %v522
    %v2185 = vpop.f32.mrb[0].mxu0
    %v2186 = vadd.f32 %v2073, %v2185
    %v2187 = vpop.f32.mrb[0].mxu0
    %v2188 = vadd.f32 %v2075, %v2187
    %v2189 = vpop.f32.mrb[0].mxu0
    %v2190 = vadd.f32 %v2077, %v2189
    %v2191 = vpop.f32.mrb[0].mxu0
    %v2192 = vadd.f32 %v2079, %v2191
    %2193 = vmatprep.mubr.bf16.mxu0 %v529
    %2194 = vmatmul.mubr.bf16.gmra.mrb[0].mxu0 %v528
    %v2195 = vpop.f32.mrb[0].mxu0
    %v2196 = vadd.f32 %v2083, %v2195
    %v2197 = vpop.f32.mrb[0].mxu0
    %v2198 = vadd.f32 %v2085, %v2197
    %v2199 = vpop.f32.mrb[0].mxu0
    %v2200 = vadd.f32 %v2087, %v2199
    %v2201 = vpop.f32.mrb[0].mxu0
    %v2202 = vadd.f32 %v2089, %v2201
    %2203 = vmatprep.mubr.bf16.mxu0 %v535
    %2204 = vmatmul.mubr.bf16.gmra.mrb[0].mxu0 %v534
    %v2205 = vpop.f32.mrb[0].mxu0
    %v2206 = vadd.f32 %v2093, %v2205
    %v2207 = vpop.f32.mrb[0].mxu0
    %v2208 = vadd.f32 %v2095, %v2207
    %v2209 = vpop.f32.mrb[0].mxu0
    %v2210 = vadd.f32 %v2097, %v2209
    %v2211 = vpop.f32.mrb[0].mxu0
    %v2212 = vadd.f32 %v2099, %v2211
    %2213 = vmatprep.mubr.bf16.mxu0 %v541
    %2214 = vmatmul.mubr.bf16.gmra.mrb[0].mxu0 %v540
    %v2215 = vpop.f32.mrb[0].mxu0
    %v2216 = vadd.f32 %v2103, %v2215
    %v2217 = vpop.f32.mrb[0].mxu0
    %v2218 = vadd.f32 %v2105, %v2217
    %v2219 = vpop.f32.mrb[0].mxu0
    %v2220 = vadd.f32 %v2107, %v2219
    %v2221 = vpop.f32.mrb[0].mxu0
    %v2222 = vadd.f32 %v2109, %v2221
    %2223 = vmatprep.mubr.bf16.mxu0 %v547
    %2224 = vmatmul.mubr.bf16.gmra.mrb[0].mxu0 %v546
    %v2225 = vpop.f32.mrb[0].mxu0
    %v2226 = vadd.f32 %v2113, %v2225
    %v2227 = vpop.f32.mrb[0].mxu0
    %v2228 = vadd.f32 %v2115, %v2227
    %v2229 = vpop.f32.mrb[0].mxu0
    %v2230 = vadd.f32 %v2117, %v2229
    %v2231 = vpop.f32.mrb[0].mxu0
    %v2232 = vadd.f32 %v2119, %v2231
    %2233 = vdwg.mxu0
    %v2234 = vmax.f32 %v1817, 0.0
    %v2235 = vmax.f32 %v1819, 0.0
    %v2236 = vmax.f32 %v2156, 0.0
    %v2237 = vmax.f32 %v2158, 0.0
    %v2238 = vmax.f32 %v1821, 0.0
    %v2239 = vmax.f32 %v1823, 0.0
    %v2240 = vmax.f32 %v2160, 0.0
    %v2241 = vmax.f32 %v2162, 0.0
    %v2242 = vmax.f32 %v1827, 0.0
    %v2243 = vmax.f32 %v1829, 0.0
    %v2244 = vmax.f32 %v2166, 0.0
    %v2245 = vmax.f32 %v2168, 0.0
    %v2246 = vmax.f32 %v1831, 0.0
    %v2247 = vmax.f32 %v1833, 0.0
    %v2248 = vmax.f32 %v2170, 0.0
    %v2249 = vmax.f32 %v2172, 0.0
    %v2250 = vmax.f32 %v1837, 0.0
    %v2251 = vmax.f32 %v1839, 0.0
    %v2252 = vmax.f32 %v2176, 0.0
    %v2253 = vmax.f32 %v2178, 0.0
    %v2254 = vmax.f32 %v1841, 0.0
    %v2255 = vmax.f32 %v1843, 0.0
    %v2256 = vmax.f32 %v2180, 0.0
    %v2257 = vmax.f32 %v2182, 0.0
    %v2258 = vmax.f32 %v1847, 0.0
    %v2259 = vmax.f32 %v1849, 0.0
    %v2260 = vmax.f32 %v2186, 0.0
    %v2261 = vmax.f32 %v2188, 0.0
    %v2262 = vmax.f32 %v1851, 0.0
    %v2263 = vmax.f32 %v1853, 0.0
    %v2264 = vmax.f32 %v2190, 0.0
    %v2265 = vmax.f32 %v2192, 0.0
    %v2266 = vmax.f32 %v1857, 0.0
    %v2267 = vmax.f32 %v1859, 0.0
    %v2268 = vmax.f32 %v2196, 0.0
    %v2269 = vmax.f32 %v2198, 0.0
    %v2270 = vmax.f32 %v1861, 0.0
    %v2271 = vmax.f32 %v1863, 0.0
    %v2272 = vmax.f32 %v2200, 0.0
    %v2273 = vmax.f32 %v2202, 0.0
    %v2274 = vmax.f32 %v1867, 0.0
    %v2275 = vmax.f32 %v1869, 0.0
    %v2276 = vmax.f32 %v2206, 0.0
    %v2277 = vmax.f32 %v2208, 0.0
    %v2278 = vmax.f32 %v1871, 0.0
    %v2279 = vmax.f32 %v1873, 0.0
    %v2280 = vmax.f32 %v2210, 0.0
    %v2281 = vmax.f32 %v2212, 0.0
    %v2282 = vmax.f32 %v1877, 0.0
    %v2283 = vmax.f32 %v1879, 0.0
    %v2284 = vmax.f32 %v2216, 0.0
    %v2285 = vmax.f32 %v2218, 0.0
    %v2286 = vmax.f32 %v1881, 0.0
    %v2287 = vmax.f32 %v1883, 0.0
    %v2288 = vmax.f32 %v2220, 0.0
    %v2289 = vmax.f32 %v2222, 0.0
    %v2290 = vmax.f32 %v1887, 0.0
    %v2291 = vmax.f32 %v1889, 0.0
    %v2292 = vmax.f32 %v2226, 0.0
    %v2293 = vmax.f32 %v2228, 0.0
    %v2294 = vmax.f32 %v1891, 0.0
    %v2295 = vmax.f32 %v1893, 0.0
    %v2296 = vmax.f32 %v2230, 0.0
    %v2297 = vmax.f32 %v2232, 0.0
    %v2298 = vpack.c.bf16 %v2238, %v2234
    %v2299 = vpack.c.bf16 %v2239, %v2235
    %v2300 = vpack.c.bf16 %v2240, %v2236
    %v2301 = vpack.c.bf16 %v2241, %v2237
    %v2302 = vpack.c.bf16 %v2246, %v2242
    %v2303 = vpack.c.bf16 %v2247, %v2243
    %v2304 = vpack.c.bf16 %v2248, %v2244
    %v2305 = vpack.c.bf16 %v2249, %v2245
    %v2306 = vpack.c.bf16 %v2254, %v2250
    %v2307 = vpack.c.bf16 %v2255, %v2251
    %v2308 = vpack.c.bf16 %v2256, %v2252
    %v2309 = vpack.c.bf16 %v2257, %v2253
    %v2310 = vpack.c.bf16 %v2262, %v2258
    %v2311 = vpack.c.bf16 %v2263, %v2259
    %v2312 = vpack.c.bf16 %v2264, %v2260
    %v2313 = vpack.c.bf16 %v2265, %v2261
    %v2314 = vpack.c.bf16 %v2270, %v2266
    %v2315 = vpack.c.bf16 %v2271, %v2267
    %v2316 = vpack.c.bf16 %v2272, %v2268
    %v2317 = vpack.c.bf16 %v2273, %v2269
    %v2318 = vpack.c.bf16 %v2278, %v2274
    %v2319 = vpack.c.bf16 %v2279, %v2275
    %v2320 = vpack.c.bf16 %v2280, %v2276
    %v2321 = vpack.c.bf16 %v2281, %v2277
    %v2322 = vpack.c.bf16 %v2286, %v2282
    %v2323 = vpack.c.bf16 %v2287, %v2283
    %v2324 = vpack.c.bf16 %v2288, %v2284
    %v2325 = vpack.c.bf16 %v2289, %v2285
    %v2326 = vpack.c.bf16 %v2294, %v2290
    %v2327 = vpack.c.bf16 %v2295, %v2291
    %v2328 = vpack.c.bf16 %v2296, %v2292
    %v2329 = vpack.c.bf16 %v2297, %v2293
    %v2330 = vld [vmem:[#allocation6] sm:$0xff]
    %v2331 = vld [vmem:[#allocation6 + $0x8] sm:$0xff]
    %v2332 = vld [vmem:[#allocation6 + $0x10] sm:$0xff]
    %v2333 = vld [vmem:[#allocation6 + $0x18] sm:$0xff]
    %v2334 = vld [vmem:[#allocation6 + $0x20] sm:$0xff]
    %v2335 = vld [vmem:[#allocation6 + $0x28] sm:$0xff]
    %v2336 = vld [vmem:[#allocation6 + $0x30] sm:$0xff]
    %v2337 = vld [vmem:[#allocation6 + $0x38] sm:$0xff]
    %v2338 = vld [vmem:[#allocation6 + $0x40] sm:$0xff]
    %v2339 = vld [vmem:[#allocation6 + $0x48] sm:$0xff]
    %v2340 = vld [vmem:[#allocation6 + $0x50] sm:$0xff]
    %v2341 = vld [vmem:[#allocation6 + $0x58] sm:$0xff]
    %v2342 = vld [vmem:[#allocation6 + $0x60] sm:$0xff]
    %v2343 = vld [vmem:[#allocation6 + $0x68] sm:$0xff]
    %v2344 = vld [vmem:[#allocation6 + $0x70] sm:$0xff]
    %v2345 = vld [vmem:[#allocation6 + $0x78] sm:$0xff]
    %v2346 = vld [vmem:[#allocation6 + $0x80] sm:$0xff]
    %v2347 = vld [vmem:[#allocation6 + $0x88] sm:$0xff]
    %v2348 = vld [vmem:[#allocation6 + $0x90] sm:$0xff]
    %v2349 = vld [vmem:[#allocation6 + $0x98] sm:$0xff]
    %v2350 = vld [vmem:[#allocation6 + $0xa0] sm:$0xff]
    %v2351 = vld [vmem:[#allocation6 + $0xa8] sm:$0xff]
    %v2352 = vld [vmem:[#allocation6 + $0xb0] sm:$0xff]
    %v2353 = vld [vmem:[#allocation6 + $0xb8] sm:$0xff]
    %v2354 = vld [vmem:[#allocation6 + $0xc0] sm:$0xff]
    %v2355 = vld [vmem:[#allocation6 + $0xc8] sm:$0xff]
    %v2356 = vld [vmem:[#allocation6 + $0xd0] sm:$0xff]
    %v2357 = vld [vmem:[#allocation6 + $0xd8] sm:$0xff]
    %v2358 = vld [vmem:[#allocation6 + $0xe0] sm:$0xff]
    %v2359 = vld [vmem:[#allocation6 + $0xe8] sm:$0xff]
    %v2360 = vld [vmem:[#allocation6 + $0xf0] sm:$0xff]
    %v2361 = vld [vmem:[#allocation6 + $0xf8] sm:$0xff]
    %v2362 = vld [vmem:[#allocation6 + $0x100] sm:$0xff]
    %v2363 = vld [vmem:[#allocation6 + $0x108] sm:$0xff]
    %v2364 = vld [vmem:[#allocation6 + $0x110] sm:$0xff]
    %v2365 = vld [vmem:[#allocation6 + $0x118] sm:$0xff]
    %v2366 = vld [vmem:[#allocation6 + $0x120] sm:$0xff]
    %v2367 = vld [vmem:[#allocation6 + $0x128] sm:$0xff]
    %v2368 = vld [vmem:[#allocation6 + $0x130] sm:$0xff]
    %v2369 = vld [vmem:[#allocation6 + $0x138] sm:$0xff]
    %v2370 = vld [vmem:[#allocation6 + $0x140] sm:$0xff]
    %v2371 = vld [vmem:[#allocation6 + $0x148] sm:$0xff]
    %v2372 = vld [vmem:[#allocation6 + $0x150] sm:$0xff]
    %v2373 = vld [vmem:[#allocation6 + $0x158] sm:$0xff]
    %v2374 = vld [vmem:[#allocation6 + $0x160] sm:$0xff]
    %v2375 = vld [vmem:[#allocation6 + $0x168] sm:$0xff]
    %v2376 = vld [vmem:[#allocation6 + $0x170] sm:$0xff]
    %v2377 = vld [vmem:[#allocation6 + $0x178] sm:$0xff]
    %v2378 = vld [vmem:[#allocation6 + $0x180] sm:$0xff]
    %v2379 = vld [vmem:[#allocation6 + $0x188] sm:$0xff]
    %v2380 = vld [vmem:[#allocation6 + $0x190] sm:$0xff]
    %v2381 = vld [vmem:[#allocation6 + $0x198] sm:$0xff]
    %v2382 = vld [vmem:[#allocation6 + $0x1a0] sm:$0xff]
    %v2383 = vld [vmem:[#allocation6 + $0x1a8] sm:$0xff]
    %v2384 = vld [vmem:[#allocation6 + $0x1b0] sm:$0xff]
    %v2385 = vld [vmem:[#allocation6 + $0x1b8] sm:$0xff]
    %v2386 = vld [vmem:[#allocation6 + $0x1c0] sm:$0xff]
    %v2387 = vld [vmem:[#allocation6 + $0x1c8] sm:$0xff]
    %v2388 = vld [vmem:[#allocation6 + $0x1d0] sm:$0xff]
    %v2389 = vld [vmem:[#allocation6 + $0x1d8] sm:$0xff]
    %v2390 = vld [vmem:[#allocation6 + $0x1e0] sm:$0xff]
    %v2391 = vld [vmem:[#allocation6 + $0x1e8] sm:$0xff]
    %v2392 = vld [vmem:[#allocation6 + $0x1f0] sm:$0xff]
    %v2393 = vld [vmem:[#allocation6 + $0x1f8] sm:$0xff]
    %v2394 = vld [vmem:[%s4] sm:$0x3]
    %v2396 = vlaneseq
    %v2397 = vshrl.u32 %v2396, 7
    %v2398 = vsub.s32 0, %v2397
    %v2399 = vrot.slane %v2394, %v2398
    %v2400 = vlaneseq
    %v2401 = vshrl.u32 %v2400, 7
    %v2402 = vsub.s32 1, %v2401
    %v2403 = vrot.slane %v2394, %v2402
    %v2470 = vunpack.c.l.b16 %v2330
    %v2471 = vunpack.c.h.b16 %v2330
    %v2472 = vunpack.c.l.b16 %v2331
    %v2473 = vunpack.c.h.b16 %v2331
    %v2474 = vunpack.c.l.b16 %v2332
    %v2475 = vunpack.c.h.b16 %v2332
    %v2476 = vunpack.c.l.b16 %v2333
    %v2477 = vunpack.c.h.b16 %v2333
    %v2478 = vunpack.c.l.b16 %v2334
    %v2479 = vunpack.c.h.b16 %v2334
    %v2480 = vunpack.c.l.b16 %v2335
    %v2481 = vunpack.c.h.b16 %v2335
    %v2482 = vunpack.c.l.b16 %v2336
    %v2483 = vunpack.c.h.b16 %v2336
    %v2484 = vunpack.c.l.b16 %v2337
    %v2485 = vunpack.c.h.b16 %v2337
    %v2486 = vunpack.c.l.b16 %v2338
    %v2487 = vunpack.c.h.b16 %v2338
    %v2488 = vunpack.c.l.b16 %v2339
    %v2489 = vunpack.c.h.b16 %v2339
    %v2490 = vunpack.c.l.b16 %v2340
    %v2491 = vunpack.c.h.b16 %v2340
    %v2492 = vunpack.c.l.b16 %v2341
    %v2493 = vunpack.c.h.b16 %v2341
    %v2494 = vunpack.c.l.b16 %v2342
    %v2495 = vunpack.c.h.b16 %v2342
    %v2496 = vunpack.c.l.b16 %v2343
    %v2497 = vunpack.c.h.b16 %v2343
    %v2498 = vunpack.c.l.b16 %v2344
    %v2499 = vunpack.c.h.b16 %v2344
    %v2500 = vunpack.c.l.b16 %v2345
    %v2501 = vunpack.c.h.b16 %v2345
    %v2502 = vunpack.c.l.b16 %v2346
    %v2503 = vunpack.c.h.b16 %v2346
    %v2504 = vunpack.c.l.b16 %v2347
    %v2505 = vunpack.c.h.b16 %v2347
    %v2506 = vunpack.c.l.b16 %v2348
    %v2507 = vunpack.c.h.b16 %v2348
    %v2508 = vunpack.c.l.b16 %v2349
    %v2509 = vunpack.c.h.b16 %v2349
    %v2510 = vunpack.c.l.b16 %v2350
    %v2511 = vunpack.c.h.b16 %v2350
    %v2512 = vunpack.c.l.b16 %v2351
    %v2513 = vunpack.c.h.b16 %v2351
    %v2514 = vunpack.c.l.b16 %v2352
    %v2515 = vunpack.c.h.b16 %v2352
    %v2516 = vunpack.c.l.b16 %v2353
    %v2517 = vunpack.c.h.b16 %v2353
    %v2518 = vunpack.c.l.b16 %v2354
    %v2519 = vunpack.c.h.b16 %v2354
    %v2520 = vunpack.c.l.b16 %v2355
    %v2521 = vunpack.c.h.b16 %v2355
    %v2522 = vunpack.c.l.b16 %v2356
    %v2523 = vunpack.c.h.b16 %v2356
    %v2524 = vunpack.c.l.b16 %v2357
    %v2525 = vunpack.c.h.b16 %v2357
    %v2526 = vunpack.c.l.b16 %v2358
    %v2527 = vunpack.c.h.b16 %v2358
    %v2528 = vunpack.c.l.b16 %v2359
    %v2529 = vunpack.c.h.b16 %v2359
    %v2530 = vunpack.c.l.b16 %v2360
    %v2531 = vunpack.c.h.b16 %v2360
    %v2532 = vunpack.c.l.b16 %v2361
    %v2533 = vunpack.c.h.b16 %v2361
    %v2534 = vunpack.c.l.b16 %v2362
    %v2535 = vunpack.c.h.b16 %v2362
    %v2536 = vunpack.c.l.b16 %v2363
    %v2537 = vunpack.c.h.b16 %v2363
    %v2538 = vunpack.c.l.b16 %v2364
    %v2539 = vunpack.c.h.b16 %v2364
    %v2540 = vunpack.c.l.b16 %v2365
    %v2541 = vunpack.c.h.b16 %v2365
    %v2542 = vunpack.c.l.b16 %v2366
    %v2543 = vunpack.c.h.b16 %v2366
    %v2544 = vunpack.c.l.b16 %v2367
    %v2545 = vunpack.c.h.b16 %v2367
    %v2546 = vunpack.c.l.b16 %v2368
    %v2547 = vunpack.c.h.b16 %v2368
    %v2548 = vunpack.c.l.b16 %v2369
    %v2549 = vunpack.c.h.b16 %v2369
    %v2550 = vunpack.c.l.b16 %v2370
    %v2551 = vunpack.c.h.b16 %v2370
    %v2552 = vunpack.c.l.b16 %v2371
    %v2553 = vunpack.c.h.b16 %v2371
    %v2554 = vunpack.c.l.b16 %v2372
    %v2555 = vunpack.c.h.b16 %v2372
    %v2556 = vunpack.c.l.b16 %v2373
    %v2557 = vunpack.c.h.b16 %v2373
    %v2558 = vunpack.c.l.b16 %v2374
    %v2559 = vunpack.c.h.b16 %v2374
    %v2560 = vunpack.c.l.b16 %v2375
    %v2561 = vunpack.c.h.b16 %v2375
    %v2562 = vunpack.c.l.b16 %v2376
    %v2563 = vunpack.c.h.b16 %v2376
    %v2564 = vunpack.c.l.b16 %v2377
    %v2565 = vunpack.c.h.b16 %v2377
    %v2566 = vunpack.c.l.b16 %v2378
    %v2567 = vunpack.c.h.b16 %v2378
    %v2568 = vunpack.c.l.b16 %v2379
    %v2569 = vunpack.c.h.b16 %v2379
    %v2570 = vunpack.c.l.b16 %v2380
    %v2571 = vunpack.c.h.b16 %v2380
    %v2572 = vunpack.c.l.b16 %v2381
    %v2573 = vunpack.c.h.b16 %v2381
    %v2574 = vunpack.c.l.b16 %v2382
    %v2575 = vunpack.c.h.b16 %v2382
    %v2576 = vunpack.c.l.b16 %v2383
    %v2577 = vunpack.c.h.b16 %v2383
    %v2578 = vunpack.c.l.b16 %v2384
    %v2579 = vunpack.c.h.b16 %v2384
    %v2580 = vunpack.c.l.b16 %v2385
    %v2581 = vunpack.c.h.b16 %v2385
    %v2582 = vunpack.c.l.b16 %v2386
    %v2583 = vunpack.c.h.b16 %v2386
    %v2584 = vunpack.c.l.b16 %v2387
    %v2585 = vunpack.c.h.b16 %v2387
    %v2586 = vunpack.c.l.b16 %v2388
    %v2587 = vunpack.c.h.b16 %v2388
    %v2588 = vunpack.c.l.b16 %v2389
    %v2589 = vunpack.c.h.b16 %v2389
    %v2590 = vunpack.c.l.b16 %v2390
    %v2591 = vunpack.c.h.b16 %v2390
    %v2592 = vunpack.c.l.b16 %v2391
    %v2593 = vunpack.c.h.b16 %v2391
    %v2594 = vunpack.c.l.b16 %v2392
    %v2595 = vunpack.c.h.b16 %v2392
    %v2596 = vunpack.c.l.b16 %v2393
    %v2597 = vunpack.c.h.b16 %v2393
    %v2598 = vpack.c.b16 %v2472, %v2470
    %v2599 = vpack.c.b16 %v2473, %v2471
    %v2600 = vpack.c.b16 %v2476, %v2474
    %v2601 = vpack.c.b16 %v2477, %v2475
    %v2602 = vpack.c.b16 %v2480, %v2478
    %v2603 = vpack.c.b16 %v2481, %v2479
    %v2604 = vpack.c.b16 %v2484, %v2482
    %v2605 = vpack.c.b16 %v2485, %v2483
    %v2606 = vpack.c.b16 %v2488, %v2486
    %v2607 = vpack.c.b16 %v2489, %v2487
    %v2608 = vpack.c.b16 %v2492, %v2490
    %v2609 = vpack.c.b16 %v2493, %v2491
    %v2610 = vpack.c.b16 %v2496, %v2494
    %v2611 = vpack.c.b16 %v2497, %v2495
    %v2612 = vpack.c.b16 %v2500, %v2498
    %v2613 = vpack.c.b16 %v2501, %v2499
    %v2614 = vpack.c.b16 %v2504, %v2502
    %v2615 = vpack.c.b16 %v2505, %v2503
    %v2616 = vpack.c.b16 %v2508, %v2506
    %v2617 = vpack.c.b16 %v2509, %v2507
    %v2618 = vpack.c.b16 %v2512, %v2510
    %v2619 = vpack.c.b16 %v2513, %v2511
    %v2620 = vpack.c.b16 %v2516, %v2514
    %v2621 = vpack.c.b16 %v2517, %v2515
    %v2622 = vpack.c.b16 %v2520, %v2518
    %v2623 = vpack.c.b16 %v2521, %v2519
    %v2624 = vpack.c.b16 %v2524, %v2522
    %v2625 = vpack.c.b16 %v2525, %v2523
    %v2626 = vpack.c.b16 %v2528, %v2526
    %v2627 = vpack.c.b16 %v2529, %v2527
    %v2628 = vpack.c.b16 %v2532, %v2530
    %v2629 = vpack.c.b16 %v2533, %v2531
    %v2630 = vpack.c.b16 %v2536, %v2534
    %v2631 = vpack.c.b16 %v2537, %v2535
    %v2632 = vpack.c.b16 %v2540, %v2538
    %v2633 = vpack.c.b16 %v2541, %v2539
    %v2634 = vpack.c.b16 %v2544, %v2542
    %v2635 = vpack.c.b16 %v2545, %v2543
    %v2636 = vpack.c.b16 %v2548, %v2546
    %v2637 = vpack.c.b16 %v2549, %v2547
    %v2638 = vpack.c.b16 %v2552, %v2550
    %v2639 = vpack.c.b16 %v2553, %v2551
    %v2640 = vpack.c.b16 %v2556, %v2554
    %v2641 = vpack.c.b16 %v2557, %v2555
    %v2642 = vpack.c.b16 %v2560, %v2558
    %v2643 = vpack.c.b16 %v2561, %v2559
    %v2644 = vpack.c.b16 %v2564, %v2562
    %v2645 = vpack.c.b16 %v2565, %v2563
    %v2646 = vpack.c.b16 %v2568, %v2566
    %v2647 = vpack.c.b16 %v2569, %v2567
    %v2648 = vpack.c.b16 %v2572, %v2570
    %v2649 = vpack.c.b16 %v2573, %v2571
    %v2650 = vpack.c.b16 %v2576, %v2574
    %v2651 = vpack.c.b16 %v2577, %v2575
    %v2652 = vpack.c.b16 %v2580, %v2578
    %v2653 = vpack.c.b16 %v2581, %v2579
    %v2654 = vpack.c.b16 %v2584, %v2582
    %v2655 = vpack.c.b16 %v2585, %v2583
    %v2656 = vpack.c.b16 %v2588, %v2586
    %v2657 = vpack.c.b16 %v2589, %v2587
    %v2658 = vpack.c.b16 %v2592, %v2590
    %v2659 = vpack.c.b16 %v2593, %v2591
    %v2660 = vpack.c.b16 %v2596, %v2594
    %v2661 = vpack.c.b16 %v2597, %v2595
    %2726 = vmatprep.subr.bf16.mxu0 %v2599
    %2727 = vmatpush1.bf16.msra.mxu0 %v2598
    %2728 = vmatprep.subr.bf16.mxu0 %v2601
    %2729 = vmatpush1.bf16.msra.mxu0 %v2600
    %2730 = vmatprep.subr.bf16.mxu0 %v2603
    %2731 = vmatpush1.bf16.msra.mxu0 %v2602
    %2732 = vmatprep.subr.bf16.mxu0 %v2605
    %2733 = vmatpush1.bf16.msra.mxu0 %v2604
    %2734 = vmatprep.subr.bf16.mxu0 %v2607
    %2735 = vmatpush1.bf16.msra.mxu0 %v2606
    %2736 = vmatprep.subr.bf16.mxu0 %v2609
    %2737 = vmatpush1.bf16.msra.mxu0 %v2608
    %2738 = vmatprep.subr.bf16.mxu0 %v2611
    %2739 = vmatpush1.bf16.msra.mxu0 %v2610
    %2740 = vmatprep.subr.bf16.mxu0 %v2613
    %2741 = vmatpush1.bf16.msra.mxu0 %v2612
    %2742 = vmatprep.subr.bf16.mxu0 %v2615
    %2743 = vmatpush1.bf16.msra.mxu0 %v2614
    %2744 = vmatprep.subr.bf16.mxu0 %v2617
    %2745 = vmatpush1.bf16.msra.mxu0 %v2616
    %2746 = vmatprep.subr.bf16.mxu0 %v2619
    %2747 = vmatpush1.bf16.msra.mxu0 %v2618
    %2748 = vmatprep.subr.bf16.mxu0 %v2621
    %2749 = vmatpush1.bf16.msra.mxu0 %v2620
    %2750 = vmatprep.subr.bf16.mxu0 %v2623
    %2751 = vmatpush1.bf16.msra.mxu0 %v2622
    %2752 = vmatprep.subr.bf16.mxu0 %v2625
    %2753 = vmatpush1.bf16.msra.mxu0 %v2624
    %2754 = vmatprep.subr.bf16.mxu0 %v2627
    %2755 = vmatpush1.bf16.msra.mxu0 %v2626
    %2756 = vmatprep.subr.bf16.mxu0 %v2629
    %2757 = vmatpush1.bf16.msra.mxu0 %v2628
    %2758 = vmatprep.mubr.bf16.mxu0 %v2299
    %2759 = vmatmul.mubr.bf16.gmra.mrb[0].mxu0 %v2298
    %v2760 = vpop.f32.mrb[0].mxu0
    %v2761 = vadd.f32 %v2399, %v2760
    %v2762 = vpop.f32.mrb[0].mxu0
    %v2763 = vadd.f32 %v2403, %v2762
    %v2764 = vpop.f32.mrb[0].mxu0
    %v2765 = vadd.f32 %v2399, %v2764
    %v2766 = vpop.f32.mrb[0].mxu0
    %v2767 = vadd.f32 %v2403, %v2766
    %2768 = vmatprep.mubr.bf16.mxu0 %v2303
    %2769 = vmatmul.mubr.bf16.gmra.mrb[0].mxu0 %v2302
    %v2770 = vpop.f32.mrb[0].mxu0
    %v2771 = vadd.f32 %v2399, %v2770
    %v2772 = vpop.f32.mrb[0].mxu0
    %v2773 = vadd.f32 %v2403, %v2772
    %v2774 = vpop.f32.mrb[0].mxu0
    %v2775 = vadd.f32 %v2399, %v2774
    %v2776 = vpop.f32.mrb[0].mxu0
    %v2777 = vadd.f32 %v2403, %v2776
    %2778 = vmatprep.mubr.bf16.mxu0 %v2307
    %2779 = vmatmul.mubr.bf16.gmra.mrb[0].mxu0 %v2306
    %v2780 = vpop.f32.mrb[0].mxu0
    %v2781 = vadd.f32 %v2399, %v2780
    %v2782 = vpop.f32.mrb[0].mxu0
    %v2783 = vadd.f32 %v2403, %v2782
    %v2784 = vpop.f32.mrb[0].mxu0
    %v2785 = vadd.f32 %v2399, %v2784
    %v2786 = vpop.f32.mrb[0].mxu0
    %v2787 = vadd.f32 %v2403, %v2786
    %2788 = vmatprep.mubr.bf16.mxu0 %v2311
    %2789 = vmatmul.mubr.bf16.gmra.mrb[0].mxu0 %v2310
    %v2790 = vpop.f32.mrb[0].mxu0
    %v2791 = vadd.f32 %v2399, %v2790
    %v2792 = vpop.f32.mrb[0].mxu0
    %v2793 = vadd.f32 %v2403, %v2792
    %v2794 = vpop.f32.mrb[0].mxu0
    %v2795 = vadd.f32 %v2399, %v2794
    %v2796 = vpop.f32.mrb[0].mxu0
    %v2797 = vadd.f32 %v2403, %v2796
    %2798 = vmatprep.mubr.bf16.mxu0 %v2315
    %2799 = vmatmul.mubr.bf16.gmra.mrb[0].mxu0 %v2314
    %v2800 = vpop.f32.mrb[0].mxu0
    %v2801 = vadd.f32 %v2399, %v2800
    %v2802 = vpop.f32.mrb[0].mxu0
    %v2803 = vadd.f32 %v2403, %v2802
    %v2804 = vpop.f32.mrb[0].mxu0
    %v2805 = vadd.f32 %v2399, %v2804
    %v2806 = vpop.f32.mrb[0].mxu0
    %v2807 = vadd.f32 %v2403, %v2806
    %2808 = vmatprep.mubr.bf16.mxu0 %v2319
    %2809 = vmatmul.mubr.bf16.gmra.mrb[0].mxu0 %v2318
    %v2810 = vpop.f32.mrb[0].mxu0
    %v2811 = vadd.f32 %v2399, %v2810
    %v2812 = vpop.f32.mrb[0].mxu0
    %v2813 = vadd.f32 %v2403, %v2812
    %v2814 = vpop.f32.mrb[0].mxu0
    %v2815 = vadd.f32 %v2399, %v2814
    %v2816 = vpop.f32.mrb[0].mxu0
    %v2817 = vadd.f32 %v2403, %v2816
    %2818 = vmatprep.mubr.bf16.mxu0 %v2323
    %2819 = vmatmul.mubr.bf16.gmra.mrb[0].mxu0 %v2322
    %v2820 = vpop.f32.mrb[0].mxu0
    %v2821 = vadd.f32 %v2399, %v2820
    %v2822 = vpop.f32.mrb[0].mxu0
    %v2823 = vadd.f32 %v2403, %v2822
    %v2824 = vpop.f32.mrb[0].mxu0
    %v2825 = vadd.f32 %v2399, %v2824
    %v2826 = vpop.f32.mrb[0].mxu0
    %v2827 = vadd.f32 %v2403, %v2826
    %2828 = vmatprep.mubr.bf16.mxu0 %v2327
    %2829 = vmatmul.mubr.bf16.gmra.mrb[0].mxu0 %v2326
    %v2830 = vpop.f32.mrb[0].mxu0
    %v2831 = vadd.f32 %v2399, %v2830
    %v2832 = vpop.f32.mrb[0].mxu0
    %v2833 = vadd.f32 %v2403, %v2832
    %v2834 = vpop.f32.mrb[0].mxu0
    %v2835 = vadd.f32 %v2399, %v2834
    %v2836 = vpop.f32.mrb[0].mxu0
    %v2837 = vadd.f32 %v2403, %v2836
    %2838 = vdwg.mxu0
    %2839 = vmatprep.subr.bf16.mxu0 %v2631
    %2840 = vmatpush1.bf16.msra.mxu0 %v2630
    %2841 = vmatprep.subr.bf16.mxu0 %v2633
    %2842 = vmatpush1.bf16.msra.mxu0 %v2632
    %2843 = vmatprep.subr.bf16.mxu0 %v2635
    %2844 = vmatpush1.bf16.msra.mxu0 %v2634
    %2845 = vmatprep.subr.bf16.mxu0 %v2637
    %2846 = vmatpush1.bf16.msra.mxu0 %v2636
    %2847 = vmatprep.subr.bf16.mxu0 %v2639
    %2848 = vmatpush1.bf16.msra.mxu0 %v2638
    %2849 = vmatprep.subr.bf16.mxu0 %v2641
    %2850 = vmatpush1.bf16.msra.mxu0 %v2640
    %2851 = vmatprep.subr.bf16.mxu0 %v2643
    %2852 = vmatpush1.bf16.msra.mxu0 %v2642
    %2853 = vmatprep.subr.bf16.mxu0 %v2645
    %2854 = vmatpush1.bf16.msra.mxu0 %v2644
    %2855 = vmatprep.subr.bf16.mxu0 %v2647
    %2856 = vmatpush1.bf16.msra.mxu0 %v2646
    %2857 = vmatprep.subr.bf16.mxu0 %v2649
    %2858 = vmatpush1.bf16.msra.mxu0 %v2648
    %2859 = vmatprep.subr.bf16.mxu0 %v2651
    %2860 = vmatpush1.bf16.msra.mxu0 %v2650
    %2861 = vmatprep.subr.bf16.mxu0 %v2653
    %2862 = vmatpush1.bf16.msra.mxu0 %v2652
    %2863 = vmatprep.subr.bf16.mxu0 %v2655
    %2864 = vmatpush1.bf16.msra.mxu0 %v2654
    %2865 = vmatprep.subr.bf16.mxu0 %v2657
    %2866 = vmatpush1.bf16.msra.mxu0 %v2656
    %2867 = vmatprep.subr.bf16.mxu0 %v2659
    %2868 = vmatpush1.bf16.msra.mxu0 %v2658
    %2869 = vmatprep.subr.bf16.mxu0 %v2661
    %2870 = vmatpush1.bf16.msra.mxu0 %v2660
    %2871 = vmatprep.mubr.bf16.mxu0 %v2301
    %2872 = vmatmul.mubr.bf16.gmra.mrb[0].mxu0 %v2300
    %v2873 = vpop.f32.mrb[0].mxu0
    %v2874 = vadd.f32 %v2761, %v2873
    %v2875 = vpop.f32.mrb[0].mxu0
    %v2876 = vadd.f32 %v2763, %v2875
    %v2877 = vpop.f32.mrb[0].mxu0
    %v2878 = vadd.f32 %v2765, %v2877
    %v2879 = vpop.f32.mrb[0].mxu0
    %v2880 = vadd.f32 %v2767, %v2879
    %2881 = vmatprep.mubr.bf16.mxu0 %v2305
    %2882 = vmatmul.mubr.bf16.gmra.mrb[0].mxu0 %v2304
    %v2883 = vpop.f32.mrb[0].mxu0
    %v2884 = vadd.f32 %v2771, %v2883
    %v2885 = vpop.f32.mrb[0].mxu0
    %v2886 = vadd.f32 %v2773, %v2885
    %v2887 = vpop.f32.mrb[0].mxu0
    %v2888 = vadd.f32 %v2775, %v2887
    %v2889 = vpop.f32.mrb[0].mxu0
    %v2890 = vadd.f32 %v2777, %v2889
    %2891 = vmatprep.mubr.bf16.mxu0 %v2309
    %2892 = vmatmul.mubr.bf16.gmra.mrb[0].mxu0 %v2308
    %v2893 = vpop.f32.mrb[0].mxu0
    %v2894 = vadd.f32 %v2781, %v2893
    %v2895 = vpop.f32.mrb[0].mxu0
    %v2896 = vadd.f32 %v2783, %v2895
    %v2897 = vpop.f32.mrb[0].mxu0
    %v2898 = vadd.f32 %v2785, %v2897
    %v2899 = vpop.f32.mrb[0].mxu0
    %v2900 = vadd.f32 %v2787, %v2899
    %2901 = vmatprep.mubr.bf16.mxu0 %v2313
    %2902 = vmatmul.mubr.bf16.gmra.mrb[0].mxu0 %v2312
    %v2903 = vpop.f32.mrb[0].mxu0
    %v2904 = vadd.f32 %v2791, %v2903
    %v2905 = vpop.f32.mrb[0].mxu0
    %v2906 = vadd.f32 %v2793, %v2905
    %v2907 = vpop.f32.mrb[0].mxu0
    %v2908 = vadd.f32 %v2795, %v2907
    %v2909 = vpop.f32.mrb[0].mxu0
    %v2910 = vadd.f32 %v2797, %v2909
    %2911 = vmatprep.mubr.bf16.mxu0 %v2317
    %2912 = vmatmul.mubr.bf16.gmra.mrb[0].mxu0 %v2316
    %v2913 = vpop.f32.mrb[0].mxu0
    %v2914 = vadd.f32 %v2801, %v2913
    %v2915 = vpop.f32.mrb[0].mxu0
    %v2916 = vadd.f32 %v2803, %v2915
    %v2917 = vpop.f32.mrb[0].mxu0
    %v2918 = vadd.f32 %v2805, %v2917
    %v2919 = vpop.f32.mrb[0].mxu0
    %v2920 = vadd.f32 %v2807, %v2919
    %2921 = vmatprep.mubr.bf16.mxu0 %v2321
    %2922 = vmatmul.mubr.bf16.gmra.mrb[0].mxu0 %v2320
    %v2923 = vpop.f32.mrb[0].mxu0
    %v2924 = vadd.f32 %v2811, %v2923
    %v2925 = vpop.f32.mrb[0].mxu0
    %v2926 = vadd.f32 %v2813, %v2925
    %v2927 = vpop.f32.mrb[0].mxu0
    %v2928 = vadd.f32 %v2815, %v2927
    %v2929 = vpop.f32.mrb[0].mxu0
    %v2930 = vadd.f32 %v2817, %v2929
    %2931 = vmatprep.mubr.bf16.mxu0 %v2325
    %2932 = vmatmul.mubr.bf16.gmra.mrb[0].mxu0 %v2324
    %v2933 = vpop.f32.mrb[0].mxu0
    %v2934 = vadd.f32 %v2821, %v2933
    %v2935 = vpop.f32.mrb[0].mxu0
    %v2936 = vadd.f32 %v2823, %v2935
    %v2937 = vpop.f32.mrb[0].mxu0
    %v2938 = vadd.f32 %v2825, %v2937
    %v2939 = vpop.f32.mrb[0].mxu0
    %v2940 = vadd.f32 %v2827, %v2939
    %2941 = vmatprep.mubr.bf16.mxu0 %v2329
    %2942 = vmatmul.mubr.bf16.gmra.mrb[0].mxu0 %v2328
    %v2943 = vpop.f32.mrb[0].mxu0
    %v2944 = vadd.f32 %v2831, %v2943
    %v2945 = vpop.f32.mrb[0].mxu0
    %v2946 = vadd.f32 %v2833, %v2945
    %v2947 = vpop.f32.mrb[0].mxu0
    %v2948 = vadd.f32 %v2835, %v2947
    %v2949 = vpop.f32.mrb[0].mxu0
    %v2950 = vadd.f32 %v2837, %v2949
    %2951 = vdwg.mxu0
    %v2952 = vmax.f32 %v2874, 0.0
    %v2953 = vmax.f32 %v2876, 0.0
    %v2954 = vmax.f32 %v2878, 0.0
    %v2955 = vmax.f32 %v2880, 0.0
    %v2956 = vmax.f32 %v2884, 0.0
    %v2957 = vmax.f32 %v2886, 0.0
    %v2958 = vmax.f32 %v2888, 0.0
    %v2959 = vmax.f32 %v2890, 0.0
    %v2960 = vmax.f32 %v2894, 0.0
    %v2961 = vmax.f32 %v2896, 0.0
    %v2962 = vmax.f32 %v2898, 0.0
    %v2963 = vmax.f32 %v2900, 0.0
    %v2964 = vmax.f32 %v2904, 0.0
    %v2965 = vmax.f32 %v2906, 0.0
    %v2966 = vmax.f32 %v2908, 0.0
    %v2967 = vmax.f32 %v2910, 0.0
    %v2968 = vmax.f32 %v2914, 0.0
    %v2969 = vmax.f32 %v2916, 0.0
    %v2970 = vmax.f32 %v2918, 0.0
    %v2971 = vmax.f32 %v2920, 0.0
    %v2972 = vmax.f32 %v2924, 0.0
    %v2973 = vmax.f32 %v2926, 0.0
    %v2974 = vmax.f32 %v2928, 0.0
    %v2975 = vmax.f32 %v2930, 0.0
    %v2976 = vmax.f32 %v2934, 0.0
    %v2977 = vmax.f32 %v2936, 0.0
    %v2978 = vmax.f32 %v2938, 0.0
    %v2979 = vmax.f32 %v2940, 0.0
    %v2980 = vmax.f32 %v2944, 0.0
    %v2981 = vmax.f32 %v2946, 0.0
    %v2982 = vmax.f32 %v2948, 0.0
    %v2983 = vmax.f32 %v2950, 0.0
    %v2984 = vpack.c.bf16 %v2954, %v2952
    %v2985 = vpack.c.bf16 %v2955, %v2953
    %v2986 = vpack.c.bf16 %v2958, %v2956
    %v2987 = vpack.c.bf16 %v2959, %v2957
    %v2988 = vpack.c.bf16 %v2962, %v2960
    %v2989 = vpack.c.bf16 %v2963, %v2961
    %v2990 = vpack.c.bf16 %v2966, %v2964
    %v2991 = vpack.c.bf16 %v2967, %v2965
    %v2992 = vpack.c.bf16 %v2970, %v2968
    %v2993 = vpack.c.bf16 %v2971, %v2969
    %v2994 = vpack.c.bf16 %v2974, %v2972
    %v2995 = vpack.c.bf16 %v2975, %v2973
    %v2996 = vpack.c.bf16 %v2978, %v2976
    %v2997 = vpack.c.bf16 %v2979, %v2977
    %v2998 = vpack.c.bf16 %v2982, %v2980
    %v2999 = vpack.c.bf16 %v2983, %v2981
    %v3000 = vld [vmem:[#allocation7] sm:$0xf]
    %v3001 = vld [vmem:[#allocation7 + $0x4] sm:$0xf]
    %v3002 = vld [vmem:[#allocation7 + $0x8] sm:$0xf]
    %v3003 = vld [vmem:[#allocation7 + $0xc] sm:$0xf]
    %v3004 = vld [vmem:[#allocation7 + $0x10] sm:$0xf]
    %v3005 = vld [vmem:[#allocation7 + $0x14] sm:$0xf]
    %v3006 = vld [vmem:[#allocation7 + $0x18] sm:$0xf]
    %v3007 = vld [vmem:[#allocation7 + $0x1c] sm:$0xf]
    %v3008 = vld [vmem:[#allocation7 + $0x20] sm:$0xf]
    %v3009 = vld [vmem:[#allocation7 + $0x24] sm:$0xf]
    %v3010 = vld [vmem:[#allocation7 + $0x28] sm:$0xf]
    %v3011 = vld [vmem:[#allocation7 + $0x2c] sm:$0xf]
    %v3012 = vld [vmem:[#allocation7 + $0x30] sm:$0xf]
    %v3013 = vld [vmem:[#allocation7 + $0x34] sm:$0xf]
    %v3014 = vld [vmem:[#allocation7 + $0x38] sm:$0xf]
    %v3015 = vld [vmem:[#allocation7 + $0x3c] sm:$0xf]
    %v3016 = vld [vmem:[#allocation7 + $0x40] sm:$0xf]
    %v3017 = vld [vmem:[#allocation7 + $0x44] sm:$0xf]
    %v3018 = vld [vmem:[#allocation7 + $0x48] sm:$0xf]
    %v3019 = vld [vmem:[#allocation7 + $0x4c] sm:$0xf]
    %v3020 = vld [vmem:[#allocation7 + $0x50] sm:$0xf]
    %v3021 = vld [vmem:[#allocation7 + $0x54] sm:$0xf]
    %v3022 = vld [vmem:[#allocation7 + $0x58] sm:$0xf]
    %v3023 = vld [vmem:[#allocation7 + $0x5c] sm:$0xf]
    %v3024 = vld [vmem:[#allocation7 + $0x60] sm:$0xf]
    %v3025 = vld [vmem:[#allocation7 + $0x64] sm:$0xf]
    %v3026 = vld [vmem:[#allocation7 + $0x68] sm:$0xf]
    %v3027 = vld [vmem:[#allocation7 + $0x6c] sm:$0xf]
    %v3028 = vld [vmem:[#allocation7 + $0x70] sm:$0xf]
    %v3029 = vld [vmem:[#allocation7 + $0x74] sm:$0xf]
    %v3030 = vld [vmem:[#allocation7 + $0x78] sm:$0xf]
    %v3031 = vld [vmem:[#allocation7 + $0x7c] sm:$0xf]
    %v3032 = vld [vmem:[%s6] sm:$0x1]
    %v3034 = vlaneseq
    %v3035 = vshrl.u32 %v3034, 7
    %v3036 = vsub.s32 0, %v3035
    %v3037 = vrot.slane %v3032, %v3036
    %v3071 = vunpack.c.l.b16 %v3000
    %v3072 = vunpack.c.l.b16 %v3001
    %v3073 = vunpack.c.l.b16 %v3002
    %v3074 = vunpack.c.l.b16 %v3003
    %v3075 = vunpack.c.l.b16 %v3004
    %v3076 = vunpack.c.l.b16 %v3005
    %v3077 = vunpack.c.l.b16 %v3006
    %v3078 = vunpack.c.l.b16 %v3007
    %v3079 = vunpack.c.l.b16 %v3008
    %v3080 = vunpack.c.l.b16 %v3009
    %v3081 = vunpack.c.l.b16 %v3010
    %v3082 = vunpack.c.l.b16 %v3011
    %v3083 = vunpack.c.l.b16 %v3012
    %v3084 = vunpack.c.l.b16 %v3013
    %v3085 = vunpack.c.l.b16 %v3014
    %v3086 = vunpack.c.l.b16 %v3015
    %v3087 = vunpack.c.l.b16 %v3016
    %v3088 = vunpack.c.l.b16 %v3017
    %v3089 = vunpack.c.l.b16 %v3018
    %v3090 = vunpack.c.l.b16 %v3019
    %v3091 = vunpack.c.l.b16 %v3020
    %v3092 = vunpack.c.l.b16 %v3021
    %v3093 = vunpack.c.l.b16 %v3022
    %v3094 = vunpack.c.l.b16 %v3023
    %v3095 = vunpack.c.l.b16 %v3024
    %v3096 = vunpack.c.l.b16 %v3025
    %v3097 = vunpack.c.l.b16 %v3026
    %v3098 = vunpack.c.l.b16 %v3027
    %v3099 = vunpack.c.l.b16 %v3028
    %v3100 = vunpack.c.l.b16 %v3029
    %v3101 = vunpack.c.l.b16 %v3030
    %v3102 = vunpack.c.l.b16 %v3031
    %v3103 = vpack.c.b16 %v3072, %v3071
    %v3104 = vpack.c.b16 %v3074, %v3073
    %v3105 = vpack.c.b16 %v3076, %v3075
    %v3106 = vpack.c.b16 %v3078, %v3077
    %v3107 = vpack.c.b16 %v3080, %v3079
    %v3108 = vpack.c.b16 %v3082, %v3081
    %v3109 = vpack.c.b16 %v3084, %v3083
    %v3110 = vpack.c.b16 %v3086, %v3085
    %v3111 = vpack.c.b16 %v3088, %v3087
    %v3112 = vpack.c.b16 %v3090, %v3089
    %v3113 = vpack.c.b16 %v3092, %v3091
    %v3114 = vpack.c.b16 %v3094, %v3093
    %v3115 = vpack.c.b16 %v3096, %v3095
    %v3116 = vpack.c.b16 %v3098, %v3097
    %v3117 = vpack.c.b16 %v3100, %v3099
    %v3118 = vpack.c.b16 %v3102, %v3101
    %3135 = vmatprep.subr.bf16.mxu0 0
    %3136 = vmatpush1.bf16.msra.mxu0 %v3103
    %3137 = vmatprep.subr.bf16.mxu0 0
    %3138 = vmatpush1.bf16.msra.mxu0 %v3104
    %3139 = vmatprep.subr.bf16.mxu0 0
    %3140 = vmatpush1.bf16.msra.mxu0 %v3105
    %3141 = vmatprep.subr.bf16.mxu0 0
    %3142 = vmatpush1.bf16.msra.mxu0 %v3106
    %3143 = vmatprep.subr.bf16.mxu0 0
    %3144 = vmatpush1.bf16.msra.mxu0 %v3107
    %3145 = vmatprep.subr.bf16.mxu0 0
    %3146 = vmatpush1.bf16.msra.mxu0 %v3108
    %3147 = vmatprep.subr.bf16.mxu0 0
    %3148 = vmatpush1.bf16.msra.mxu0 %v3109
    %3149 = vmatprep.subr.bf16.mxu0 0
    %3150 = vmatpush1.bf16.msra.mxu0 %v3110
    %3151 = vmatprep.subr.bf16.mxu0 0
    %3152 = vmatpush1.bf16.msra.mxu0 %v3111
    %3153 = vmatprep.subr.bf16.mxu0 0
    %3154 = vmatpush1.bf16.msra.mxu0 %v3112
    %3155 = vmatprep.subr.bf16.mxu0 0
    %3156 = vmatpush1.bf16.msra.mxu0 %v3113
    %3157 = vmatprep.subr.bf16.mxu0 0
    %3158 = vmatpush1.bf16.msra.mxu0 %v3114
    %3159 = vmatprep.subr.bf16.mxu0 0
    %3160 = vmatpush1.bf16.msra.mxu0 %v3115
    %3161 = vmatprep.subr.bf16.mxu0 0
    %3162 = vmatpush1.bf16.msra.mxu0 %v3116
    %3163 = vmatprep.subr.bf16.mxu0 0
    %3164 = vmatpush1.bf16.msra.mxu0 %v3117
    %3165 = vmatprep.subr.bf16.mxu0 0
    %3166 = vmatpush1.bf16.msra.mxu0 %v3118
    %3167 = vmatprep.mubr.bf16.mxu0 %v2985
    %3168 = vmatmul.mubr.bf16.gmra.mrb[0].mxu0 %v2984
    %v3169 = vpop.f32.mrb[0].mxu0
    %v3170 = vadd.f32 %v3037, %v3169
    %v3171 = vpop.f32.mrb[0].mxu0
    %v3172 = vpop.f32.mrb[0].mxu0
    %v3173 = vadd.f32 %v3037, %v3172
    %v3174 = vpop.f32.mrb[0].mxu0
    %3175 = vmatprep.mubr.bf16.mxu0 %v2987
    %3176 = vmatmul.mubr.bf16.gmra.mrb[0].mxu0 %v2986
    %v3177 = vpop.f32.mrb[0].mxu0
    %v3178 = vadd.f32 %v3037, %v3177
    %v3179 = vpop.f32.mrb[0].mxu0
    %v3180 = vpop.f32.mrb[0].mxu0
    %v3181 = vadd.f32 %v3037, %v3180
    %v3182 = vpop.f32.mrb[0].mxu0
    %3183 = vmatprep.mubr.bf16.mxu0 %v2989
    %3184 = vmatmul.mubr.bf16.gmra.mrb[0].mxu0 %v2988
    %v3185 = vpop.f32.mrb[0].mxu0
    %v3186 = vadd.f32 %v3037, %v3185
    %v3187 = vpop.f32.mrb[0].mxu0
    %v3188 = vpop.f32.mrb[0].mxu0
    %v3189 = vadd.f32 %v3037, %v3188
    %v3190 = vpop.f32.mrb[0].mxu0
    %3191 = vmatprep.mubr.bf16.mxu0 %v2991
    %3192 = vmatmul.mubr.bf16.gmra.mrb[0].mxu0 %v2990
    %v3193 = vpop.f32.mrb[0].mxu0
    %v3194 = vadd.f32 %v3037, %v3193
    %v3195 = vpop.f32.mrb[0].mxu0
    %v3196 = vpop.f32.mrb[0].mxu0
    %v3197 = vadd.f32 %v3037, %v3196
    %v3198 = vpop.f32.mrb[0].mxu0
    %3199 = vmatprep.mubr.bf16.mxu0 %v2993
    %3200 = vmatmul.mubr.bf16.gmra.mrb[0].mxu0 %v2992
    %v3201 = vpop.f32.mrb[0].mxu0
    %v3202 = vadd.f32 %v3037, %v3201
    %v3203 = vpop.f32.mrb[0].mxu0
    %v3204 = vpop.f32.mrb[0].mxu0
    %v3205 = vadd.f32 %v3037, %v3204
    %v3206 = vpop.f32.mrb[0].mxu0
    %3207 = vmatprep.mubr.bf16.mxu0 %v2995
    %3208 = vmatmul.mubr.bf16.gmra.mrb[0].mxu0 %v2994
    %v3209 = vpop.f32.mrb[0].mxu0
    %v3210 = vadd.f32 %v3037, %v3209
    %v3211 = vpop.f32.mrb[0].mxu0
    %v3212 = vpop.f32.mrb[0].mxu0
    %v3213 = vadd.f32 %v3037, %v3212
    %v3214 = vpop.f32.mrb[0].mxu0
    %3215 = vmatprep.mubr.bf16.mxu0 %v2997
    %3216 = vmatmul.mubr.bf16.gmra.mrb[0].mxu0 %v2996
    %v3217 = vpop.f32.mrb[0].mxu0
    %v3218 = vadd.f32 %v3037, %v3217
    %v3219 = vpop.f32.mrb[0].mxu0
    %v3220 = vpop.f32.mrb[0].mxu0
    %v3221 = vadd.f32 %v3037, %v3220
    %v3222 = vpop.f32.mrb[0].mxu0
    %3223 = vmatprep.mubr.bf16.mxu0 %v2999
    %3224 = vmatmul.mubr.bf16.gmra.mrb[0].mxu0 %v2998
    %v3225 = vpop.f32.mrb[0].mxu0
    %v3226 = vadd.f32 %v3037, %v3225
    %v3227 = vpop.f32.mrb[0].mxu0
    %v3228 = vpop.f32.mrb[0].mxu0
    %v3229 = vadd.f32 %v3037, %v3228
    %v3230 = vpop.f32.mrb[0].mxu0
    %3231 = vdwg.mxu0
    %v3232 = vmax.f32 %v3170, 0.0
    %v3233 = vmax.f32 %v3173, 0.0
    %v3234 = vmax.f32 %v3178, 0.0
    %v3235 = vmax.f32 %v3181, 0.0
    %v3236 = vmax.f32 %v3186, 0.0
    %v3237 = vmax.f32 %v3189, 0.0
    %v3238 = vmax.f32 %v3194, 0.0
    %v3239 = vmax.f32 %v3197, 0.0
    %v3240 = vmax.f32 %v3202, 0.0
    %v3241 = vmax.f32 %v3205, 0.0
    %v3242 = vmax.f32 %v3210, 0.0
    %v3243 = vmax.f32 %v3213, 0.0
    %v3244 = vmax.f32 %v3218, 0.0
    %v3245 = vmax.f32 %v3221, 0.0
    %v3246 = vmax.f32 %v3226, 0.0
    %v3247 = vmax.f32 %v3229, 0.0
    %v3248 = vpack.c.bf16 %v3233, %v3232
    %v3249 = vpack.c.bf16 %v3235, %v3234
    %v3250 = vpack.c.bf16 %v3237, %v3236
    %v3251 = vpack.c.bf16 %v3239, %v3238
    %v3252 = vpack.c.bf16 %v3241, %v3240
    %v3253 = vpack.c.bf16 %v3243, %v3242
    %v3254 = vpack.c.bf16 %v3245, %v3244
    %v3255 = vpack.c.bf16 %v3247, %v3246
    %v3256 = vld [vmem:[%s7] sm:$0xf]
    %v3257 = vld [vmem:[%s7 + $0x4] sm:$0xf]
    %v3258 = vld [vmem:[%s7 + $0x8] sm:$0xf]
    %v3259 = vld [vmem:[%s7 + $0xc] sm:$0xf]
    %v3260 = vld [vmem:[%s7 + $0x10] sm:$0xf]
    %v3261 = vld [vmem:[%s7 + $0x14] sm:$0xf]
    %v3262 = vld [vmem:[%s7 + $0x18] sm:$0xf]
    %v3263 = vld [vmem:[%s7 + $0x1c] sm:$0xf]
    %v3264 = vld [vmem:[%s7 + $0x20] sm:$0xf]
    %v3265 = vld [vmem:[%s7 + $0x24] sm:$0xf]
    %v3266 = vld [vmem:[%s7 + $0x28] sm:$0xf]
    %v3267 = vld [vmem:[%s7 + $0x2c] sm:$0xf]
    %v3268 = vld [vmem:[%s7 + $0x30] sm:$0xf]
    %v3269 = vld [vmem:[%s7 + $0x34] sm:$0xf]
    %v3270 = vld [vmem:[%s7 + $0x38] sm:$0xf]
    %v3271 = vld [vmem:[%s7 + $0x3c] sm:$0xf]
    %v3272 = vld [vmem:[%s8] sm:$0x1]
    %v3274 = vlaneseq
    %v3275 = vshrl.u32 %v3274, 7
    %v3276 = vsub.s32 0, %v3275
    %v3277 = vrot.slane %v3272, %v3276
    %v3295 = vunpack.c.l.b16 %v3256
    %v3296 = vunpack.c.l.b16 %v3257
    %v3297 = vunpack.c.l.b16 %v3258
    %v3298 = vunpack.c.l.b16 %v3259
    %v3299 = vunpack.c.l.b16 %v3260
    %v3300 = vunpack.c.l.b16 %v3261
    %v3301 = vunpack.c.l.b16 %v3262
    %v3302 = vunpack.c.l.b16 %v3263
    %v3303 = vunpack.c.l.b16 %v3264
    %v3304 = vunpack.c.l.b16 %v3265
    %v3305 = vunpack.c.l.b16 %v3266
    %v3306 = vunpack.c.l.b16 %v3267
    %v3307 = vunpack.c.l.b16 %v3268
    %v3308 = vunpack.c.l.b16 %v3269
    %v3309 = vunpack.c.l.b16 %v3270
    %v3310 = vunpack.c.l.b16 %v3271
    %v3311 = vpack.c.b16 %v3296, %v3295
    %v3312 = vpack.c.b16 %v3298, %v3297
    %v3313 = vpack.c.b16 %v3300, %v3299
    %v3314 = vpack.c.b16 %v3302, %v3301
    %v3315 = vpack.c.b16 %v3304, %v3303
    %v3316 = vpack.c.b16 %v3306, %v3305
    %v3317 = vpack.c.b16 %v3308, %v3307
    %v3318 = vpack.c.b16 %v3310, %v3309
    %3327 = vmatprep.subr.bf16.mxu0 0
    %3328 = vmatpush1.bf16.msra.mxu0 %v3311
    %3329 = vmatprep.subr.bf16.mxu0 0
    %3330 = vmatpush1.bf16.msra.mxu0 %v3312
    %3331 = vmatprep.subr.bf16.mxu0 0
    %3332 = vmatpush1.bf16.msra.mxu0 %v3313
    %3333 = vmatprep.subr.bf16.mxu0 0
    %3334 = vmatpush1.bf16.msra.mxu0 %v3314
    %3335 = vmatprep.subr.bf16.mxu0 0
    %3336 = vmatpush1.bf16.msra.mxu0 %v3315
    %3337 = vmatprep.subr.bf16.mxu0 0
    %3338 = vmatpush1.bf16.msra.mxu0 %v3316
    %3339 = vmatprep.subr.bf16.mxu0 0
    %3340 = vmatpush1.bf16.msra.mxu0 %v3317
    %3341 = vmatprep.subr.bf16.mxu0 0
    %3342 = vmatpush1.bf16.msra.mxu0 %v3318
    %3343 = vmatprep.subr.bf16.mxu0 0
    %3344 = vmatpush1.bf16.msra.mxu0 0
    %3345 = vmatprep.subr.bf16.mxu0 0
    %3346 = vmatpush1.bf16.msra.mxu0 0
    %3347 = vmatprep.subr.bf16.mxu0 0
    %3348 = vmatpush1.bf16.msra.mxu0 0
    %3349 = vmatprep.subr.bf16.mxu0 0
    %3350 = vmatpush1.bf16.msra.mxu0 0
    %3351 = vmatprep.subr.bf16.mxu0 0
    %3352 = vmatpush1.bf16.msra.mxu0 0
    %3353 = vmatprep.subr.bf16.mxu0 0
    %3354 = vmatpush1.bf16.msra.mxu0 0
    %3355 = vmatprep.subr.bf16.mxu0 0
    %3356 = vmatpush1.bf16.msra.mxu0 0
    %3357 = vmatprep.subr.bf16.mxu0 0
    %3358 = vmatpush1.bf16.msra.mxu0 0
    %3359 = vmatprep.mubr.bf16.mxu0 0
    %3360 = vmatmul.mubr.bf16.gmra.mrb[0].mxu0 %v3248
    %v3361 = vpop.f32.mrb[0].mxu0
    %v3362 = vadd.f32 %v3277, %v3361
    %v3363 = vpop.f32.mrb[0].mxu0
    %v3364 = vpop.f32.mrb[0].mxu0
    %v3365 = vadd.f32 %v3277, %v3364
    %v3366 = vpop.f32.mrb[0].mxu0
    %3367 = vmatprep.mubr.bf16.mxu0 0
    %3368 = vmatmul.mubr.bf16.gmra.mrb[0].mxu0 %v3249
    %v3369 = vpop.f32.mrb[0].mxu0
    %v3370 = vadd.f32 %v3277, %v3369
    %v3371 = vpop.f32.mrb[0].mxu0
    %v3372 = vpop.f32.mrb[0].mxu0
    %v3373 = vadd.f32 %v3277, %v3372
    %v3374 = vpop.f32.mrb[0].mxu0
    %3375 = vmatprep.mubr.bf16.mxu0 0
    %3376 = vmatmul.mubr.bf16.gmra.mrb[0].mxu0 %v3250
    %v3377 = vpop.f32.mrb[0].mxu0
    %v3378 = vadd.f32 %v3277, %v3377
    %v3379 = vpop.f32.mrb[0].mxu0
    %v3380 = vpop.f32.mrb[0].mxu0
    %v3381 = vadd.f32 %v3277, %v3380
    %v3382 = vpop.f32.mrb[0].mxu0
    %3383 = vmatprep.mubr.bf16.mxu0 0
    %3384 = vmatmul.mubr.bf16.gmra.mrb[0].mxu0 %v3251
    %v3385 = vpop.f32.mrb[0].mxu0
    %v3386 = vadd.f32 %v3277, %v3385
    %v3387 = vpop.f32.mrb[0].mxu0
    %v3388 = vpop.f32.mrb[0].mxu0
    %v3389 = vadd.f32 %v3277, %v3388
    %v3390 = vpop.f32.mrb[0].mxu0
    %3391 = vmatprep.mubr.bf16.mxu0 0
    %3392 = vmatmul.mubr.bf16.gmra.mrb[0].mxu0 %v3252
    %v3393 = vpop.f32.mrb[0].mxu0
    %v3394 = vadd.f32 %v3277, %v3393
    %v3395 = vpop.f32.mrb[0].mxu0
    %v3396 = vpop.f32.mrb[0].mxu0
    %v3397 = vadd.f32 %v3277, %v3396
    %v3398 = vpop.f32.mrb[0].mxu0
    %3399 = vmatprep.mubr.bf16.mxu0 0
    %3400 = vmatmul.mubr.bf16.gmra.mrb[0].mxu0 %v3253
    %v3401 = vpop.f32.mrb[0].mxu0
    %v3402 = vadd.f32 %v3277, %v3401
    %v3403 = vpop.f32.mrb[0].mxu0
    %v3404 = vpop.f32.mrb[0].mxu0
    %v3405 = vadd.f32 %v3277, %v3404
    %v3406 = vpop.f32.mrb[0].mxu0
    %3407 = vmatprep.mubr.bf16.mxu0 0
    %3408 = vmatmul.mubr.bf16.gmra.mrb[0].mxu0 %v3254
    %v3409 = vpop.f32.mrb[0].mxu0
    %v3410 = vadd.f32 %v3277, %v3409
    %v3411 = vpop.f32.mrb[0].mxu0
    %v3412 = vpop.f32.mrb[0].mxu0
    %v3413 = vadd.f32 %v3277, %v3412
    %v3414 = vpop.f32.mrb[0].mxu0
    %3415 = vmatprep.mubr.bf16.mxu0 0
    %3416 = vmatmul.mubr.bf16.gmra.mrb[0].mxu0 %v3255
    %v3417 = vpop.f32.mrb[0].mxu0
    %v3418 = vadd.f32 %v3277, %v3417
    %v3419 = vpop.f32.mrb[0].mxu0
    %v3420 = vpop.f32.mrb[0].mxu0
    %v3421 = vadd.f32 %v3277, %v3420
    %v3422 = vpop.f32.mrb[0].mxu0
    %3423 = vdwg.mxu0
    %v3424 = vmax.f32 %v3362, 0.0
    %v3425 = vmax.f32 %v3365, 0.0
    %v3426 = vmax.f32 %v3370, 0.0
    %v3427 = vmax.f32 %v3373, 0.0
    %v3428 = vmax.f32 %v3378, 0.0
    %v3429 = vmax.f32 %v3381, 0.0
    %v3430 = vmax.f32 %v3386, 0.0
    %v3431 = vmax.f32 %v3389, 0.0
    %v3432 = vmax.f32 %v3394, 0.0
    %v3433 = vmax.f32 %v3397, 0.0
    %v3434 = vmax.f32 %v3402, 0.0
    %v3435 = vmax.f32 %v3405, 0.0
    %v3436 = vmax.f32 %v3410, 0.0
    %v3437 = vmax.f32 %v3413, 0.0
    %v3438 = vmax.f32 %v3418, 0.0
    %v3439 = vmax.f32 %v3421, 0.0
    %v3440 = vpack.c.bf16 %v3425, %v3424
    %v3441 = vpack.c.bf16 %v3427, %v3426
    %v3442 = vpack.c.bf16 %v3429, %v3428
    %v3443 = vpack.c.bf16 %v3431, %v3430
    %v3444 = vpack.c.bf16 %v3433, %v3432
    %v3445 = vpack.c.bf16 %v3435, %v3434
    %v3446 = vpack.c.bf16 %v3437, %v3436
    %v3447 = vpack.c.bf16 %v3439, %v3438
    %v3448 = vld [vmem:[%s9] sm:$0xf]
    %v3449 = vld [vmem:[%s9 + $0x4] sm:$0xf]
    %v3450 = vld [vmem:[%s9 + $0x8] sm:$0xf]
    %v3451 = vld [vmem:[%s9 + $0xc] sm:$0xf]
    %v3452 = vld [vmem:[%s9 + $0x10] sm:$0xf]
    %v3453 = vld [vmem:[%s9 + $0x14] sm:$0xf]
    %v3454 = vld [vmem:[%s9 + $0x18] sm:$0xf]
    %v3455 = vld [vmem:[%s9 + $0x1c] sm:$0xf]
    %v3456 = vld [vmem:[%s10] sm:$0x1]
    %v3458 = vlaneseq
    %v3459 = vshrl.u32 %v3458, 7
    %v3460 = vsub.s32 0, %v3459
    %v3461 = vrot.slane %v3456, %v3460
    %v3471 = vunpack.c.l.b16 %v3448
    %v3472 = vunpack.c.l.b16 %v3449
    %v3473 = vunpack.c.l.b16 %v3450
    %v3474 = vunpack.c.l.b16 %v3451
    %v3475 = vunpack.c.l.b16 %v3452
    %v3476 = vunpack.c.l.b16 %v3453
    %v3477 = vunpack.c.l.b16 %v3454
    %v3478 = vunpack.c.l.b16 %v3455
    %v3479 = vpack.c.b16 %v3472, %v3471
    %v3480 = vpack.c.b16 %v3474, %v3473
    %v3481 = vpack.c.b16 %v3476, %v3475
    %v3482 = vpack.c.b16 %v3478, %v3477
    %vm3487 = vcmask 523264
    %v3489 = vsel %vm3487, %v3440, 0
    %v3492 = vsel %vm3487, %v3441, 0
    %v3495 = vsel %vm3487, %v3442, 0
    %v3498 = vsel %vm3487, %v3443, 0
    %v3501 = vsel %vm3487, %v3444, 0
    %v3504 = vsel %vm3487, %v3445, 0
    %v3507 = vsel %vm3487, %v3446, 0
    %v3510 = vsel %vm3487, %v3447, 0
    %3512 = vmatprep.subr.bf16.mxu0 0
    %3513 = vmatpush1.bf16.msra.mxu0 %v3479
    %3514 = vmatprep.subr.bf16.mxu0 0
    %3515 = vmatpush1.bf16.msra.mxu0 %v3480
    %3516 = vmatprep.subr.bf16.mxu0 0
    %3517 = vmatpush1.bf16.msra.mxu0 %v3481
    %3518 = vmatprep.subr.bf16.mxu0 0
    %3519 = vmatpush1.bf16.msra.mxu0 %v3482
    %3520 = vmatprep.subr.bf16.mxu0 0
    %3521 = vmatpush1.bf16.msra.mxu0 0
    %3522 = vmatprep.subr.bf16.mxu0 0
    %3523 = vmatpush1.bf16.msra.mxu0 0
    %3524 = vmatprep.subr.bf16.mxu0 0
    %3525 = vmatpush1.bf16.msra.mxu0 0
    %3526 = vmatprep.subr.bf16.mxu0 0
    %3527 = vmatpush1.bf16.msra.mxu0 0
    %3528 = vmatprep.subr.bf16.mxu0 0
    %3529 = vmatpush1.bf16.msra.mxu0 0
    %3530 = vmatprep.subr.bf16.mxu0 0
    %3531 = vmatpush1.bf16.msra.mxu0 0
    %3532 = vmatprep.subr.bf16.mxu0 0
    %3533 = vmatpush1.bf16.msra.mxu0 0
    %3534 = vmatprep.subr.bf16.mxu0 0
    %3535 = vmatpush1.bf16.msra.mxu0 0
    %3536 = vmatprep.subr.bf16.mxu0 0
    %3537 = vmatpush1.bf16.msra.mxu0 0
    %3538 = vmatprep.subr.bf16.mxu0 0
    %3539 = vmatpush1.bf16.msra.mxu0 0
    %3540 = vmatprep.subr.bf16.mxu0 0
    %3541 = vmatpush1.bf16.msra.mxu0 0
    %3542 = vmatprep.subr.bf16.mxu0 0
    %3543 = vmatpush1.bf16.msra.mxu0 0
    %3544 = vmatprep.mubr.bf16.mxu0 0
    %3545 = vmatmul.mubr.bf16.gmra.mrb[0].mxu0 %v3489
    %v3546 = vpop.f32.mrb[0].mxu0
    %v3547 = vadd.f32 %v3461, %v3546
    %v3548 = vpop.f32.mrb[0].mxu0
    %v3549 = vpop.f32.mrb[0].mxu0
    %v3550 = vadd.f32 %v3461, %v3549
    %v3551 = vpop.f32.mrb[0].mxu0
    %3552 = vmatprep.mubr.bf16.mxu0 0
    %3553 = vmatmul.mubr.bf16.gmra.mrb[0].mxu0 %v3492
    %v3554 = vpop.f32.mrb[0].mxu0
    %v3555 = vadd.f32 %v3461, %v3554
    %v3556 = vpop.f32.mrb[0].mxu0
    %v3557 = vpop.f32.mrb[0].mxu0
    %v3558 = vadd.f32 %v3461, %v3557
    %v3559 = vpop.f32.mrb[0].mxu0
    %3560 = vmatprep.mubr.bf16.mxu0 0
    %3561 = vmatmul.mubr.bf16.gmra.mrb[0].mxu0 %v3495
    %v3562 = vpop.f32.mrb[0].mxu0
    %v3563 = vadd.f32 %v3461, %v3562
    %v3564 = vpop.f32.mrb[0].mxu0
    %v3565 = vpop.f32.mrb[0].mxu0
    %v3566 = vadd.f32 %v3461, %v3565
    %v3567 = vpop.f32.mrb[0].mxu0
    %3568 = vmatprep.mubr.bf16.mxu0 0
    %3569 = vmatmul.mubr.bf16.gmra.mrb[0].mxu0 %v3498
    %v3570 = vpop.f32.mrb[0].mxu0
    %v3571 = vadd.f32 %v3461, %v3570
    %v3572 = vpop.f32.mrb[0].mxu0
    %v3573 = vpop.f32.mrb[0].mxu0
    %v3574 = vadd.f32 %v3461, %v3573
    %v3575 = vpop.f32.mrb[0].mxu0
    %3576 = vmatprep.mubr.bf16.mxu0 0
    %3577 = vmatmul.mubr.bf16.gmra.mrb[0].mxu0 %v3501
    %v3578 = vpop.f32.mrb[0].mxu0
    %v3579 = vadd.f32 %v3461, %v3578
    %v3580 = vpop.f32.mrb[0].mxu0
    %v3581 = vpop.f32.mrb[0].mxu0
    %v3582 = vadd.f32 %v3461, %v3581
    %v3583 = vpop.f32.mrb[0].mxu0
    %3584 = vmatprep.mubr.bf16.mxu0 0
    %3585 = vmatmul.mubr.bf16.gmra.mrb[0].mxu0 %v3504
    %v3586 = vpop.f32.mrb[0].mxu0
    %v3587 = vadd.f32 %v3461, %v3586
    %v3588 = vpop.f32.mrb[0].mxu0
    %v3589 = vpop.f32.mrb[0].mxu0
    %v3590 = vadd.f32 %v3461, %v3589
    %v3591 = vpop.f32.mrb[0].mxu0
    %3592 = vmatprep.mubr.bf16.mxu0 0
    %3593 = vmatmul.mubr.bf16.gmra.mrb[0].mxu0 %v3507
    %v3594 = vpop.f32.mrb[0].mxu0
    %v3595 = vadd.f32 %v3461, %v3594
    %v3596 = vpop.f32.mrb[0].mxu0
    %v3597 = vpop.f32.mrb[0].mxu0
    %v3598 = vadd.f32 %v3461, %v3597
    %v3599 = vpop.f32.mrb[0].mxu0
    %3600 = vmatprep.mubr.bf16.mxu0 0
    %3601 = vmatmul.mubr.bf16.gmra.mrb[0].mxu0 %v3510
    %v3602 = vpop.f32.mrb[0].mxu0
    %v3603 = vadd.f32 %v3461, %v3602
    %v3604 = vpop.f32.mrb[0].mxu0
    %v3605 = vpop.f32.mrb[0].mxu0
    %v3606 = vadd.f32 %v3461, %v3605
    %v3607 = vpop.f32.mrb[0].mxu0
    %3608 = vdwg.mxu0
    %v3609 = vsub.f32 0.0, %v3547
    %v3610 = vsub.f32 0.0, %v3550
    %v3611 = vsub.f32 0.0, %v3555
    %v3612 = vsub.f32 0.0, %v3558
    %v3613 = vsub.f32 0.0, %v3563
    %v3614 = vsub.f32 0.0, %v3566
    %v3615 = vsub.f32 0.0, %v3571
    %v3616 = vsub.f32 0.0, %v3574
    %v3617 = vsub.f32 0.0, %v3579
    %v3618 = vsub.f32 0.0, %v3582
    %v3619 = vsub.f32 0.0, %v3587
    %v3620 = vsub.f32 0.0, %v3590
    %v3621 = vsub.f32 0.0, %v3595
    %v3622 = vsub.f32 0.0, %v3598
    %v3623 = vsub.f32 0.0, %v3603
    %v3624 = vsub.f32 0.0, %v3606
    %v3625 = vmul.f32 %v3609, 1.442695
    %v3626 = vpow.pop %v3625
    %v3627 = vmul.f32 %v3610, 1.442695
    %v3628 = vpow.pop %v3627
    %v3629 = vmul.f32 %v3611, 1.442695
    %v3630 = vpow.pop %v3629
    %v3631 = vmul.f32 %v3612, 1.442695
    %v3632 = vpow.pop %v3631
    %v3633 = vmul.f32 %v3613, 1.442695
    %v3634 = vpow.pop %v3633
    %v3635 = vmul.f32 %v3614, 1.442695
    %v3636 = vpow.pop %v3635
    %v3637 = vmul.f32 %v3615, 1.442695
    %v3638 = vpow.pop %v3637
    %v3639 = vmul.f32 %v3616, 1.442695
    %v3640 = vpow.pop %v3639
    %v3641 = vmul.f32 %v3617, 1.442695
    %v3642 = vpow.pop %v3641
    %v3643 = vmul.f32 %v3618, 1.442695
    %v3644 = vpow.pop %v3643
    %v3645 = vmul.f32 %v3619, 1.442695
    %v3646 = vpow.pop %v3645
    %v3647 = vmul.f32 %v3620, 1.442695
    %v3648 = vpow.pop %v3647
    %v3649 = vmul.f32 %v3621, 1.442695
    %v3650 = vpow.pop %v3649
    %v3651 = vmul.f32 %v3622, 1.442695
    %v3652 = vpow.pop %v3651
    %v3653 = vmul.f32 %v3623, 1.442695
    %v3654 = vpow.pop %v3653
    %v3655 = vmul.f32 %v3624, 1.442695
    %v3656 = vpow.pop %v3655
    %v3657 = vadd.f32 %v3626, 1.0
    %v3658 = vadd.f32 %v3628, 1.0
    %v3659 = vadd.f32 %v3630, 1.0
    %v3660 = vadd.f32 %v3632, 1.0
    %v3661 = vadd.f32 %v3634, 1.0
    %v3662 = vadd.f32 %v3636, 1.0
    %v3663 = vadd.f32 %v3638, 1.0
    %v3664 = vadd.f32 %v3640, 1.0
    %v3665 = vadd.f32 %v3642, 1.0
    %v3666 = vadd.f32 %v3644, 1.0
    %v3667 = vadd.f32 %v3646, 1.0
    %v3668 = vadd.f32 %v3648, 1.0
    %v3669 = vadd.f32 %v3650, 1.0
    %v3670 = vadd.f32 %v3652, 1.0
    %v3671 = vadd.f32 %v3654, 1.0
    %v3672 = vadd.f32 %v3656, 1.0
    %v3673 = vrcp.pop %v3657
    %v3674 = vrcp.pop %v3658
    %v3675 = vrcp.pop %v3659
    %v3676 = vrcp.pop %v3660
    %v3677 = vrcp.pop %v3661
    %v3678 = vrcp.pop %v3662
    %v3679 = vrcp.pop %v3663
    %v3680 = vrcp.pop %v3664
    %v3681 = vrcp.pop %v3665
    %v3682 = vrcp.pop %v3666
    %v3683 = vrcp.pop %v3667
    %v3684 = vrcp.pop %v3668
    %v3685 = vrcp.pop %v3669
    %v3686 = vrcp.pop %v3670
    %v3687 = vrcp.pop %v3671
    %v3688 = vrcp.pop %v3672
    %vm3689 = vcmask 7168
    %3690 = vst.msk [vmem:[%s11] sm:$0xff] %vm3689, %v3673
    %3691 = vst.msk [vmem:[%s11 + $0x8] sm:$0xff] %vm3689, %v3674
    %3692 = vst.msk [vmem:[%s11 + $0x10] sm:$0xff] %vm3689, %v3675
    %3693 = vst.msk [vmem:[%s11 + $0x18] sm:$0xff] %vm3689, %v3676
    %3694 = vst.msk [vmem:[%s11 + $0x20] sm:$0xff] %vm3689, %v3677
    %3695 = vst.msk [vmem:[%s11 + $0x28] sm:$0xff] %vm3689, %v3678
    %3696 = vst.msk [vmem:[%s11 + $0x30] sm:$0xff] %vm3689, %v3679
    %3697 = vst.msk [vmem:[%s11 + $0x38] sm:$0xff] %vm3689, %v3680
    %3698 = vst.msk [vmem:[%s11 + $0x40] sm:$0xff] %vm3689, %v3681
    %3699 = vst.msk [vmem:[%s11 + $0x48] sm:$0xff] %vm3689, %v3682
    %3700 = vst.msk [vmem:[%s11 + $0x50] sm:$0xff] %vm3689, %v3683
    %3701 = vst.msk [vmem:[%s11 + $0x58] sm:$0xff] %vm3689, %v3684
    %3702 = vst.msk [vmem:[%s11 + $0x60] sm:$0xff] %vm3689, %v3685
    %3703 = vst.msk [vmem:[%s11 + $0x68] sm:$0xff] %vm3689, %v3686
    %3704 = vst.msk [vmem:[%s11 + $0x70] sm:$0xff] %vm3689, %v3687
    %3705 = vst.msk [vmem:[%s11 + $0x78] sm:$0xff] %vm3689, %v3688
    // Predicated region
    $region62: #{tpu_custom_call.1} parent=1 // pred_check
      _
    $region63: #{tpu_custom_call.1} parent=1 // pred_check_branch
      %3707 = sbr.rel (0) target = $region65
    $region64: #{tpu_custom_call.1} parent=1 // pred_region
      _
    $region65: #{tpu_custom_call.1} parent=1 // pred_fallthru
      _
    // Predicated region
    $region66: #{tpu_custom_call.1} parent=1 // pred_check
      _
    $region67: #{tpu_custom_call.1} parent=1 // pred_check_branch
      %3709 = sbr.rel (0) target = $region69
    $region68: #{tpu_custom_call.1} parent=1 // pred_region
      _
    $region69: #{tpu_custom_call.1} parent=1 // pred_fallthru
      _
    %3710 = vsyncpa [#allocation3], 1
    %3711 = vsyncpa [#allocation5], 1
    %3712 = vsyncpa [#allocation8], 1

</llo_original>
